<compile_context>
chip_gen: v5e
topology: v5e:2x2
jax: 0.10.0
libtpu: 0.0.40
codegen_flags: <defaults>
</compile_context>

<pallas_src>
import functools

import jax
import jax.numpy as jnp
from jax import lax
from jax.experimental import pallas as pl
from jax.experimental.pallas import tpu as pltpu

LN_EPS = 1e-5


def _round_up(x, m):
    return ((x + m - 1) // m) * m


def _layernorm(h, gamma, beta):
    # Two-pass statistics (mean, then centered variance) in f32.
    mu = jnp.mean(h, axis=-1, keepdims=True)
    d = h - mu
    var = jnp.mean(d * d, axis=-1, keepdims=True)
    return d * lax.rsqrt(var + LN_EPS) * gamma + beta


def critic_kernel(xa_ref, w1_ref, ln1_ref, w2x_ref, w2a_ref, ln2_ref, o_ref, *, S, A):
    xa = xa_ref[...]                       # (TB, S+A) f32: [x | a]
    x = xa[:, :S]                          # (TB, S)

    # --- fc1 + LayerNorm + ReLU ---  (bf16 x bf16 MXU, f32 accumulate)
    h1 = (jnp.dot(x.astype(jnp.bfloat16), w1_ref[...],
                  preferred_element_type=jnp.float32)
          + ln1_ref[0:1, :])                                  # + b1
    h1 = _layernorm(h1, ln1_ref[1:2, :], ln1_ref[2:3, :])     # gamma1, beta1
    h1 = jnp.maximum(h1, 0.0)

    # --- fc2 on cat([h1, a]) + LayerNorm + ReLU ---
    # h1 part on the MXU (bf16); the K=A part as A broadcast FMAs on the VPU.
    h2 = (jnp.dot(h1.astype(jnp.bfloat16), w2x_ref[...],
                  preferred_element_type=jnp.float32)
          + ln2_ref[0:1, :])                                  # + b2
    for k in range(A):                                        # A is tiny & static
        h2 = h2 + xa[:, S + k:S + k + 1] * w2a_ref[k:k + 1, :]
    h2 = _layernorm(h2, ln2_ref[1:2, :], ln2_ref[2:3, :])     # gamma2, beta2
    h2 = jnp.maximum(h2, 0.0)

    # --- fc3 (300 -> 1): VPU multiply + lane reduction ---
    w3_row = ln2_ref[3:4, :]                                  # (1, 300)
    b3 = ln2_ref[4:5, 0:1]                                    # (1, 1)
    q = jnp.sum(h2 * w3_row, axis=-1, keepdims=True) + b3     # (TB, 1)

    # Compact store: 8-lane output block (32 B/row write-back).
    o_ref[...] = jnp.broadcast_to(q, o_ref.shape)             # (TB, 8)


def critic_forward(x, a, params, *, block_batch=512):
    """q = Critic(x, a).  x: (B, state_size) f32, a: (B, action_size) f32."""
    B, S = x.shape
    A = a.shape[1]
    H1 = params["w1"].shape[1]
    H2 = params["w2x"].shape[1]

    # Batch tile: multiple of 128 (fills the MXU M dimension on v5e/v6e/v7x).
    tb = _round_up(min(block_batch, max(B, 1)), 128)
    # v7x megacore: guarantee >= 2 grid blocks when the batch is big enough so
    # both TensorCores get work under dimension_semantics=("parallel",).
    if _round_up(B, tb) // tb < 2 and B > 128:
        tb = max(128, _round_up((B + 1) // 2, 128))
    Bp = _round_up(B, tb)
    nb = Bp // tb

    # Merge x and a into a single pipelined activation stream.
    xa = jnp.concatenate([x, a], axis=1)
    if Bp != B:
        xa = jnp.pad(xa, ((0, Bp - B), (0, 0)))

    flops = 2 * Bp * (S * H1 + (H1 + A) * H2 + H2) + 10 * Bp * (H1 + H2)
    bytes_accessed = (
        xa.size * 4                                           # activations in
        + params["w1"].size * 2 + params["w2x"].size * 2      # bf16 weights
        + params["w2a"].size * 4
        + params["ln1"].size * 4 + params["ln2"].size * 4
        + Bp * 8 * 4                                          # compact output
    )

    out = pl.pallas_call(
        functools.partial(critic_kernel, S=S, A=A),
        out_shape=jax.ShapeDtypeStruct((Bp, 8), jnp.float32),
        grid_spec=pltpu.PrefetchScalarGridSpec(
            num_scalar_prefetch=0,
            grid=(nb,),
            in_specs=[
                pl.BlockSpec((tb, S + A), lambda i: (i, 0)),   # [x|a] (pipelined)
                pl.BlockSpec((S, H1), lambda i: (0, 0)),       # w1  bf16 (resident)
                pl.BlockSpec((3, H1), lambda i: (0, 0)),       # b1/g1/be1 (resident)
                pl.BlockSpec((H1, H2), lambda i: (0, 0)),      # w2x bf16 (resident)
                pl.BlockSpec((A, H2), lambda i: (0, 0)),       # w2a f32 (resident, VPU)
                pl.BlockSpec((5, H2), lambda i: (0, 0)),       # b2/g2/be2/w3/b3 (resident)
            ],
            out_specs=pl.BlockSpec((tb, 8), lambda i: (i, 0)),
        ),
        compiler_params=pltpu.CompilerParams(
            dimension_semantics=("parallel",),   # v7x: split batch across both TCs
        ),
        cost_estimate=pl.CostEstimate(
            flops=flops, transcendentals=2 * Bp, bytes_accessed=bytes_accessed),
    )(xa, params["w1"], params["ln1"], params["w2x"], params["w2a"], params["ln2"])
    return out[:B, 0:1]


def kaiming_uniform(key, fan_in, fan_out):
    # PyTorch kaiming_uniform_(nonlinearity='relu'): bound = sqrt(2) * sqrt(3 / fan_in)
    bound = jnp.sqrt(2.0) * jnp.sqrt(3.0 / fan_in)
    # stored as (in, out) == W.T of the PyTorch (out, in) weight
    return jax.random.uniform(key, (fan_in, fan_out), jnp.float32, -bound, bound)


def init_params(key, state_size, action_size):
    H1, H2 = 400, 300
    k1, k2, k3 = jax.random.split(key, 3)
    w1 = kaiming_uniform(k1, state_size, H1)
    w2 = kaiming_uniform(k2, H1 + action_size, H2)   # rows: [h1 part ; a part]
    w3 = kaiming_uniform(k3, H2, 1)
    b3 = 0.0                                          # PyTorch init: zeros_

    # Packed LN params: fewer, larger DMAs.
    ln1 = jnp.stack([jnp.zeros(H1), jnp.ones(H1), jnp.zeros(H1)], axis=0
                    ).astype(jnp.float32)             # rows: b1, gamma1, beta1
    ln2 = jnp.concatenate([
        jnp.zeros((1, H2)),                           # b2
        jnp.ones((1, H2)),                            # gamma2
        jnp.zeros((1, H2)),                           # beta2
        w3.T,                                         # w3 as a row
        jnp.full((1, H2), b3),                        # b3 broadcast
    ], axis=0).astype(jnp.float32)

    return {
        "w1": w1.astype(jnp.bfloat16),                # MXU operands in bf16
        "w2x": w2[:H1, :].astype(jnp.bfloat16),
        "w2a": w2[H1:, :].astype(jnp.float32),        # tiny; consumed on the VPU in f32
        "ln1": ln1,
        "ln2": ln2,
    }


def critic_ref(x, a, p):
    w1 = p["w1"].astype(jnp.float32)
    w2x = p["w2x"].astype(jnp.float32)
    w2a = p["w2a"]
    b1, g1, be1 = p["ln1"][0], p["ln1"][1], p["ln1"][2]
    b2, g2, be2 = p["ln2"][0], p["ln2"][1], p["ln2"][2]
    w3, b3 = p["ln2"][3], p["ln2"][4, 0]

    h1 = x @ w1 + b1
    mu = h1.mean(-1, keepdims=True)
    var = ((h1 - mu) ** 2).mean(-1, keepdims=True)
    h1 = jnp.maximum((h1 - mu) / jnp.sqrt(var + LN_EPS) * g1 + be1, 0.0)

    h2 = h1 @ w2x + a @ w2a + b2
    mu = h2.mean(-1, keepdims=True)
    var = ((h2 - mu) ** 2).mean(-1, keepdims=True)
    h2 = jnp.maximum((h2 - mu) / jnp.sqrt(var + LN_EPS) * g2 + be2, 0.0)

    return (h2 @ w3 + b3)[:, None]


if __name__ == "__main__":
    key = jax.random.PRNGKey(0)
    kx, ka, kp = jax.random.split(key, 3)

    batch, state_size, action_size = 256, 16, 4
    x = jax.random.normal(kx, (batch, state_size), jnp.float32)
    a = jax.random.normal(ka, (batch, action_size), jnp.float32)
    params = init_params(kp, state_size, action_size)

    # block_batch=128 -> tb=128, 2 grid steps: exercises the pipelined batch
    # grid (and the v7x two-TensorCore split) even at this small demo size.
    out = jax.block_until_ready(critic_forward(x, a, params, block_batch=128))
    ref = jax.block_until_ready(critic_ref(x, a, params))

    assert out.shape == (batch, 1)
    max_err = float(jnp.max(jnp.abs(out - ref)))
    # bf16 MXU operands vs f32 reference matmuls -> loose-ish tolerance.
    assert jnp.allclose(out, ref, atol=5e-2, rtol=5e-2), max_err
    print("KERNEL_OK")
</pallas_src>

<mosaic_0001>
module attributes {stable_mosaic.version = 11 : i64} {
  func.func @critic_kernel(%arg0: i32, %arg1: memref<128x20xf32, #tpu.memory_space<vmem>>, %arg2: memref<16x400xbf16, #tpu.memory_space<vmem>>, %arg3: memref<3x400xf32, #tpu.memory_space<vmem>>, %arg4: memref<400x300xbf16, #tpu.memory_space<vmem>>, %arg5: memref<4x300xf32, #tpu.memory_space<vmem>>, %arg6: memref<5x300xf32, #tpu.memory_space<vmem>>, %arg7: memref<128x8xf32, #tpu.memory_space<vmem>>) attributes {dimension_semantics = [#tpu.dimension_semantics<parallel>], iteration_bounds = array<i64: 2>, scalar_prefetch = 0 : i64, scratch_operands = 0 : i64, tpu.core_type = #tpu.core_type<tc>, window_params = [{transform_indices = @transform_0, window_bounds = array<i64: 128, 20>}, {pipeline_mode = #tpu.pipeline_mode<synchronous>, transform_indices = @transform_1, window_bounds = array<i64: 16, 400>}, {pipeline_mode = #tpu.pipeline_mode<synchronous>, transform_indices = @transform_2, window_bounds = array<i64: 3, 400>}, {pipeline_mode = #tpu.pipeline_mode<synchronous>, transform_indices = @transform_3, window_bounds = array<i64: 400, 300>}, {pipeline_mode = #tpu.pipeline_mode<synchronous>, transform_indices = @transform_4, window_bounds = array<i64: 4, 300>}, {pipeline_mode = #tpu.pipeline_mode<synchronous>, transform_indices = @transform_5, window_bounds = array<i64: 5, 300>}, {transform_indices = @transform_6, window_bounds = array<i64: 128, 8>}]} {
    %c0 = arith.constant 0 : index
    %c0_0 = arith.constant 0 : index
    %0 = vector.load %arg1[%c0, %c0_0] : memref<128x20xf32, #tpu.memory_space<vmem>>, vector<128x20xf32>
    %1 = vector.extract_strided_slice %0 {offsets = [0, 0], sizes = [128, 16], strides = [1, 1]} : vector<128x20xf32> to vector<128x16xf32>
    %2 = arith.truncf %1 : vector<128x16xf32> to vector<128x16xbf16>
    %c0_1 = arith.constant 0 : index
    %c0_2 = arith.constant 0 : index
    %3 = vector.load %arg2[%c0_1, %c0_2] : memref<16x400xbf16, #tpu.memory_space<vmem>>, vector<16x400xbf16>
    %cst = arith.constant dense<0.000000e+00> : vector<128x400xf32>
    %4 = tpu.matmul %2, %3, %cst {dimension_numbers = #tpu.dot_dimension_numbers<[1], [0], [0], [1], [0, 0, 1, 1], [], []>} : vector<128x16xbf16>, vector<16x400xbf16>, vector<128x400xf32> -> vector<128x400xf32>
    %c0_3 = arith.constant 0 : index
    %c0_4 = arith.constant 0 : index
    %5 = vector.load %arg3[%c0_3, %c0_4] : memref<3x400xf32, #tpu.memory_space<vmem>>, vector<1x400xf32>
    %6 = vector.broadcast %5 : vector<1x400xf32> to vector<128x400xf32>
    %7 = arith.addf %4, %6 : vector<128x400xf32>
    %c1 = arith.constant 1 : index
    %c0_5 = arith.constant 0 : index
    %8 = vector.load %arg3[%c1, %c0_5] : memref<3x400xf32, #tpu.memory_space<vmem>>, vector<1x400xf32>
    %c2 = arith.constant 2 : index
    %c0_6 = arith.constant 0 : index
    %9 = vector.load %arg3[%c2, %c0_6] : memref<3x400xf32, #tpu.memory_space<vmem>>, vector<1x400xf32>
    %cst_7 = arith.constant dense<0.000000e+00> : vector<128xf32>
    %10 = vector.multi_reduction <add>, %7, %cst_7 [1] : vector<128x400xf32> to vector<128xf32>
    %11 = vector.shape_cast %10 : vector<128xf32> to vector<128x1xf32>
    %cst_8 = arith.constant 4.000000e+02 : f32
    %12 = vector.broadcast %cst_8 : f32 to vector<128x1xf32>
    %13 = arith.divf %11, %12 : vector<128x1xf32>
    %14 = vector.broadcast %13 : vector<128x1xf32> to vector<128x400xf32>
    %15 = arith.subf %7, %14 : vector<128x400xf32>
    %16 = arith.mulf %15, %15 : vector<128x400xf32>
    %cst_9 = arith.constant dense<0.000000e+00> : vector<128xf32>
    %17 = vector.multi_reduction <add>, %16, %cst_9 [1] : vector<128x400xf32> to vector<128xf32>
    %18 = vector.shape_cast %17 : vector<128xf32> to vector<128x1xf32>
    %cst_10 = arith.constant 4.000000e+02 : f32
    %19 = vector.broadcast %cst_10 : f32 to vector<128x1xf32>
    %20 = arith.divf %18, %19 : vector<128x1xf32>
    %cst_11 = arith.constant 9.99999974E-6 : f32
    %21 = vector.broadcast %cst_11 : f32 to vector<128x1xf32>
    %22 = arith.addf %20, %21 : vector<128x1xf32>
    %23 = math.rsqrt %22 : vector<128x1xf32>
    %24 = vector.broadcast %23 : vector<128x1xf32> to vector<128x400xf32>
    %25 = arith.mulf %15, %24 : vector<128x400xf32>
    %26 = vector.broadcast %8 : vector<1x400xf32> to vector<128x400xf32>
    %27 = arith.mulf %25, %26 : vector<128x400xf32>
    %28 = vector.broadcast %9 : vector<1x400xf32> to vector<128x400xf32>
    %29 = arith.addf %27, %28 : vector<128x400xf32>
    %cst_12 = arith.constant 0.000000e+00 : f32
    %30 = vector.broadcast %cst_12 : f32 to vector<128x400xf32>
    %31 = arith.maximumf %29, %30 : vector<128x400xf32>
    %32 = arith.truncf %31 : vector<128x400xf32> to vector<128x400xbf16>
    %c0_13 = arith.constant 0 : index
    %c0_14 = arith.constant 0 : index
    %33 = vector.load %arg4[%c0_13, %c0_14] : memref<400x300xbf16, #tpu.memory_space<vmem>>, vector<400x300xbf16>
    %cst_15 = arith.constant dense<0.000000e+00> : vector<128x300xf32>
    %34 = tpu.matmul %32, %33, %cst_15 {dimension_numbers = #tpu.dot_dimension_numbers<[1], [0], [0], [1], [0, 0, 1, 1], [], []>} : vector<128x400xbf16>, vector<400x300xbf16>, vector<128x300xf32> -> vector<128x300xf32>
    %c0_16 = arith.constant 0 : index
    %c0_17 = arith.constant 0 : index
    %35 = vector.load %arg6[%c0_16, %c0_17] : memref<5x300xf32, #tpu.memory_space<vmem>>, vector<1x300xf32>
    %36 = vector.broadcast %35 : vector<1x300xf32> to vector<128x300xf32>
    %37 = arith.addf %34, %36 : vector<128x300xf32>
    %38 = vector.extract_strided_slice %0 {offsets = [0, 16], sizes = [128, 1], strides = [1, 1]} : vector<128x20xf32> to vector<128x1xf32>
    %c0_18 = arith.constant 0 : index
    %c0_19 = arith.constant 0 : index
    %39 = vector.load %arg5[%c0_18, %c0_19] : memref<4x300xf32, #tpu.memory_space<vmem>>, vector<1x300xf32>
    %40 = vector.broadcast %38 : vector<128x1xf32> to vector<128x300xf32>
    %41 = vector.broadcast %39 : vector<1x300xf32> to vector<128x300xf32>
    %42 = arith.mulf %40, %41 : vector<128x300xf32>
    %43 = arith.addf %37, %42 : vector<128x300xf32>
    %44 = vector.extract_strided_slice %0 {offsets = [0, 17], sizes = [128, 1], strides = [1, 1]} : vector<128x20xf32> to vector<128x1xf32>
    %c1_20 = arith.constant 1 : index
    %c0_21 = arith.constant 0 : index
    %45 = vector.load %arg5[%c1_20, %c0_21] : memref<4x300xf32, #tpu.memory_space<vmem>>, vector<1x300xf32>
    %46 = vector.broadcast %44 : vector<128x1xf32> to vector<128x300xf32>
    %47 = vector.broadcast %45 : vector<1x300xf32> to vector<128x300xf32>
    %48 = arith.mulf %46, %47 : vector<128x300xf32>
    %49 = arith.addf %43, %48 : vector<128x300xf32>
    %50 = vector.extract_strided_slice %0 {offsets = [0, 18], sizes = [128, 1], strides = [1, 1]} : vector<128x20xf32> to vector<128x1xf32>
    %c2_22 = arith.constant 2 : index
    %c0_23 = arith.constant 0 : index
    %51 = vector.load %arg5[%c2_22, %c0_23] : memref<4x300xf32, #tpu.memory_space<vmem>>, vector<1x300xf32>
    %52 = vector.broadcast %50 : vector<128x1xf32> to vector<128x300xf32>
    %53 = vector.broadcast %51 : vector<1x300xf32> to vector<128x300xf32>
    %54 = arith.mulf %52, %53 : vector<128x300xf32>
    %55 = arith.addf %49, %54 : vector<128x300xf32>
    %56 = vector.extract_strided_slice %0 {offsets = [0, 19], sizes = [128, 1], strides = [1, 1]} : vector<128x20xf32> to vector<128x1xf32>
    %c3 = arith.constant 3 : index
    %c0_24 = arith.constant 0 : index
    %57 = vector.load %arg5[%c3, %c0_24] : memref<4x300xf32, #tpu.memory_space<vmem>>, vector<1x300xf32>
    %58 = vector.broadcast %56 : vector<128x1xf32> to vector<128x300xf32>
    %59 = vector.broadcast %57 : vector<1x300xf32> to vector<128x300xf32>
    %60 = arith.mulf %58, %59 : vector<128x300xf32>
    %61 = arith.addf %55, %60 : vector<128x300xf32>
    %c1_25 = arith.constant 1 : index
    %c0_26 = arith.constant 0 : index
    %62 = vector.load %arg6[%c1_25, %c0_26] : memref<5x300xf32, #tpu.memory_space<vmem>>, vector<1x300xf32>
    %c2_27 = arith.constant 2 : index
    %c0_28 = arith.constant 0 : index
    %63 = vector.load %arg6[%c2_27, %c0_28] : memref<5x300xf32, #tpu.memory_space<vmem>>, vector<1x300xf32>
    %cst_29 = arith.constant dense<0.000000e+00> : vector<128xf32>
    %64 = vector.multi_reduction <add>, %61, %cst_29 [1] : vector<128x300xf32> to vector<128xf32>
    %65 = vector.shape_cast %64 : vector<128xf32> to vector<128x1xf32>
    %cst_30 = arith.constant 3.000000e+02 : f32
    %66 = vector.broadcast %cst_30 : f32 to vector<128x1xf32>
    %67 = arith.divf %65, %66 : vector<128x1xf32>
    %68 = vector.broadcast %67 : vector<128x1xf32> to vector<128x300xf32>
    %69 = arith.subf %61, %68 : vector<128x300xf32>
    %70 = arith.mulf %69, %69 : vector<128x300xf32>
    %cst_31 = arith.constant dense<0.000000e+00> : vector<128xf32>
    %71 = vector.multi_reduction <add>, %70, %cst_31 [1] : vector<128x300xf32> to vector<128xf32>
    %72 = vector.shape_cast %71 : vector<128xf32> to vector<128x1xf32>
    %cst_32 = arith.constant 3.000000e+02 : f32
    %73 = vector.broadcast %cst_32 : f32 to vector<128x1xf32>
    %74 = arith.divf %72, %73 : vector<128x1xf32>
    %cst_33 = arith.constant 9.99999974E-6 : f32
    %75 = vector.broadcast %cst_33 : f32 to vector<128x1xf32>
    %76 = arith.addf %74, %75 : vector<128x1xf32>
    %77 = math.rsqrt %76 : vector<128x1xf32>
    %78 = vector.broadcast %77 : vector<128x1xf32> to vector<128x300xf32>
    %79 = arith.mulf %69, %78 : vector<128x300xf32>
    %80 = vector.broadcast %62 : vector<1x300xf32> to vector<128x300xf32>
    %81 = arith.mulf %79, %80 : vector<128x300xf32>
    %82 = vector.broadcast %63 : vector<1x300xf32> to vector<128x300xf32>
    %83 = arith.addf %81, %82 : vector<128x300xf32>
    %cst_34 = arith.constant 0.000000e+00 : f32
    %84 = vector.broadcast %cst_34 : f32 to vector<128x300xf32>
    %85 = arith.maximumf %83, %84 : vector<128x300xf32>
    %c3_35 = arith.constant 3 : index
    %c0_36 = arith.constant 0 : index
    %86 = vector.load %arg6[%c3_35, %c0_36] : memref<5x300xf32, #tpu.memory_space<vmem>>, vector<1x300xf32>
    %c4 = arith.constant 4 : index
    %c0_37 = arith.constant 0 : index
    %87 = vector.load %arg6[%c4, %c0_37] : memref<5x300xf32, #tpu.memory_space<vmem>>, vector<1x1xf32>
    %88 = vector.broadcast %86 : vector<1x300xf32> to vector<128x300xf32>
    %89 = arith.mulf %85, %88 : vector<128x300xf32>
    %cst_38 = arith.constant dense<0.000000e+00> : vector<128xf32>
    %90 = vector.multi_reduction <add>, %89, %cst_38 [1] : vector<128x300xf32> to vector<128xf32>
    %91 = vector.shape_cast %90 : vector<128xf32> to vector<128x1xf32>
    %92 = vector.broadcast %87 : vector<1x1xf32> to vector<128x1xf32>
    %93 = arith.addf %91, %92 : vector<128x1xf32>
    %94 = vector.shape_cast %93 : vector<128x1xf32> to vector<128x1xf32>
    %95 = vector.broadcast %94 : vector<128x1xf32> to vector<128x8xf32>
    %c0_39 = arith.constant 0 : index
    %c0_40 = arith.constant 0 : index
    %96 = vector.load %arg7[%c0_39, %c0_40] : memref<128x8xf32, #tpu.memory_space<vmem>>, vector<128x8xf32>
    tpu.vector_store %arg7[%c0_39, %c0_40], %95 {strides = array<i32>} : memref<128x8xf32, #tpu.memory_space<vmem>>, vector<128x8xf32>,
    return
  }
  func.func @transform_0(%arg0: i32) -> (i32, i32) {
    %c0_i32 = arith.constant 0 : i32
    %c0_i32_0 = arith.constant 0 : i32
    return %arg0, %c0_i32 : i32, i32
  }
  func.func @transform_1(%arg0: i32) -> (i32, i32) {
    %c0_i32 = arith.constant 0 : i32
    %c0_i32_0 = arith.constant 0 : i32
    %c0_i32_1 = arith.constant 0 : i32
    return %c0_i32, %c0_i32_0 : i32, i32
  }
  func.func @transform_2(%arg0: i32) -> (i32, i32) {
    %c0_i32 = arith.constant 0 : i32
    %c0_i32_0 = arith.constant 0 : i32
    %c0_i32_1 = arith.constant 0 : i32
    return %c0_i32, %c0_i32_0 : i32, i32
  }
  func.func @transform_3(%arg0: i32) -> (i32, i32) {
    %c0_i32 = arith.constant 0 : i32
    %c0_i32_0 = arith.constant 0 : i32
    %c0_i32_1 = arith.constant 0 : i32
    return %c0_i32, %c0_i32_0 : i32, i32
  }
  func.func @transform_4(%arg0: i32) -> (i32, i32) {
    %c0_i32 = arith.constant 0 : i32
    %c0_i32_0 = arith.constant 0 : i32
    %c0_i32_1 = arith.constant 0 : i32
    return %c0_i32, %c0_i32_0 : i32, i32
  }
  func.func @transform_5(%arg0: i32) -> (i32, i32) {
    %c0_i32 = arith.constant 0 : i32
    %c0_i32_0 = arith.constant 0 : i32
    %c0_i32_1 = arith.constant 0 : i32
    return %c0_i32, %c0_i32_0 : i32, i32
  }
  func.func @transform_6(%arg0: i32) -> (i32, i32) {
    %c0_i32 = arith.constant 0 : i32
    %c0_i32_0 = arith.constant 0 : i32
    return %arg0, %c0_i32 : i32, i32
  }
}

</mosaic_0001>

<llo_original>
// kernel: tpu_custom_call.1
$region0: #{tpu_custom_call.1}
  #allocation0 [shape = 'u32[]', space=smem, size = 0x4, offset = 0x4, fixed_abs, tag = 'smem constant byte address 0x4 - core index']
  #allocation1 [shape = 'u32[72,128]{1,0:T(1,128)}', space=vmem, size = 0x9000, scoped, tag = 'internal scratch']
  %s0 = inlined_call_operand.vmem [shape: f32[256,20], index: 0, kind: input, shape index: {}]
  %s1 = inlined_call_operand.vmem [shape: bf16[16,400], index: 1, kind: input, shape index: {}]
  %s2 = inlined_call_operand.vmem [shape: f32[3,400], index: 2, kind: input, shape index: {}]
  %s3 = inlined_call_operand.hbm [shape: bf16[400,300], index: 3, kind: input, shape index: {}]
  %s4 = inlined_call_operand.vmem [shape: f32[4,300], index: 4, kind: input, shape index: {}]
  %s5 = inlined_call_operand.vmem [shape: f32[5,300], index: 5, kind: input, shape index: {}]
  %s6 = inlined_call_operand.vmem [shape: f32[256,8], index: 6, kind: output, shape index: {}]
  %s7 = sld [smem:[#allocation0]]
  $region61: #{tpu_custom_call.1} parent=0
    _
  %s9 = ssub.s32 1, %s7
  %s10 = scalar_select 0, %s9, %s7
  $region1: #{tpu_custom_call.1} parent=0
    #allocation2 [shape = 'u8[307200]{0}', space=vmem, size = 0x4b000, scoped, tag = 'input window, operand 3, single buffered']
    #allocation3 [shape = 's32[2]{0}', space=sflag, size = 0x8, scoped, tag = 'scoped memory for tpu_custom_call.1']
    %11 = vsyncpa [#allocation3], 0
    loop: start=0, step=1, limit=4
    $region2: #{tpu_custom_call.1} parent=1 // loop_pre_header
      _
    $region3: #{tpu_custom_call.1} parent=1 // loop_header
      %s13 = sphi 0, %s17
      %p14 = scmp.ge.s32.totalorder %s13, 4
      %s23 = sphi 0, %s25
      %s26 = sphi 0, %s23
      %s27 = sphi 0, %s26
      %s43 = sphi 0, %s27
      %s47 = sphi 0, %s47
      %s49 = sphi 0, %s47
      %s50 = sphi 0, %s49
      %s64 = sphi 0, %s50
      %s68 = sphi 0, %s68
      %s70 = sphi 0, %s68
      %s71 = sphi 0, %s70
      %s85 = sphi 0, %s71
      %s89 = sphi 0, %s89
      %s91 = sphi 0, %s89
      %s92 = sphi 0, %s91
      %s106 = sphi 0, %s92
      %s110 = sphi 0, %s110
      %s112 = sphi 0, %s110
      %s113 = sphi 0, %s112
      %s127 = sphi 0, %s113
      %s131 = sphi 0, %s131
      %s133 = sphi 0, %s131
      %s134 = sphi 0, %s133
      %s148 = sphi 0, %s134
      %s154 = sphi 0, %s156
      %s157 = sphi 0, %s154
      %s158 = sphi 0, %s157
      %s174 = sphi 0, %s158
    $region4: #{tpu_custom_call.1} parent=1 // loop_header_branch
      %16 = sbr.rel (%p14) target = $region8
    $region5: #{tpu_custom_call.1} parent=1 // loop_body
      %s18 = ssub.s32 %s13, 1
      %s19 = ssub.s32 %s13, 2
      %s20 = sadd.s32 %s13, 1
      %s21 = ssub.s32 %s13, %s20
      %p22 = scmp.eq.s32.totalorder %s21, 0
      %s24 = sadd.s32 %s23, 1
      %s25 = scalar_select %p22, %s23, %s24
      %p28 = pneg %p22
      %p29 = scmp.eq.s32.totalorder %s13, 1
      %p30 = por %p28, %p29
      %p31 = scmp.ne.s32.totalorder %s23, %s26
      %p32 = scmp.eq.s32.totalorder %s13, 0
      %p33 = por %p31, %p32
      %p34 = scmp.ne.s32.totalorder %s23, %s26
      %p35 = scmp.eq.s32.totalorder %s18, 1
      %p36 = por %p34, %p35
      %p37 = scmp.ne.s32.totalorder %s26, %s27
      %p38 = scmp.eq.s32.totalorder %s18, 0
      %p39 = por %p37, %p38
      %p40 = scmp.ne.s32.totalorder %s26, %s27
      %p41 = scmp.eq.s32.totalorder %s19, 1
      %p42 = por %p40, %p41
      %p44 = scmp.ne.s32.totalorder %s27, %s43
      %p45 = scmp.eq.s32.totalorder %s19, 0
      %p46 = por %p44, %p45
      %s48 = sadd.s32 %s47, 1
      %p51 = scmp.eq.s32.totalorder %s13, 1
      %p52 = scmp.ne.s32.totalorder %s47, %s49
      %p53 = scmp.eq.s32.totalorder %s13, 0
      %p54 = por %p52, %p53
      %p55 = scmp.ne.s32.totalorder %s47, %s49
      %p56 = scmp.eq.s32.totalorder %s18, 1
      %p57 = por %p55, %p56
      %p58 = scmp.ne.s32.totalorder %s49, %s50
      %p59 = scmp.eq.s32.totalorder %s18, 0
      %p60 = por %p58, %p59
      %p61 = scmp.ne.s32.totalorder %s49, %s50
      %p62 = scmp.eq.s32.totalorder %s19, 1
      %p63 = por %p61, %p62
      %p65 = scmp.ne.s32.totalorder %s50, %s64
      %p66 = scmp.eq.s32.totalorder %s19, 0
      %p67 = por %p65, %p66
      %s69 = sadd.s32 %s68, 1
      %p72 = scmp.eq.s32.totalorder %s13, 1
      %p73 = scmp.ne.s32.totalorder %s68, %s70
      %p74 = scmp.eq.s32.totalorder %s13, 0
      %p75 = por %p73, %p74
      %p76 = scmp.ne.s32.totalorder %s68, %s70
      %p77 = scmp.eq.s32.totalorder %s18, 1
      %p78 = por %p76, %p77
      %p79 = scmp.ne.s32.totalorder %s70, %s71
      %p80 = scmp.eq.s32.totalorder %s18, 0
      %p81 = por %p79, %p80
      %p82 = scmp.ne.s32.totalorder %s70, %s71
      %p83 = scmp.eq.s32.totalorder %s19, 1
      %p84 = por %p82, %p83
      %p86 = scmp.ne.s32.totalorder %s71, %s85
      %p87 = scmp.eq.s32.totalorder %s19, 0
      %p88 = por %p86, %p87
      %s90 = sadd.s32 %s89, 1
      %p93 = scmp.eq.s32.totalorder %s13, 1
      %p94 = scmp.ne.s32.totalorder %s89, %s91
      %p95 = scmp.eq.s32.totalorder %s13, 0
      %p96 = por %p94, %p95
      %p97 = scmp.ne.s32.totalorder %s89, %s91
      %p98 = scmp.eq.s32.totalorder %s18, 1
      %p99 = por %p97, %p98
      %p100 = scmp.ne.s32.totalorder %s91, %s92
      %p101 = scmp.eq.s32.totalorder %s18, 0
      %p102 = por %p100, %p101
      %p103 = scmp.ne.s32.totalorder %s91, %s92
      %p104 = scmp.eq.s32.totalorder %s19, 1
      %p105 = por %p103, %p104
      %p107 = scmp.ne.s32.totalorder %s92, %s106
      %p108 = scmp.eq.s32.totalorder %s19, 0
      %p109 = por %p107, %p108
      %s111 = sadd.s32 %s110, 1
      %p114 = scmp.eq.s32.totalorder %s13, 1
      %p115 = scmp.ne.s32.totalorder %s110, %s112
      %p116 = scmp.eq.s32.totalorder %s13, 0
      %p117 = por %p115, %p116
      %p118 = scmp.ne.s32.totalorder %s110, %s112
      %p119 = scmp.eq.s32.totalorder %s18, 1
      %p120 = por %p118, %p119
      %p121 = scmp.ne.s32.totalorder %s112, %s113
      %p122 = scmp.eq.s32.totalorder %s18, 0
      %p123 = por %p121, %p122
      %p124 = scmp.ne.s32.totalorder %s112, %s113
      %p125 = scmp.eq.s32.totalorder %s19, 1
      %p126 = por %p124, %p125
      %p128 = scmp.ne.s32.totalorder %s113, %s127
      %p129 = scmp.eq.s32.totalorder %s19, 0
      %p130 = por %p128, %p129
      %s132 = sadd.s32 %s131, 1
      %p135 = scmp.eq.s32.totalorder %s13, 1
      %p136 = scmp.ne.s32.totalorder %s131, %s133
      %p137 = scmp.eq.s32.totalorder %s13, 0
      %p138 = por %p136, %p137
      %p139 = scmp.ne.s32.totalorder %s131, %s133
      %p140 = scmp.eq.s32.totalorder %s18, 1
      %p141 = por %p139, %p140
      %p142 = scmp.ne.s32.totalorder %s133, %s134
      %p143 = scmp.eq.s32.totalorder %s18, 0
      %p144 = por %p142, %p143
      %p145 = scmp.ne.s32.totalorder %s133, %s134
      %p146 = scmp.eq.s32.totalorder %s19, 1
      %p147 = por %p145, %p146
      %p149 = scmp.ne.s32.totalorder %s134, %s148
      %p150 = scmp.eq.s32.totalorder %s19, 0
      %p151 = por %p149, %p150
      %s152 = ssub.s32 %s13, %s20
      %p153 = scmp.eq.s32.totalorder %s152, 0
      %s155 = sadd.s32 %s154, 1
      %s156 = scalar_select %p153, %s154, %s155
      %p159 = pneg %p153
      %p160 = scmp.eq.s32.totalorder %s13, 1
      %p161 = por %p159, %p160
      %p162 = scmp.ne.s32.totalorder %s154, %s157
      %p163 = scmp.eq.s32.totalorder %s13, 0
      %p164 = por %p162, %p163
      %p165 = scmp.ne.s32.totalorder %s154, %s157
      %p166 = scmp.eq.s32.totalorder %s18, 1
      %p167 = por %p165, %p166
      %p168 = scmp.ne.s32.totalorder %s157, %s158
      %p169 = scmp.eq.s32.totalorder %s18, 0
      %p170 = por %p168, %p169
      %p171 = scmp.ne.s32.totalorder %s157, %s158
      %p172 = scmp.eq.s32.totalorder %s19, 1
      %p173 = por %p171, %p172
      %p175 = scmp.ne.s32.totalorder %s158, %s174
      %p176 = scmp.eq.s32.totalorder %s19, 0
      %p177 = por %p175, %p176
      %p178 = scmp.le.s32.totalorder 1, %s13
      %p179 = scmp.lt.s32.totalorder %s13, 3
      %p180 = pnand %p178, %p179
      %p181 = pneg %p180
      // Predicated region
      $region9: #{tpu_custom_call.1} parent=5 // pred_check
        _
      $region10: #{tpu_custom_call.1} parent=5 // pred_check_branch
        %183 = sbr.rel (%p180) target = $region12
      $region11: #{tpu_custom_call.1} parent=5 // pred_region
        %s184 = ssub.s32 %s13, 1
        // Predicated region
        $region13: #{tpu_custom_call.1} parent=11 // pred_check
          %p185 = pneg %p60
        $region14: #{tpu_custom_call.1} parent=11 // pred_check_branch
          %187 = sbr.rel (%p185) target = $region16
        $region15: #{tpu_custom_call.1} parent=11 // pred_region
          _
        $region16: #{tpu_custom_call.1} parent=11 // pred_fallthru
          _
        // Predicated region
        $region17: #{tpu_custom_call.1} parent=11 // pred_check
          %p188 = pneg %p81
        $region18: #{tpu_custom_call.1} parent=11 // pred_check_branch
          %190 = sbr.rel (%p188) target = $region20
        $region19: #{tpu_custom_call.1} parent=11 // pred_region
          _
        $region20: #{tpu_custom_call.1} parent=11 // pred_fallthru
          _
        // Predicated region
        $region21: #{tpu_custom_call.1} parent=11 // pred_check
          %p191 = pneg %p102
        $region22: #{tpu_custom_call.1} parent=11 // pred_check_branch
          %193 = sbr.rel (%p191) target = $region24
        $region23: #{tpu_custom_call.1} parent=11 // pred_region
          %195 = vsyncadd [#allocation3], 0
          %s196 = sshll.u32 %s3, 4
          %s197 = int_to_ptr.hbm [resolvable:$true] %s196
          %s198 = sshll.u32 [#allocation2], 4
          %s199 = int_to_ptr.vmem [resolvable:$true] %s198
          %204 = dma.hbm_to_vmem [thread:$0]  %s197, 9600, %s199, [#allocation3], 192, 192, 12
        $region24: #{tpu_custom_call.1} parent=11 // pred_fallthru
          _
        // Predicated region
        $region25: #{tpu_custom_call.1} parent=11 // pred_check
          %p205 = pneg %p123
        $region26: #{tpu_custom_call.1} parent=11 // pred_check_branch
          %207 = sbr.rel (%p205) target = $region28
        $region27: #{tpu_custom_call.1} parent=11 // pred_region
          _
        $region28: #{tpu_custom_call.1} parent=11 // pred_fallthru
          _
        // Predicated region
        $region29: #{tpu_custom_call.1} parent=11 // pred_check
          %p208 = pneg %p144
        $region30: #{tpu_custom_call.1} parent=11 // pred_check_branch
          %210 = sbr.rel (%p208) target = $region32
        $region31: #{tpu_custom_call.1} parent=11 // pred_region
          _
        $region32: #{tpu_custom_call.1} parent=11 // pred_fallthru
          _
      $region12: #{tpu_custom_call.1} parent=5 // pred_fallthru
        _
      %p211 = scmp.lt.s32.totalorder %s13, 2
      // Predicated region
      $region33: #{tpu_custom_call.1} parent=5 // pred_check
        %p212 = pneg %p211
      $region34: #{tpu_custom_call.1} parent=5 // pred_check_branch
        %214 = sbr.rel (%p212) target = $region36
      $region35: #{tpu_custom_call.1} parent=5 // pred_region
        // Predicated region
        $region37: #{tpu_custom_call.1} parent=35 // pred_check
          %p215 = pneg %p33
        $region38: #{tpu_custom_call.1} parent=35 // pred_check_branch
          %217 = sbr.rel (%p215) target = $region40
        $region39: #{tpu_custom_call.1} parent=35 // pred_region
          %s218 = smul.u32 16, %s13
          %p219 = scmp.lt.s32.totalorder %s218, 31
          %s220 = scalar_select %p219, %s218, 31
          %s221 = smul.addr %s220, 8
          %s222 = scalar_lea.vmem %s0, %s221
          %s223 = smul.u32 16, %s13
        $region40: #{tpu_custom_call.1} parent=35 // pred_fallthru
          _
      $region36: #{tpu_custom_call.1} parent=5 // pred_fallthru
        _
      %p224 = scmp.le.s32.totalorder 1, %s13
      %p225 = scmp.lt.s32.totalorder %s13, 3
      %p226 = pnand %p224, %p225
      %p227 = pneg %p226
      // Predicated region
      $region41: #{tpu_custom_call.1} parent=5 // pred_check
        _
      $region42: #{tpu_custom_call.1} parent=5 // pred_check_branch
        %229 = sbr.rel (%p226) target = $region44
      $region43: #{tpu_custom_call.1} parent=5 // pred_region
        %s230 = ssub.s32 %s13, 1
        // Predicated region
        $region45: #{tpu_custom_call.1} parent=43 // pred_check
          %p231 = pneg %p102
        $region46: #{tpu_custom_call.1} parent=43 // pred_check_branch
          %233 = sbr.rel (%p231) target = $region48
        $region47: #{tpu_custom_call.1} parent=43 // pred_region
          %235 = dma.done [#allocation3], 9600
        $region48: #{tpu_custom_call.1} parent=43 // pred_fallthru
          _
        %s236 = smul.u32 16, %s18
        %p237 = scmp.lt.s32.totalorder %s236, 31
        %s238 = scalar_select %p237, %s236, 31
        %s239 = smul.addr %s238, 8
        %s240 = scalar_lea.vmem %s0, %s239
        %p241 = pneg %p39
        %p242 = pneg %p36
        %p243 = pneg %p60
        %p244 = pneg %p57
        %p245 = pneg %p81
        %p246 = pneg %p78
        %p247 = pneg %p102
        %p248 = pneg %p99
        %p249 = pneg %p123
        %p250 = pneg %p120
        %p251 = pneg %p144
        %p252 = pneg %p141
        %p253 = pneg %p170
        %p254 = pneg %p167
        %s255 = smul.u32 16, %s18
        %p256 = scmp.lt.s32.totalorder %s255, 31
        %s257 = scalar_select %p256, %s255, 31
        %s258 = smul.addr %s257, 8
        %s259 = scalar_lea.vmem %s6, %s258
        %s260 = smul.u32 16, %s18
        %p261 = scmp.lt.s32.totalorder %s260, 31
        %s262 = scalar_select %p261, %s260, 31
        %s263 = smul.addr %s262, 8
        %s264 = scalar_lea.vmem %s0, %s263
        %s265 = smul.u32 16, %s18
        %s266 = smul.u32 16, %s18
        %p267 = scmp.lt.s32.totalorder %s266, 31
        %s268 = scalar_select %p267, %s266, 31
        %s269 = smul.addr %s268, 8
        %s270 = scalar_lea.vmem %s6, %s269
        %s271 = smul.u32 16, %s18
        %v273 = vld [vmem:[%s264] sm:$0xff]
        %v274 = vld [vmem:[%s264 + $0x8] sm:$0xff]
        %v275 = vld [vmem:[%s264 + $0x10] sm:$0xff]
        %v276 = vld [vmem:[%s264 + $0x18] sm:$0xff]
        %v277 = vld [vmem:[%s264 + $0x20] sm:$0xff]
        %v278 = vld [vmem:[%s264 + $0x28] sm:$0xff]
        %v279 = vld [vmem:[%s264 + $0x30] sm:$0xff]
        %v280 = vld [vmem:[%s264 + $0x38] sm:$0xff]
        %v281 = vld [vmem:[%s264 + $0x40] sm:$0xff]
        %v282 = vld [vmem:[%s264 + $0x48] sm:$0xff]
        %v283 = vld [vmem:[%s264 + $0x50] sm:$0xff]
        %v284 = vld [vmem:[%s264 + $0x58] sm:$0xff]
        %v285 = vld [vmem:[%s264 + $0x60] sm:$0xff]
        %v286 = vld [vmem:[%s264 + $0x68] sm:$0xff]
        %v287 = vld [vmem:[%s264 + $0x70] sm:$0xff]
        %v288 = vld [vmem:[%s264 + $0x78] sm:$0xff]
        %v289 = vpack.c.bf16 %v274, %v273
        %v290 = vpack.c.bf16 %v276, %v275
        %v291 = vpack.c.bf16 %v278, %v277
        %v292 = vpack.c.bf16 %v280, %v279
        %v293 = vpack.c.bf16 %v282, %v281
        %v294 = vpack.c.bf16 %v284, %v283
        %v295 = vpack.c.bf16 %v286, %v285
        %v296 = vpack.c.bf16 %v288, %v287
        %v297 = vld [vmem:[%s1] sm:$0xff]
        %v298 = vld [vmem:[%s1 + $0x8] sm:$0xff]
        %v299 = vld [vmem:[%s1 + $0x10] sm:$0xff]
        %v300 = vld [vmem:[%s1 + $0x18] sm:$0xff]
        %v301 = vld [vmem:[%s2] ss:$4 sm:$0xf]
        %v303 = vperm.slane %v301, 0
        %v304 = vperm.slane %v301, 1
        %v305 = vperm.slane %v301, 2
        %v306 = vperm.slane %v301, 3
        %v315 = vunpack.c.l.b16 %v297
        %v316 = vunpack.c.h.b16 %v297
        %v317 = vunpack.c.l.b16 %v298
        %v318 = vunpack.c.h.b16 %v298
        %v319 = vunpack.c.l.b16 %v299
        %v320 = vunpack.c.h.b16 %v299
        %v321 = vunpack.c.l.b16 %v300
        %v322 = vunpack.c.h.b16 %v300
        %v323 = vpack.c.b16 %v319, %v315
        %v324 = vpack.c.b16 %v320, %v316
        %v325 = vpack.c.b16 %v321, %v317
        %v326 = vpack.c.b16 %v322, %v318
        %vm331 = vcmask 130048
        %v333 = vsel %vm331, %v289, 0
        %v336 = vsel %vm331, %v290, 0
        %v339 = vsel %vm331, %v291, 0
        %v342 = vsel %vm331, %v292, 0
        %v345 = vsel %vm331, %v293, 0
        %v348 = vsel %vm331, %v294, 0
        %v351 = vsel %vm331, %v295, 0
        %v354 = vsel %vm331, %v296, 0
        %356 = vmatpush.bf16.msra.mxu0 0
        %357 = vmatpush.bf16.msra.mxu0 0
        %358 = vmatpush.bf16.msra.mxu0 0
        %359 = vmatpush.bf16.msra.mxu0 0
        %360 = vmatpush.bf16.msra.mxu0 0
        %361 = vmatpush.bf16.msra.mxu0 0
        %362 = vmatpush.bf16.msra.mxu0 0
        %363 = vmatpush.bf16.msra.mxu0 %v323
        %364 = vmatmul.bf16.gmra.mxu0 %v333
        %v365 = vpop.f32.mrf.mxu0
        %v366 = vadd.f32 %v303, %v365
        %v367 = vpop.f32.mrf.mxu0
        %v368 = vadd.f32 %v303, %v367
        %369 = vmatmul.bf16.gmra.mxu0 %v336
        %v370 = vpop.f32.mrf.mxu0
        %v371 = vadd.f32 %v303, %v370
        %v372 = vpop.f32.mrf.mxu0
        %v373 = vadd.f32 %v303, %v372
        %374 = vmatmul.bf16.gmra.mxu0 %v339
        %v375 = vpop.f32.mrf.mxu0
        %v376 = vadd.f32 %v303, %v375
        %v377 = vpop.f32.mrf.mxu0
        %v378 = vadd.f32 %v303, %v377
        %379 = vmatmul.bf16.gmra.mxu0 %v342
        %v380 = vpop.f32.mrf.mxu0
        %v381 = vadd.f32 %v303, %v380
        %v382 = vpop.f32.mrf.mxu0
        %v383 = vadd.f32 %v303, %v382
        %384 = vmatmul.bf16.gmra.mxu0 %v345
        %v385 = vpop.f32.mrf.mxu0
        %v386 = vadd.f32 %v303, %v385
        %v387 = vpop.f32.mrf.mxu0
        %v388 = vadd.f32 %v303, %v387
        %389 = vmatmul.bf16.gmra.mxu0 %v348
        %v390 = vpop.f32.mrf.mxu0
        %v391 = vadd.f32 %v303, %v390
        %v392 = vpop.f32.mrf.mxu0
        %v393 = vadd.f32 %v303, %v392
        %394 = vmatmul.bf16.gmra.mxu0 %v351
        %v395 = vpop.f32.mrf.mxu0
        %v396 = vadd.f32 %v303, %v395
        %v397 = vpop.f32.mrf.mxu0
        %v398 = vadd.f32 %v303, %v397
        %399 = vmatmul.bf16.gmra.mxu0 %v354
        %v400 = vpop.f32.mrf.mxu0
        %v401 = vadd.f32 %v303, %v400
        %v402 = vpop.f32.mrf.mxu0
        %v403 = vadd.f32 %v303, %v402
        %404 = vdwg.mxu0
        %405 = vmatpush.bf16.msra.mxu0 0
        %406 = vmatpush.bf16.msra.mxu0 0
        %407 = vmatpush.bf16.msra.mxu0 0
        %408 = vmatpush.bf16.msra.mxu0 0
        %409 = vmatpush.bf16.msra.mxu0 0
        %410 = vmatpush.bf16.msra.mxu0 0
        %411 = vmatpush.bf16.msra.mxu0 0
        %412 = vmatpush.bf16.msra.mxu0 %v324
        %413 = vmatmul.bf16.gmra.mxu0 %v333
        %v414 = vpop.f32.mrf.mxu0
        %v415 = vadd.f32 %v304, %v414
        %v416 = vpop.f32.mrf.mxu0
        %v417 = vadd.f32 %v304, %v416
        %418 = vmatmul.bf16.gmra.mxu0 %v336
        %v419 = vpop.f32.mrf.mxu0
        %v420 = vadd.f32 %v304, %v419
        %v421 = vpop.f32.mrf.mxu0
        %v422 = vadd.f32 %v304, %v421
        %423 = vmatmul.bf16.gmra.mxu0 %v339
        %v424 = vpop.f32.mrf.mxu0
        %v425 = vadd.f32 %v304, %v424
        %v426 = vpop.f32.mrf.mxu0
        %v427 = vadd.f32 %v304, %v426
        %428 = vmatmul.bf16.gmra.mxu0 %v342
        %v429 = vpop.f32.mrf.mxu0
        %v430 = vadd.f32 %v304, %v429
        %v431 = vpop.f32.mrf.mxu0
        %v432 = vadd.f32 %v304, %v431
        %433 = vmatmul.bf16.gmra.mxu0 %v345
        %v434 = vpop.f32.mrf.mxu0
        %v435 = vadd.f32 %v304, %v434
        %v436 = vpop.f32.mrf.mxu0
        %v437 = vadd.f32 %v304, %v436
        %438 = vmatmul.bf16.gmra.mxu0 %v348
        %v439 = vpop.f32.mrf.mxu0
        %v440 = vadd.f32 %v304, %v439
        %v441 = vpop.f32.mrf.mxu0
        %v442 = vadd.f32 %v304, %v441
        %443 = vmatmul.bf16.gmra.mxu0 %v351
        %v444 = vpop.f32.mrf.mxu0
        %v445 = vadd.f32 %v304, %v444
        %v446 = vpop.f32.mrf.mxu0
        %v447 = vadd.f32 %v304, %v446
        %448 = vmatmul.bf16.gmra.mxu0 %v354
        %v449 = vpop.f32.mrf.mxu0
        %v450 = vadd.f32 %v304, %v449
        %v451 = vpop.f32.mrf.mxu0
        %v452 = vadd.f32 %v304, %v451
        %453 = vdwg.mxu0
        %454 = vmatpush.bf16.msra.mxu0 0
        %455 = vmatpush.bf16.msra.mxu0 0
        %456 = vmatpush.bf16.msra.mxu0 0
        %457 = vmatpush.bf16.msra.mxu0 0
        %458 = vmatpush.bf16.msra.mxu0 0
        %459 = vmatpush.bf16.msra.mxu0 0
        %460 = vmatpush.bf16.msra.mxu0 0
        %461 = vmatpush.bf16.msra.mxu0 %v325
        %462 = vmatmul.bf16.gmra.mxu0 %v333
        %v463 = vpop.f32.mrf.mxu0
        %v464 = vadd.f32 %v305, %v463
        %v465 = vpop.f32.mrf.mxu0
        %v466 = vadd.f32 %v305, %v465
        %467 = vmatmul.bf16.gmra.mxu0 %v336
        %v468 = vpop.f32.mrf.mxu0
        %v469 = vadd.f32 %v305, %v468
        %v470 = vpop.f32.mrf.mxu0
        %v471 = vadd.f32 %v305, %v470
        %472 = vmatmul.bf16.gmra.mxu0 %v339
        %v473 = vpop.f32.mrf.mxu0
        %v474 = vadd.f32 %v305, %v473
        %v475 = vpop.f32.mrf.mxu0
        %v476 = vadd.f32 %v305, %v475
        %477 = vmatmul.bf16.gmra.mxu0 %v342
        %v478 = vpop.f32.mrf.mxu0
        %v479 = vadd.f32 %v305, %v478
        %v480 = vpop.f32.mrf.mxu0
        %v481 = vadd.f32 %v305, %v480
        %482 = vmatmul.bf16.gmra.mxu0 %v345
        %v483 = vpop.f32.mrf.mxu0
        %v484 = vadd.f32 %v305, %v483
        %v485 = vpop.f32.mrf.mxu0
        %v486 = vadd.f32 %v305, %v485
        %487 = vmatmul.bf16.gmra.mxu0 %v348
        %v488 = vpop.f32.mrf.mxu0
        %v489 = vadd.f32 %v305, %v488
        %v490 = vpop.f32.mrf.mxu0
        %v491 = vadd.f32 %v305, %v490
        %492 = vmatmul.bf16.gmra.mxu0 %v351
        %v493 = vpop.f32.mrf.mxu0
        %v494 = vadd.f32 %v305, %v493
        %v495 = vpop.f32.mrf.mxu0
        %v496 = vadd.f32 %v305, %v495
        %497 = vmatmul.bf16.gmra.mxu0 %v354
        %v498 = vpop.f32.mrf.mxu0
        %v499 = vadd.f32 %v305, %v498
        %v500 = vpop.f32.mrf.mxu0
        %v501 = vadd.f32 %v305, %v500
        %502 = vdwg.mxu0
        %503 = vmatpush.bf16.msra.mxu0 0
        %504 = vmatpush.bf16.msra.mxu0 0
        %505 = vmatpush.bf16.msra.mxu0 0
        %506 = vmatpush.bf16.msra.mxu0 0
        %507 = vmatpush.bf16.msra.mxu0 0
        %508 = vmatpush.bf16.msra.mxu0 0
        %509 = vmatpush.bf16.msra.mxu0 0
        %510 = vmatpush.bf16.msra.mxu0 %v326
        %511 = vmatmul.bf16.gmra.mxu0 %v333
        %v512 = vpop.f32.mrf.mxu0
        %v513 = vadd.f32 %v306, %v512
        %v514 = vpop.f32.mrf.mxu0
        %v515 = vadd.f32 %v306, %v514
        %516 = vmatmul.bf16.gmra.mxu0 %v336
        %v517 = vpop.f32.mrf.mxu0
        %v518 = vadd.f32 %v306, %v517
        %v519 = vpop.f32.mrf.mxu0
        %v520 = vadd.f32 %v306, %v519
        %521 = vmatmul.bf16.gmra.mxu0 %v339
        %v522 = vpop.f32.mrf.mxu0
        %v523 = vadd.f32 %v306, %v522
        %v524 = vpop.f32.mrf.mxu0
        %v525 = vadd.f32 %v306, %v524
        %526 = vmatmul.bf16.gmra.mxu0 %v342
        %v527 = vpop.f32.mrf.mxu0
        %v528 = vadd.f32 %v306, %v527
        %v529 = vpop.f32.mrf.mxu0
        %v530 = vadd.f32 %v306, %v529
        %531 = vmatmul.bf16.gmra.mxu0 %v345
        %v532 = vpop.f32.mrf.mxu0
        %v533 = vadd.f32 %v306, %v532
        %v534 = vpop.f32.mrf.mxu0
        %v535 = vadd.f32 %v306, %v534
        %536 = vmatmul.bf16.gmra.mxu0 %v348
        %v537 = vpop.f32.mrf.mxu0
        %v538 = vadd.f32 %v306, %v537
        %v539 = vpop.f32.mrf.mxu0
        %v540 = vadd.f32 %v306, %v539
        %541 = vmatmul.bf16.gmra.mxu0 %v351
        %v542 = vpop.f32.mrf.mxu0
        %v543 = vadd.f32 %v306, %v542
        %v544 = vpop.f32.mrf.mxu0
        %v545 = vadd.f32 %v306, %v544
        %546 = vmatmul.bf16.gmra.mxu0 %v354
        %v547 = vpop.f32.mrf.mxu0
        %v548 = vadd.f32 %v306, %v547
        %v549 = vpop.f32.mrf.mxu0
        %v550 = vadd.f32 %v306, %v549
        %551 = vdwg.mxu0
        %s552 = scalar_lea.vmem %s2, 1
        %v553 = vld [vmem:[%s552] ss:$4 sm:$0xf]
        %s554 = scalar_lea.vmem %s2, 2
        %v555 = vld [vmem:[%s554] ss:$4 sm:$0xf]
        %v556 = vadd.f32 %v366, %v415
        %v557 = vadd.f32 %v556, %v464
        %v558 = vsel %vm331, %v513, 0.0
        %v559 = vadd.f32 %v557, %v558
        %560 = vadd.xlane.f32.xlu0 %v559
        %v561 = vpop.xlane.xlu0 %560
        %v562 = vadd.f32 %v368, %v417
        %v563 = vadd.f32 %v562, %v466
        %v564 = vsel %vm331, %v515, 0.0
        %v565 = vadd.f32 %v563, %v564
        %566 = vadd.xlane.f32.xlu0 %v565
        %v567 = vpop.xlane.xlu0 %566
        %v568 = vadd.f32 %v371, %v420
        %v569 = vadd.f32 %v568, %v469
        %v570 = vsel %vm331, %v518, 0.0
        %v571 = vadd.f32 %v569, %v570
        %572 = vadd.xlane.f32.xlu0 %v571
        %v573 = vpop.xlane.xlu0 %572
        %v574 = vadd.f32 %v373, %v422
        %v575 = vadd.f32 %v574, %v471
        %v576 = vsel %vm331, %v520, 0.0
        %v577 = vadd.f32 %v575, %v576
        %578 = vadd.xlane.f32.xlu0 %v577
        %v579 = vpop.xlane.xlu0 %578
        %v580 = vadd.f32 %v376, %v425
        %v581 = vadd.f32 %v580, %v474
        %v582 = vsel %vm331, %v523, 0.0
        %v583 = vadd.f32 %v581, %v582
        %584 = vadd.xlane.f32.xlu0 %v583
        %v585 = vpop.xlane.xlu0 %584
        %v586 = vadd.f32 %v378, %v427
        %v587 = vadd.f32 %v586, %v476
        %v588 = vsel %vm331, %v525, 0.0
        %v589 = vadd.f32 %v587, %v588
        %590 = vadd.xlane.f32.xlu0 %v589
        %v591 = vpop.xlane.xlu0 %590
        %v592 = vadd.f32 %v381, %v430
        %v593 = vadd.f32 %v592, %v479
        %v594 = vsel %vm331, %v528, 0.0
        %v595 = vadd.f32 %v593, %v594
        %596 = vadd.xlane.f32.xlu0 %v595
        %v597 = vpop.xlane.xlu0 %596
        %v598 = vadd.f32 %v383, %v432
        %v599 = vadd.f32 %v598, %v481
        %v600 = vsel %vm331, %v530, 0.0
        %v601 = vadd.f32 %v599, %v600
        %602 = vadd.xlane.f32.xlu0 %v601
        %v603 = vpop.xlane.xlu0 %602
        %v604 = vadd.f32 %v386, %v435
        %v605 = vadd.f32 %v604, %v484
        %v606 = vsel %vm331, %v533, 0.0
        %v607 = vadd.f32 %v605, %v606
        %608 = vadd.xlane.f32.xlu0 %v607
        %v609 = vpop.xlane.xlu0 %608
        %v610 = vadd.f32 %v388, %v437
        %v611 = vadd.f32 %v610, %v486
        %v612 = vsel %vm331, %v535, 0.0
        %v613 = vadd.f32 %v611, %v612
        %614 = vadd.xlane.f32.xlu0 %v613
        %v615 = vpop.xlane.xlu0 %614
        %v616 = vadd.f32 %v391, %v440
        %v617 = vadd.f32 %v616, %v489
        %v618 = vsel %vm331, %v538, 0.0
        %v619 = vadd.f32 %v617, %v618
        %620 = vadd.xlane.f32.xlu0 %v619
        %v621 = vpop.xlane.xlu0 %620
        %v622 = vadd.f32 %v393, %v442
        %v623 = vadd.f32 %v622, %v491
        %v624 = vsel %vm331, %v540, 0.0
        %v625 = vadd.f32 %v623, %v624
        %626 = vadd.xlane.f32.xlu0 %v625
        %v627 = vpop.xlane.xlu0 %626
        %v628 = vadd.f32 %v396, %v445
        %v629 = vadd.f32 %v628, %v494
        %v630 = vsel %vm331, %v543, 0.0
        %v631 = vadd.f32 %v629, %v630
        %632 = vadd.xlane.f32.xlu0 %v631
        %v633 = vpop.xlane.xlu0 %632
        %v634 = vadd.f32 %v398, %v447
        %v635 = vadd.f32 %v634, %v496
        %v636 = vsel %vm331, %v545, 0.0
        %v637 = vadd.f32 %v635, %v636
        %638 = vadd.xlane.f32.xlu0 %v637
        %v639 = vpop.xlane.xlu0 %638
        %v640 = vadd.f32 %v401, %v450
        %v641 = vadd.f32 %v640, %v499
        %v642 = vsel %vm331, %v548, 0.0
        %v643 = vadd.f32 %v641, %v642
        %644 = vadd.xlane.f32.xlu0 %v643
        %v645 = vpop.xlane.xlu0 %644
        %v646 = vadd.f32 %v403, %v452
        %v647 = vadd.f32 %v646, %v501
        %v648 = vsel %vm331, %v550, 0.0
        %v649 = vadd.f32 %v647, %v648
        %650 = vadd.xlane.f32.xlu0 %v649
        %v651 = vpop.xlane.xlu0 %650
        %v652 = vrcp.pop 400.0
        %v653 = vmul.f32 400.0, %v652
        %v654 = vsub.f32 1.0, %v653
        %v655 = vmul.f32 %v652, %v654
        %v656 = vadd.f32 %v652, %v655
        %vm657 = vweird.f32 %v652
        %v658 = vsel %vm657, %v652, %v656
        %v659 = vmul.f32 %v561, %v658
        %v660 = vmul.f32 %v567, %v658
        %v661 = vmul.f32 %v573, %v658
        %v662 = vmul.f32 %v579, %v658
        %v663 = vmul.f32 %v585, %v658
        %v664 = vmul.f32 %v591, %v658
        %v665 = vmul.f32 %v597, %v658
        %v666 = vmul.f32 %v603, %v658
        %v667 = vmul.f32 %v609, %v658
        %v668 = vmul.f32 %v615, %v658
        %v669 = vmul.f32 %v621, %v658
        %v670 = vmul.f32 %v627, %v658
        %v671 = vmul.f32 %v633, %v658
        %v672 = vmul.f32 %v639, %v658
        %v673 = vmul.f32 %v645, %v658
        %v674 = vmul.f32 %v651, %v658
        %v675 = vsub.f32 %v366, %v659
        %v676 = vsub.f32 %v415, %v659
        %v677 = vsub.f32 %v464, %v659
        %v678 = vsub.f32 %v513, %v659
        %v679 = vsub.f32 %v368, %v660
        %v680 = vsub.f32 %v417, %v660
        %v681 = vsub.f32 %v466, %v660
        %v682 = vsub.f32 %v515, %v660
        %v683 = vsub.f32 %v371, %v661
        %v684 = vsub.f32 %v420, %v661
        %v685 = vsub.f32 %v469, %v661
        %v686 = vsub.f32 %v518, %v661
        %v687 = vsub.f32 %v373, %v662
        %v688 = vsub.f32 %v422, %v662
        %v689 = vsub.f32 %v471, %v662
        %v690 = vsub.f32 %v520, %v662
        %v691 = vsub.f32 %v376, %v663
        %v692 = vsub.f32 %v425, %v663
        %v693 = vsub.f32 %v474, %v663
        %v694 = vsub.f32 %v523, %v663
        %v695 = vsub.f32 %v378, %v664
        %v696 = vsub.f32 %v427, %v664
        %v697 = vsub.f32 %v476, %v664
        %v698 = vsub.f32 %v525, %v664
        %v699 = vsub.f32 %v381, %v665
        %v700 = vsub.f32 %v430, %v665
        %v701 = vsub.f32 %v479, %v665
        %v702 = vsub.f32 %v528, %v665
        %v703 = vsub.f32 %v383, %v666
        %v704 = vsub.f32 %v432, %v666
        %v705 = vsub.f32 %v481, %v666
        %v706 = vsub.f32 %v530, %v666
        %v707 = vsub.f32 %v386, %v667
        %v708 = vsub.f32 %v435, %v667
        %v709 = vsub.f32 %v484, %v667
        %v710 = vsub.f32 %v533, %v667
        %v711 = vsub.f32 %v388, %v668
        %v712 = vsub.f32 %v437, %v668
        %v713 = vsub.f32 %v486, %v668
        %v714 = vsub.f32 %v535, %v668
        %v715 = vsub.f32 %v391, %v669
        %v716 = vsub.f32 %v440, %v669
        %v717 = vsub.f32 %v489, %v669
        %v718 = vsub.f32 %v538, %v669
        %v719 = vsub.f32 %v393, %v670
        %v720 = vsub.f32 %v442, %v670
        %v721 = vsub.f32 %v491, %v670
        %v722 = vsub.f32 %v540, %v670
        %v723 = vsub.f32 %v396, %v671
        %v724 = vsub.f32 %v445, %v671
        %v725 = vsub.f32 %v494, %v671
        %v726 = vsub.f32 %v543, %v671
        %v727 = vsub.f32 %v398, %v672
        %v728 = vsub.f32 %v447, %v672
        %v729 = vsub.f32 %v496, %v672
        %v730 = vsub.f32 %v545, %v672
        %v731 = vsub.f32 %v401, %v673
        %v732 = vsub.f32 %v450, %v673
        %v733 = vsub.f32 %v499, %v673
        %v734 = vsub.f32 %v548, %v673
        %v735 = vsub.f32 %v403, %v674
        %v736 = vsub.f32 %v452, %v674
        %v737 = vsub.f32 %v501, %v674
        %v738 = vsub.f32 %v550, %v674
        %v739 = vmul.f32 %v675, %v675
        %v740 = vmul.f32 %v676, %v676
        %v741 = vmul.f32 %v677, %v677
        %v742 = vmul.f32 %v678, %v678
        %v743 = vmul.f32 %v679, %v679
        %v744 = vmul.f32 %v680, %v680
        %v745 = vmul.f32 %v681, %v681
        %v746 = vmul.f32 %v682, %v682
        %v747 = vmul.f32 %v683, %v683
        %v748 = vmul.f32 %v684, %v684
        %v749 = vmul.f32 %v685, %v685
        %v750 = vmul.f32 %v686, %v686
        %v751 = vmul.f32 %v687, %v687
        %v752 = vmul.f32 %v688, %v688
        %v753 = vmul.f32 %v689, %v689
        %v754 = vmul.f32 %v690, %v690
        %v755 = vmul.f32 %v691, %v691
        %v756 = vmul.f32 %v692, %v692
        %v757 = vmul.f32 %v693, %v693
        %v758 = vmul.f32 %v694, %v694
        %v759 = vmul.f32 %v695, %v695
        %v760 = vmul.f32 %v696, %v696
        %v761 = vmul.f32 %v697, %v697
        %v762 = vmul.f32 %v698, %v698
        %v763 = vmul.f32 %v699, %v699
        %v764 = vmul.f32 %v700, %v700
        %v765 = vmul.f32 %v701, %v701
        %v766 = vmul.f32 %v702, %v702
        %v767 = vmul.f32 %v703, %v703
        %v768 = vmul.f32 %v704, %v704
        %v769 = vmul.f32 %v705, %v705
        %v770 = vmul.f32 %v706, %v706
        %v771 = vmul.f32 %v707, %v707
        %v772 = vmul.f32 %v708, %v708
        %v773 = vmul.f32 %v709, %v709
        %v774 = vmul.f32 %v710, %v710
        %v775 = vmul.f32 %v711, %v711
        %v776 = vmul.f32 %v712, %v712
        %v777 = vmul.f32 %v713, %v713
        %v778 = vmul.f32 %v714, %v714
        %v779 = vmul.f32 %v715, %v715
        %v780 = vmul.f32 %v716, %v716
        %v781 = vmul.f32 %v717, %v717
        %v782 = vmul.f32 %v718, %v718
        %v783 = vmul.f32 %v719, %v719
        %v784 = vmul.f32 %v720, %v720
        %v785 = vmul.f32 %v721, %v721
        %v786 = vmul.f32 %v722, %v722
        %v787 = vmul.f32 %v723, %v723
        %v788 = vmul.f32 %v724, %v724
        %v789 = vmul.f32 %v725, %v725
        %v790 = vmul.f32 %v726, %v726
        %v791 = vmul.f32 %v727, %v727
        %v792 = vmul.f32 %v728, %v728
        %v793 = vmul.f32 %v729, %v729
        %v794 = vmul.f32 %v730, %v730
        %v795 = vmul.f32 %v731, %v731
        %v796 = vmul.f32 %v732, %v732
        %v797 = vmul.f32 %v733, %v733
        %v798 = vmul.f32 %v734, %v734
        %v799 = vmul.f32 %v735, %v735
        %v800 = vmul.f32 %v736, %v736
        %v801 = vmul.f32 %v737, %v737
        %v802 = vmul.f32 %v738, %v738
        %v803 = vadd.f32 %v739, %v740
        %v804 = vadd.f32 %v803, %v741
        %v805 = vsel %vm331, %v742, 0.0
        %v806 = vadd.f32 %v804, %v805
        %807 = vadd.xlane.f32.xlu0 %v806
        %v808 = vpop.xlane.xlu0 %807
        %v809 = vadd.f32 %v743, %v744
        %v810 = vadd.f32 %v809, %v745
        %v811 = vsel %vm331, %v746, 0.0
        %v812 = vadd.f32 %v810, %v811
        %813 = vadd.xlane.f32.xlu0 %v812
        %v814 = vpop.xlane.xlu0 %813
        %v815 = vadd.f32 %v747, %v748
        %v816 = vadd.f32 %v815, %v749
        %v817 = vsel %vm331, %v750, 0.0
        %v818 = vadd.f32 %v816, %v817
        %819 = vadd.xlane.f32.xlu0 %v818
        %v820 = vpop.xlane.xlu0 %819
        %v821 = vadd.f32 %v751, %v752
        %v822 = vadd.f32 %v821, %v753
        %v823 = vsel %vm331, %v754, 0.0
        %v824 = vadd.f32 %v822, %v823
        %825 = vadd.xlane.f32.xlu0 %v824
        %v826 = vpop.xlane.xlu0 %825
        %v827 = vadd.f32 %v755, %v756
        %v828 = vadd.f32 %v827, %v757
        %v829 = vsel %vm331, %v758, 0.0
        %v830 = vadd.f32 %v828, %v829
        %831 = vadd.xlane.f32.xlu0 %v830
        %v832 = vpop.xlane.xlu0 %831
        %v833 = vadd.f32 %v759, %v760
        %v834 = vadd.f32 %v833, %v761
        %v835 = vsel %vm331, %v762, 0.0
        %v836 = vadd.f32 %v834, %v835
        %837 = vadd.xlane.f32.xlu0 %v836
        %v838 = vpop.xlane.xlu0 %837
        %v839 = vadd.f32 %v763, %v764
        %v840 = vadd.f32 %v839, %v765
        %v841 = vsel %vm331, %v766, 0.0
        %v842 = vadd.f32 %v840, %v841
        %843 = vadd.xlane.f32.xlu0 %v842
        %v844 = vpop.xlane.xlu0 %843
        %v845 = vadd.f32 %v767, %v768
        %v846 = vadd.f32 %v845, %v769
        %v847 = vsel %vm331, %v770, 0.0
        %v848 = vadd.f32 %v846, %v847
        %849 = vadd.xlane.f32.xlu0 %v848
        %v850 = vpop.xlane.xlu0 %849
        %v851 = vadd.f32 %v771, %v772
        %v852 = vadd.f32 %v851, %v773
        %v853 = vsel %vm331, %v774, 0.0
        %v854 = vadd.f32 %v852, %v853
        %855 = vadd.xlane.f32.xlu0 %v854
        %v856 = vpop.xlane.xlu0 %855
        %v857 = vadd.f32 %v775, %v776
        %v858 = vadd.f32 %v857, %v777
        %v859 = vsel %vm331, %v778, 0.0
        %v860 = vadd.f32 %v858, %v859
        %861 = vadd.xlane.f32.xlu0 %v860
        %v862 = vpop.xlane.xlu0 %861
        %v863 = vadd.f32 %v779, %v780
        %v864 = vadd.f32 %v863, %v781
        %v865 = vsel %vm331, %v782, 0.0
        %v866 = vadd.f32 %v864, %v865
        %867 = vadd.xlane.f32.xlu0 %v866
        %v868 = vpop.xlane.xlu0 %867
        %v869 = vadd.f32 %v783, %v784
        %v870 = vadd.f32 %v869, %v785
        %v871 = vsel %vm331, %v786, 0.0
        %v872 = vadd.f32 %v870, %v871
        %873 = vadd.xlane.f32.xlu0 %v872
        %v874 = vpop.xlane.xlu0 %873
        %v875 = vadd.f32 %v787, %v788
        %v876 = vadd.f32 %v875, %v789
        %v877 = vsel %vm331, %v790, 0.0
        %v878 = vadd.f32 %v876, %v877
        %879 = vadd.xlane.f32.xlu0 %v878
        %v880 = vpop.xlane.xlu0 %879
        %v881 = vadd.f32 %v791, %v792
        %v882 = vadd.f32 %v881, %v793
        %v883 = vsel %vm331, %v794, 0.0
        %v884 = vadd.f32 %v882, %v883
        %885 = vadd.xlane.f32.xlu0 %v884
        %v886 = vpop.xlane.xlu0 %885
        %v887 = vadd.f32 %v795, %v796
        %v888 = vadd.f32 %v887, %v797
        %v889 = vsel %vm331, %v798, 0.0
        %v890 = vadd.f32 %v888, %v889
        %891 = vadd.xlane.f32.xlu0 %v890
        %v892 = vpop.xlane.xlu0 %891
        %v893 = vadd.f32 %v799, %v800
        %v894 = vadd.f32 %v893, %v801
        %v895 = vsel %vm331, %v802, 0.0
        %v896 = vadd.f32 %v894, %v895
        %897 = vadd.xlane.f32.xlu0 %v896
        %v898 = vpop.xlane.xlu0 %897
        %v899 = vmul.f32 %v808, %v658
        %v900 = vmul.f32 %v814, %v658
        %v901 = vmul.f32 %v820, %v658
        %v902 = vmul.f32 %v826, %v658
        %v903 = vmul.f32 %v832, %v658
        %v904 = vmul.f32 %v838, %v658
        %v905 = vmul.f32 %v844, %v658
        %v906 = vmul.f32 %v850, %v658
        %v907 = vmul.f32 %v856, %v658
        %v908 = vmul.f32 %v862, %v658
        %v909 = vmul.f32 %v868, %v658
        %v910 = vmul.f32 %v874, %v658
        %v911 = vmul.f32 %v880, %v658
        %v912 = vmul.f32 %v886, %v658
        %v913 = vmul.f32 %v892, %v658
        %v914 = vmul.f32 %v898, %v658
        %v915 = vadd.f32 %v899, 1e-05
        %v916 = vadd.f32 %v900, 1e-05
        %v917 = vadd.f32 %v901, 1e-05
        %v918 = vadd.f32 %v902, 1e-05
        %v919 = vadd.f32 %v903, 1e-05
        %v920 = vadd.f32 %v904, 1e-05
        %v921 = vadd.f32 %v905, 1e-05
        %v922 = vadd.f32 %v906, 1e-05
        %v923 = vadd.f32 %v907, 1e-05
        %v924 = vadd.f32 %v908, 1e-05
        %v925 = vadd.f32 %v909, 1e-05
        %v926 = vadd.f32 %v910, 1e-05
        %v927 = vadd.f32 %v911, 1e-05
        %v928 = vadd.f32 %v912, 1e-05
        %v929 = vadd.f32 %v913, 1e-05
        %v930 = vadd.f32 %v914, 1e-05
        %v931 = vrsqrt.pop %v915
        %v932 = vmul.f32 %v931, %v915
        %v933 = vmul.f32 %v932, %v931
        %v934 = vmul.f32 0.5, %v933
        %v935 = vsub.f32 1.5, %v934
        %v936 = vmul.f32 %v931, %v935
        %vm937 = vweird.f32 %v915
        %vm938 = vweird.f32 %v931
        %vm939 = vmor %vm937, %vm938
        %v940 = vsel %vm939, %v931, %v936
        %v941 = vrsqrt.pop %v916
        %v942 = vmul.f32 %v941, %v916
        %v943 = vmul.f32 %v942, %v941
        %v944 = vmul.f32 0.5, %v943
        %v945 = vsub.f32 1.5, %v944
        %v946 = vmul.f32 %v941, %v945
        %vm947 = vweird.f32 %v916
        %vm948 = vweird.f32 %v941
        %vm949 = vmor %vm947, %vm948
        %v950 = vsel %vm949, %v941, %v946
        %v951 = vrsqrt.pop %v917
        %v952 = vmul.f32 %v951, %v917
        %v953 = vmul.f32 %v952, %v951
        %v954 = vmul.f32 0.5, %v953
        %v955 = vsub.f32 1.5, %v954
        %v956 = vmul.f32 %v951, %v955
        %vm957 = vweird.f32 %v917
        %vm958 = vweird.f32 %v951
        %vm959 = vmor %vm957, %vm958
        %v960 = vsel %vm959, %v951, %v956
        %v961 = vrsqrt.pop %v918
        %v962 = vmul.f32 %v961, %v918
        %v963 = vmul.f32 %v962, %v961
        %v964 = vmul.f32 0.5, %v963
        %v965 = vsub.f32 1.5, %v964
        %v966 = vmul.f32 %v961, %v965
        %vm967 = vweird.f32 %v918
        %vm968 = vweird.f32 %v961
        %vm969 = vmor %vm967, %vm968
        %v970 = vsel %vm969, %v961, %v966
        %v971 = vrsqrt.pop %v919
        %v972 = vmul.f32 %v971, %v919
        %v973 = vmul.f32 %v972, %v971
        %v974 = vmul.f32 0.5, %v973
        %v975 = vsub.f32 1.5, %v974
        %v976 = vmul.f32 %v971, %v975
        %vm977 = vweird.f32 %v919
        %vm978 = vweird.f32 %v971
        %vm979 = vmor %vm977, %vm978
        %v980 = vsel %vm979, %v971, %v976
        %v981 = vrsqrt.pop %v920
        %v982 = vmul.f32 %v981, %v920
        %v983 = vmul.f32 %v982, %v981
        %v984 = vmul.f32 0.5, %v983
        %v985 = vsub.f32 1.5, %v984
        %v986 = vmul.f32 %v981, %v985
        %vm987 = vweird.f32 %v920
        %vm988 = vweird.f32 %v981
        %vm989 = vmor %vm987, %vm988
        %v990 = vsel %vm989, %v981, %v986
        %v991 = vrsqrt.pop %v921
        %v992 = vmul.f32 %v991, %v921
        %v993 = vmul.f32 %v992, %v991
        %v994 = vmul.f32 0.5, %v993
        %v995 = vsub.f32 1.5, %v994
        %v996 = vmul.f32 %v991, %v995
        %vm997 = vweird.f32 %v921
        %vm998 = vweird.f32 %v991
        %vm999 = vmor %vm997, %vm998
        %v1000 = vsel %vm999, %v991, %v996
        %v1001 = vrsqrt.pop %v922
        %v1002 = vmul.f32 %v1001, %v922
        %v1003 = vmul.f32 %v1002, %v1001
        %v1004 = vmul.f32 0.5, %v1003
        %v1005 = vsub.f32 1.5, %v1004
        %v1006 = vmul.f32 %v1001, %v1005
        %vm1007 = vweird.f32 %v922
        %vm1008 = vweird.f32 %v1001
        %vm1009 = vmor %vm1007, %vm1008
        %v1010 = vsel %vm1009, %v1001, %v1006
        %v1011 = vrsqrt.pop %v923
        %v1012 = vmul.f32 %v1011, %v923
        %v1013 = vmul.f32 %v1012, %v1011
        %v1014 = vmul.f32 0.5, %v1013
        %v1015 = vsub.f32 1.5, %v1014
        %v1016 = vmul.f32 %v1011, %v1015
        %vm1017 = vweird.f32 %v923
        %vm1018 = vweird.f32 %v1011
        %vm1019 = vmor %vm1017, %vm1018
        %v1020 = vsel %vm1019, %v1011, %v1016
        %v1021 = vrsqrt.pop %v924
        %v1022 = vmul.f32 %v1021, %v924
        %v1023 = vmul.f32 %v1022, %v1021
        %v1024 = vmul.f32 0.5, %v1023
        %v1025 = vsub.f32 1.5, %v1024
        %v1026 = vmul.f32 %v1021, %v1025
        %vm1027 = vweird.f32 %v924
        %vm1028 = vweird.f32 %v1021
        %vm1029 = vmor %vm1027, %vm1028
        %v1030 = vsel %vm1029, %v1021, %v1026
        %v1031 = vrsqrt.pop %v925
        %v1032 = vmul.f32 %v1031, %v925
        %v1033 = vmul.f32 %v1032, %v1031
        %v1034 = vmul.f32 0.5, %v1033
        %v1035 = vsub.f32 1.5, %v1034
        %v1036 = vmul.f32 %v1031, %v1035
        %vm1037 = vweird.f32 %v925
        %vm1038 = vweird.f32 %v1031
        %vm1039 = vmor %vm1037, %vm1038
        %v1040 = vsel %vm1039, %v1031, %v1036
        %v1041 = vrsqrt.pop %v926
        %v1042 = vmul.f32 %v1041, %v926
        %v1043 = vmul.f32 %v1042, %v1041
        %v1044 = vmul.f32 0.5, %v1043
        %v1045 = vsub.f32 1.5, %v1044
        %v1046 = vmul.f32 %v1041, %v1045
        %vm1047 = vweird.f32 %v926
        %vm1048 = vweird.f32 %v1041
        %vm1049 = vmor %vm1047, %vm1048
        %v1050 = vsel %vm1049, %v1041, %v1046
        %v1051 = vrsqrt.pop %v927
        %v1052 = vmul.f32 %v1051, %v927
        %v1053 = vmul.f32 %v1052, %v1051
        %v1054 = vmul.f32 0.5, %v1053
        %v1055 = vsub.f32 1.5, %v1054
        %v1056 = vmul.f32 %v1051, %v1055
        %vm1057 = vweird.f32 %v927
        %vm1058 = vweird.f32 %v1051
        %vm1059 = vmor %vm1057, %vm1058
        %v1060 = vsel %vm1059, %v1051, %v1056
        %v1061 = vrsqrt.pop %v928
        %v1062 = vmul.f32 %v1061, %v928
        %v1063 = vmul.f32 %v1062, %v1061
        %v1064 = vmul.f32 0.5, %v1063
        %v1065 = vsub.f32 1.5, %v1064
        %v1066 = vmul.f32 %v1061, %v1065
        %vm1067 = vweird.f32 %v928
        %vm1068 = vweird.f32 %v1061
        %vm1069 = vmor %vm1067, %vm1068
        %v1070 = vsel %vm1069, %v1061, %v1066
        %v1071 = vrsqrt.pop %v929
        %v1072 = vmul.f32 %v1071, %v929
        %v1073 = vmul.f32 %v1072, %v1071
        %v1074 = vmul.f32 0.5, %v1073
        %v1075 = vsub.f32 1.5, %v1074
        %v1076 = vmul.f32 %v1071, %v1075
        %vm1077 = vweird.f32 %v929
        %vm1078 = vweird.f32 %v1071
        %vm1079 = vmor %vm1077, %vm1078
        %v1080 = vsel %vm1079, %v1071, %v1076
        %v1081 = vrsqrt.pop %v930
        %v1082 = vmul.f32 %v1081, %v930
        %v1083 = vmul.f32 %v1082, %v1081
        %v1084 = vmul.f32 0.5, %v1083
        %v1085 = vsub.f32 1.5, %v1084
        %v1086 = vmul.f32 %v1081, %v1085
        %vm1087 = vweird.f32 %v930
        %vm1088 = vweird.f32 %v1081
        %vm1089 = vmor %vm1087, %vm1088
        %v1090 = vsel %vm1089, %v1081, %v1086
        %v1091 = vmul.f32 %v675, %v940
        %v1092 = vmul.f32 %v676, %v940
        %v1093 = vmul.f32 %v677, %v940
        %v1094 = vmul.f32 %v678, %v940
        %v1095 = vmul.f32 %v679, %v950
        %v1096 = vmul.f32 %v680, %v950
        %v1097 = vmul.f32 %v681, %v950
        %v1098 = vmul.f32 %v682, %v950
        %v1099 = vmul.f32 %v683, %v960
        %v1100 = vmul.f32 %v684, %v960
        %v1101 = vmul.f32 %v685, %v960
        %v1102 = vmul.f32 %v686, %v960
        %v1103 = vmul.f32 %v687, %v970
        %v1104 = vmul.f32 %v688, %v970
        %v1105 = vmul.f32 %v689, %v970
        %v1106 = vmul.f32 %v690, %v970
        %v1107 = vmul.f32 %v691, %v980
        %v1108 = vmul.f32 %v692, %v980
        %v1109 = vmul.f32 %v693, %v980
        %v1110 = vmul.f32 %v694, %v980
        %v1111 = vmul.f32 %v695, %v990
        %v1112 = vmul.f32 %v696, %v990
        %v1113 = vmul.f32 %v697, %v990
        %v1114 = vmul.f32 %v698, %v990
        %v1115 = vmul.f32 %v699, %v1000
        %v1116 = vmul.f32 %v700, %v1000
        %v1117 = vmul.f32 %v701, %v1000
        %v1118 = vmul.f32 %v702, %v1000
        %v1119 = vmul.f32 %v703, %v1010
        %v1120 = vmul.f32 %v704, %v1010
        %v1121 = vmul.f32 %v705, %v1010
        %v1122 = vmul.f32 %v706, %v1010
        %v1123 = vmul.f32 %v707, %v1020
        %v1124 = vmul.f32 %v708, %v1020
        %v1125 = vmul.f32 %v709, %v1020
        %v1126 = vmul.f32 %v710, %v1020
        %v1127 = vmul.f32 %v711, %v1030
        %v1128 = vmul.f32 %v712, %v1030
        %v1129 = vmul.f32 %v713, %v1030
        %v1130 = vmul.f32 %v714, %v1030
        %v1131 = vmul.f32 %v715, %v1040
        %v1132 = vmul.f32 %v716, %v1040
        %v1133 = vmul.f32 %v717, %v1040
        %v1134 = vmul.f32 %v718, %v1040
        %v1135 = vmul.f32 %v719, %v1050
        %v1136 = vmul.f32 %v720, %v1050
        %v1137 = vmul.f32 %v721, %v1050
        %v1138 = vmul.f32 %v722, %v1050
        %v1139 = vmul.f32 %v723, %v1060
        %v1140 = vmul.f32 %v724, %v1060
        %v1141 = vmul.f32 %v725, %v1060
        %v1142 = vmul.f32 %v726, %v1060
        %v1143 = vmul.f32 %v727, %v1070
        %v1144 = vmul.f32 %v728, %v1070
        %v1145 = vmul.f32 %v729, %v1070
        %v1146 = vmul.f32 %v730, %v1070
        %v1147 = vmul.f32 %v731, %v1080
        %v1148 = vmul.f32 %v732, %v1080
        %v1149 = vmul.f32 %v733, %v1080
        %v1150 = vmul.f32 %v734, %v1080
        %v1151 = vmul.f32 %v735, %v1090
        %v1152 = vmul.f32 %v736, %v1090
        %v1153 = vmul.f32 %v737, %v1090
        %v1154 = vmul.f32 %v738, %v1090
        %v1156 = vperm.slane %v553, 0
        %v1157 = vperm.slane %v553, 1
        %v1158 = vperm.slane %v553, 2
        %v1159 = vperm.slane %v553, 3
        %v1164 = vmul.f32 %v1091, %v1156
        %v1165 = vmul.f32 %v1092, %v1157
        %v1166 = vmul.f32 %v1093, %v1158
        %v1167 = vmul.f32 %v1094, %v1159
        %v1168 = vmul.f32 %v1095, %v1156
        %v1169 = vmul.f32 %v1096, %v1157
        %v1170 = vmul.f32 %v1097, %v1158
        %v1171 = vmul.f32 %v1098, %v1159
        %v1172 = vmul.f32 %v1099, %v1156
        %v1173 = vmul.f32 %v1100, %v1157
        %v1174 = vmul.f32 %v1101, %v1158
        %v1175 = vmul.f32 %v1102, %v1159
        %v1176 = vmul.f32 %v1103, %v1156
        %v1177 = vmul.f32 %v1104, %v1157
        %v1178 = vmul.f32 %v1105, %v1158
        %v1179 = vmul.f32 %v1106, %v1159
        %v1180 = vmul.f32 %v1107, %v1156
        %v1181 = vmul.f32 %v1108, %v1157
        %v1182 = vmul.f32 %v1109, %v1158
        %v1183 = vmul.f32 %v1110, %v1159
        %v1184 = vmul.f32 %v1111, %v1156
        %v1185 = vmul.f32 %v1112, %v1157
        %v1186 = vmul.f32 %v1113, %v1158
        %v1187 = vmul.f32 %v1114, %v1159
        %v1188 = vmul.f32 %v1115, %v1156
        %v1189 = vmul.f32 %v1116, %v1157
        %v1190 = vmul.f32 %v1117, %v1158
        %v1191 = vmul.f32 %v1118, %v1159
        %v1192 = vmul.f32 %v1119, %v1156
        %v1193 = vmul.f32 %v1120, %v1157
        %v1194 = vmul.f32 %v1121, %v1158
        %v1195 = vmul.f32 %v1122, %v1159
        %v1196 = vmul.f32 %v1123, %v1156
        %v1197 = vmul.f32 %v1124, %v1157
        %v1198 = vmul.f32 %v1125, %v1158
        %v1199 = vmul.f32 %v1126, %v1159
        %v1200 = vmul.f32 %v1127, %v1156
        %v1201 = vmul.f32 %v1128, %v1157
        %v1202 = vmul.f32 %v1129, %v1158
        %v1203 = vmul.f32 %v1130, %v1159
        %v1204 = vmul.f32 %v1131, %v1156
        %v1205 = vmul.f32 %v1132, %v1157
        %v1206 = vmul.f32 %v1133, %v1158
        %v1207 = vmul.f32 %v1134, %v1159
        %v1208 = vmul.f32 %v1135, %v1156
        %v1209 = vmul.f32 %v1136, %v1157
        %v1210 = vmul.f32 %v1137, %v1158
        %v1211 = vmul.f32 %v1138, %v1159
        %v1212 = vmul.f32 %v1139, %v1156
        %v1213 = vmul.f32 %v1140, %v1157
        %v1214 = vmul.f32 %v1141, %v1158
        %v1215 = vmul.f32 %v1142, %v1159
        %v1216 = vmul.f32 %v1143, %v1156
        %v1217 = vmul.f32 %v1144, %v1157
        %v1218 = vmul.f32 %v1145, %v1158
        %v1219 = vmul.f32 %v1146, %v1159
        %v1220 = vmul.f32 %v1147, %v1156
        %v1221 = vmul.f32 %v1148, %v1157
        %v1222 = vmul.f32 %v1149, %v1158
        %v1223 = vmul.f32 %v1150, %v1159
        %v1224 = vmul.f32 %v1151, %v1156
        %v1225 = vmul.f32 %v1152, %v1157
        %v1226 = vmul.f32 %v1153, %v1158
        %v1227 = vmul.f32 %v1154, %v1159
        %v1229 = vperm.slane %v555, 0
        %v1230 = vperm.slane %v555, 1
        %v1231 = vperm.slane %v555, 2
        %v1232 = vperm.slane %v555, 3
        %v1237 = vadd.f32 %v1164, %v1229
        %v1238 = vadd.f32 %v1165, %v1230
        %v1239 = vadd.f32 %v1166, %v1231
        %v1240 = vadd.f32 %v1167, %v1232
        %v1241 = vadd.f32 %v1168, %v1229
        %v1242 = vadd.f32 %v1169, %v1230
        %v1243 = vadd.f32 %v1170, %v1231
        %v1244 = vadd.f32 %v1171, %v1232
        %v1245 = vadd.f32 %v1172, %v1229
        %v1246 = vadd.f32 %v1173, %v1230
        %v1247 = vadd.f32 %v1174, %v1231
        %v1248 = vadd.f32 %v1175, %v1232
        %v1249 = vadd.f32 %v1176, %v1229
        %v1250 = vadd.f32 %v1177, %v1230
        %v1251 = vadd.f32 %v1178, %v1231
        %v1252 = vadd.f32 %v1179, %v1232
        %v1253 = vadd.f32 %v1180, %v1229
        %v1254 = vadd.f32 %v1181, %v1230
        %v1255 = vadd.f32 %v1182, %v1231
        %v1256 = vadd.f32 %v1183, %v1232
        %v1257 = vadd.f32 %v1184, %v1229
        %v1258 = vadd.f32 %v1185, %v1230
        %v1259 = vadd.f32 %v1186, %v1231
        %v1260 = vadd.f32 %v1187, %v1232
        %v1261 = vadd.f32 %v1188, %v1229
        %v1262 = vadd.f32 %v1189, %v1230
        %v1263 = vadd.f32 %v1190, %v1231
        %v1264 = vadd.f32 %v1191, %v1232
        %v1265 = vadd.f32 %v1192, %v1229
        %v1266 = vadd.f32 %v1193, %v1230
        %v1267 = vadd.f32 %v1194, %v1231
        %v1268 = vadd.f32 %v1195, %v1232
        %v1269 = vadd.f32 %v1196, %v1229
        %v1270 = vadd.f32 %v1197, %v1230
        %v1271 = vadd.f32 %v1198, %v1231
        %v1272 = vadd.f32 %v1199, %v1232
        %v1273 = vadd.f32 %v1200, %v1229
        %v1274 = vadd.f32 %v1201, %v1230
        %v1275 = vadd.f32 %v1202, %v1231
        %v1276 = vadd.f32 %v1203, %v1232
        %v1277 = vadd.f32 %v1204, %v1229
        %v1278 = vadd.f32 %v1205, %v1230
        %v1279 = vadd.f32 %v1206, %v1231
        %v1280 = vadd.f32 %v1207, %v1232
        %v1281 = vadd.f32 %v1208, %v1229
        %v1282 = vadd.f32 %v1209, %v1230
        %v1283 = vadd.f32 %v1210, %v1231
        %v1284 = vadd.f32 %v1211, %v1232
        %v1285 = vadd.f32 %v1212, %v1229
        %v1286 = vadd.f32 %v1213, %v1230
        %v1287 = vadd.f32 %v1214, %v1231
        %v1288 = vadd.f32 %v1215, %v1232
        %v1289 = vadd.f32 %v1216, %v1229
        %v1290 = vadd.f32 %v1217, %v1230
        %v1291 = vadd.f32 %v1218, %v1231
        %v1292 = vadd.f32 %v1219, %v1232
        %v1293 = vadd.f32 %v1220, %v1229
        %v1294 = vadd.f32 %v1221, %v1230
        %v1295 = vadd.f32 %v1222, %v1231
        %v1296 = vadd.f32 %v1223, %v1232
        %v1297 = vadd.f32 %v1224, %v1229
        %v1298 = vadd.f32 %v1225, %v1230
        %v1299 = vadd.f32 %v1226, %v1231
        %v1300 = vadd.f32 %v1227, %v1232
        %v1301 = vmax.f32 %v1237, 0.0
        %v1302 = vmax.f32 %v1238, 0.0
        %v1303 = vmax.f32 %v1239, 0.0
        %v1304 = vmax.f32 %v1240, 0.0
        %v1305 = vmax.f32 %v1241, 0.0
        %v1306 = vmax.f32 %v1242, 0.0
        %v1307 = vmax.f32 %v1243, 0.0
        %v1308 = vmax.f32 %v1244, 0.0
        %v1309 = vmax.f32 %v1245, 0.0
        %v1310 = vmax.f32 %v1246, 0.0
        %v1311 = vmax.f32 %v1247, 0.0
        %v1312 = vmax.f32 %v1248, 0.0
        %v1313 = vmax.f32 %v1249, 0.0
        %v1314 = vmax.f32 %v1250, 0.0
        %v1315 = vmax.f32 %v1251, 0.0
        %v1316 = vmax.f32 %v1252, 0.0
        %v1317 = vmax.f32 %v1253, 0.0
        %v1318 = vmax.f32 %v1254, 0.0
        %v1319 = vmax.f32 %v1255, 0.0
        %v1320 = vmax.f32 %v1256, 0.0
        %v1321 = vmax.f32 %v1257, 0.0
        %v1322 = vmax.f32 %v1258, 0.0
        %v1323 = vmax.f32 %v1259, 0.0
        %v1324 = vmax.f32 %v1260, 0.0
        %v1325 = vmax.f32 %v1261, 0.0
        %v1326 = vmax.f32 %v1262, 0.0
        %v1327 = vmax.f32 %v1263, 0.0
        %v1328 = vmax.f32 %v1264, 0.0
        %v1329 = vmax.f32 %v1265, 0.0
        %v1330 = vmax.f32 %v1266, 0.0
        %v1331 = vmax.f32 %v1267, 0.0
        %v1332 = vmax.f32 %v1268, 0.0
        %v1333 = vmax.f32 %v1269, 0.0
        %v1334 = vmax.f32 %v1270, 0.0
        %v1335 = vmax.f32 %v1271, 0.0
        %v1336 = vmax.f32 %v1272, 0.0
        %v1337 = vmax.f32 %v1273, 0.0
        %v1338 = vmax.f32 %v1274, 0.0
        %v1339 = vmax.f32 %v1275, 0.0
        %v1340 = vmax.f32 %v1276, 0.0
        %v1341 = vmax.f32 %v1277, 0.0
        %v1342 = vmax.f32 %v1278, 0.0
        %v1343 = vmax.f32 %v1279, 0.0
        %v1344 = vmax.f32 %v1280, 0.0
        %v1345 = vmax.f32 %v1281, 0.0
        %v1346 = vmax.f32 %v1282, 0.0
        %v1347 = vmax.f32 %v1283, 0.0
        %v1348 = vmax.f32 %v1284, 0.0
        %v1349 = vmax.f32 %v1285, 0.0
        %v1350 = vmax.f32 %v1286, 0.0
        %v1351 = vmax.f32 %v1287, 0.0
        %v1352 = vmax.f32 %v1288, 0.0
        %v1353 = vmax.f32 %v1289, 0.0
        %v1354 = vmax.f32 %v1290, 0.0
        %v1355 = vmax.f32 %v1291, 0.0
        %v1356 = vmax.f32 %v1292, 0.0
        %v1357 = vmax.f32 %v1293, 0.0
        %v1358 = vmax.f32 %v1294, 0.0
        %v1359 = vmax.f32 %v1295, 0.0
        %v1360 = vmax.f32 %v1296, 0.0
        %v1361 = vmax.f32 %v1297, 0.0
        %v1362 = vmax.f32 %v1298, 0.0
        %v1363 = vmax.f32 %v1299, 0.0
        %v1364 = vmax.f32 %v1300, 0.0
        %v1365 = vpack.c.bf16 %v1305, %v1301
        %v1366 = vpack.c.bf16 %v1306, %v1302
        %v1367 = vpack.c.bf16 %v1307, %v1303
        %v1368 = vpack.c.bf16 %v1308, %v1304
        %v1369 = vpack.c.bf16 %v1313, %v1309
        %v1370 = vpack.c.bf16 %v1314, %v1310
        %v1371 = vpack.c.bf16 %v1315, %v1311
        %v1372 = vpack.c.bf16 %v1316, %v1312
        %v1373 = vpack.c.bf16 %v1321, %v1317
        %v1374 = vpack.c.bf16 %v1322, %v1318
        %v1375 = vpack.c.bf16 %v1323, %v1319
        %v1376 = vpack.c.bf16 %v1324, %v1320
        %v1377 = vpack.c.bf16 %v1329, %v1325
        %v1378 = vpack.c.bf16 %v1330, %v1326
        %v1379 = vpack.c.bf16 %v1331, %v1327
        %v1380 = vpack.c.bf16 %v1332, %v1328
        %v1381 = vpack.c.bf16 %v1337, %v1333
        %v1382 = vpack.c.bf16 %v1338, %v1334
        %v1383 = vpack.c.bf16 %v1339, %v1335
        %v1384 = vpack.c.bf16 %v1340, %v1336
        %v1385 = vpack.c.bf16 %v1345, %v1341
        %v1386 = vpack.c.bf16 %v1346, %v1342
        %v1387 = vpack.c.bf16 %v1347, %v1343
        %v1388 = vpack.c.bf16 %v1348, %v1344
        %v1389 = vpack.c.bf16 %v1353, %v1349
        %v1390 = vpack.c.bf16 %v1354, %v1350
        %v1391 = vpack.c.bf16 %v1355, %v1351
        %v1392 = vpack.c.bf16 %v1356, %v1352
        %v1393 = vpack.c.bf16 %v1361, %v1357
        %v1394 = vpack.c.bf16 %v1362, %v1358
        %v1395 = vpack.c.bf16 %v1363, %v1359
        %v1396 = vpack.c.bf16 %v1364, %v1360
        %v1397 = vld [vmem:[#allocation2] sm:$0xff]
        %v1398 = vld [vmem:[#allocation2 + $0x8] sm:$0xf]
        %v1399 = vld [vmem:[#allocation2 + $0xc] sm:$0xff]
        %v1400 = vld [vmem:[#allocation2 + $0x14] sm:$0xf]
        %v1401 = vld [vmem:[#allocation2 + $0x18] sm:$0xff]
        %v1402 = vld [vmem:[#allocation2 + $0x20] sm:$0xf]
        %v1403 = vld [vmem:[#allocation2 + $0x24] sm:$0xff]
        %v1404 = vld [vmem:[#allocation2 + $0x2c] sm:$0xf]
        %v1405 = vld [vmem:[#allocation2 + $0x30] sm:$0xff]
        %v1406 = vld [vmem:[#allocation2 + $0x38] sm:$0xf]
        %v1407 = vld [vmem:[#allocation2 + $0x3c] sm:$0xff]
        %v1408 = vld [vmem:[#allocation2 + $0x44] sm:$0xf]
        %v1409 = vld [vmem:[#allocation2 + $0x48] sm:$0xff]
        %v1410 = vld [vmem:[#allocation2 + $0x50] sm:$0xf]
        %v1411 = vld [vmem:[#allocation2 + $0x54] sm:$0xff]
        %v1412 = vld [vmem:[#allocation2 + $0x5c] sm:$0xf]
        %v1413 = vld [vmem:[#allocation2 + $0x60] sm:$0xff]
        %v1414 = vld [vmem:[#allocation2 + $0x68] sm:$0xf]
        %v1415 = vld [vmem:[#allocation2 + $0x6c] sm:$0xff]
        %v1416 = vld [vmem:[#allocation2 + $0x74] sm:$0xf]
        %v1417 = vld [vmem:[#allocation2 + $0x78] sm:$0xff]
        %v1418 = vld [vmem:[#allocation2 + $0x80] sm:$0xf]
        %v1419 = vld [vmem:[#allocation2 + $0x84] sm:$0xff]
        %v1420 = vld [vmem:[#allocation2 + $0x8c] sm:$0xf]
        %v1421 = vld [vmem:[#allocation2 + $0x90] sm:$0xff]
        %v1422 = vld [vmem:[#allocation2 + $0x98] sm:$0xf]
        %v1423 = vld [vmem:[#allocation2 + $0x9c] sm:$0xff]
        %v1424 = vld [vmem:[#allocation2 + $0xa4] sm:$0xf]
        %v1425 = vld [vmem:[#allocation2 + $0xa8] sm:$0xff]
        %v1426 = vld [vmem:[#allocation2 + $0xb0] sm:$0xf]
        %v1427 = vld [vmem:[#allocation2 + $0xb4] sm:$0xff]
        %v1428 = vld [vmem:[#allocation2 + $0xbc] sm:$0xf]
        %v1429 = vld [vmem:[#allocation2 + $0xc0] sm:$0xff]
        %v1430 = vld [vmem:[#allocation2 + $0xc8] sm:$0xf]
        %v1431 = vld [vmem:[#allocation2 + $0xcc] sm:$0xff]
        %v1432 = vld [vmem:[#allocation2 + $0xd4] sm:$0xf]
        %v1433 = vld [vmem:[#allocation2 + $0xd8] sm:$0xff]
        %v1434 = vld [vmem:[#allocation2 + $0xe0] sm:$0xf]
        %v1435 = vld [vmem:[#allocation2 + $0xe4] sm:$0xff]
        %v1436 = vld [vmem:[#allocation2 + $0xec] sm:$0xf]
        %v1437 = vld [vmem:[#allocation2 + $0xf0] sm:$0xff]
        %v1438 = vld [vmem:[#allocation2 + $0xf8] sm:$0xf]
        %v1439 = vld [vmem:[#allocation2 + $0xfc] sm:$0xff]
        %v1440 = vld [vmem:[#allocation2 + $0x104] sm:$0xf]
        %v1441 = vld [vmem:[#allocation2 + $0x108] sm:$0xff]
        %v1442 = vld [vmem:[#allocation2 + $0x110] sm:$0xf]
        %v1443 = vld [vmem:[#allocation2 + $0x114] sm:$0xff]
        %v1444 = vld [vmem:[#allocation2 + $0x11c] sm:$0xf]
        %v1445 = vld [vmem:[#allocation2 + $0x120] sm:$0xff]
        %v1446 = vld [vmem:[#allocation2 + $0x128] sm:$0xf]
        %v1447 = vld [vmem:[#allocation2 + $0x12c] sm:$0xff]
        %v1448 = vld [vmem:[#allocation2 + $0x134] sm:$0xf]
        %v1449 = vld [vmem:[#allocation2 + $0x138] sm:$0xff]
        %v1450 = vld [vmem:[#allocation2 + $0x140] sm:$0xf]
        %v1451 = vld [vmem:[#allocation2 + $0x144] sm:$0xff]
        %v1452 = vld [vmem:[#allocation2 + $0x14c] sm:$0xf]
        %v1453 = vld [vmem:[#allocation2 + $0x150] sm:$0xff]
        %v1454 = vld [vmem:[#allocation2 + $0x158] sm:$0xf]
        %v1455 = vld [vmem:[#allocation2 + $0x15c] sm:$0xff]
        %v1456 = vld [vmem:[#allocation2 + $0x164] sm:$0xf]
        %v1457 = vld [vmem:[#allocation2 + $0x168] sm:$0xff]
        %v1458 = vld [vmem:[#allocation2 + $0x170] sm:$0xf]
        %v1459 = vld [vmem:[#allocation2 + $0x174] sm:$0xff]
        %v1460 = vld [vmem:[#allocation2 + $0x17c] sm:$0xf]
        %v1461 = vld [vmem:[#allocation2 + $0x180] sm:$0xff]
        %v1462 = vld [vmem:[#allocation2 + $0x188] sm:$0xf]
        %v1463 = vld [vmem:[#allocation2 + $0x18c] sm:$0xff]
        %v1464 = vld [vmem:[#allocation2 + $0x194] sm:$0xf]
        %v1465 = vld [vmem:[#allocation2 + $0x198] sm:$0xff]
        %v1466 = vld [vmem:[#allocation2 + $0x1a0] sm:$0xf]
        %v1467 = vld [vmem:[#allocation2 + $0x1a4] sm:$0xff]
        %v1468 = vld [vmem:[#allocation2 + $0x1ac] sm:$0xf]
        %v1469 = vld [vmem:[#allocation2 + $0x1b0] sm:$0xff]
        %v1470 = vld [vmem:[#allocation2 + $0x1b8] sm:$0xf]
        %v1471 = vld [vmem:[#allocation2 + $0x1bc] sm:$0xff]
        %v1472 = vld [vmem:[#allocation2 + $0x1c4] sm:$0xf]
        %v1473 = vld [vmem:[#allocation2 + $0x1c8] sm:$0xff]
        %v1474 = vld [vmem:[#allocation2 + $0x1d0] sm:$0xf]
        %v1475 = vld [vmem:[#allocation2 + $0x1d4] sm:$0xff]
        %v1476 = vld [vmem:[#allocation2 + $0x1dc] sm:$0xf]
        %v1477 = vld [vmem:[#allocation2 + $0x1e0] sm:$0xff]
        %v1478 = vld [vmem:[#allocation2 + $0x1e8] sm:$0xf]
        %v1479 = vld [vmem:[#allocation2 + $0x1ec] sm:$0xff]
        %v1480 = vld [vmem:[#allocation2 + $0x1f4] sm:$0xf]
        %v1481 = vld [vmem:[#allocation2 + $0x1f8] sm:$0xff]
        %v1482 = vld [vmem:[#allocation2 + $0x200] sm:$0xf]
        %v1483 = vld [vmem:[#allocation2 + $0x204] sm:$0xff]
        %v1484 = vld [vmem:[#allocation2 + $0x20c] sm:$0xf]
        %v1485 = vld [vmem:[#allocation2 + $0x210] sm:$0xff]
        %v1486 = vld [vmem:[#allocation2 + $0x218] sm:$0xf]
        %v1487 = vld [vmem:[#allocation2 + $0x21c] sm:$0xff]
        %v1488 = vld [vmem:[#allocation2 + $0x224] sm:$0xf]
        %v1489 = vld [vmem:[#allocation2 + $0x228] sm:$0xff]
        %v1490 = vld [vmem:[#allocation2 + $0x230] sm:$0xf]
        %v1491 = vld [vmem:[#allocation2 + $0x234] sm:$0xff]
        %v1492 = vld [vmem:[#allocation2 + $0x23c] sm:$0xf]
        %v1493 = vld [vmem:[#allocation2 + $0x240] sm:$0xff]
        %v1494 = vld [vmem:[#allocation2 + $0x248] sm:$0xf]
        %v1495 = vld [vmem:[#allocation2 + $0x24c] sm:$0xff]
        %v1496 = vld [vmem:[#allocation2 + $0x254] sm:$0xf]
        %v1497 = vld [vmem:[%s5] ss:$8 sm:$0x7]
        %v1499 = vperm.slane %v1497, 0
        %v1500 = vperm.slane %v1497, 1
        %v1501 = vperm.slane %v1497, 2
        %v1605 = vunpack.c.l.b16 %v1397
        %v1606 = vunpack.c.h.b16 %v1397
        %v1607 = vunpack.c.l.b16 %v1398
        %v1608 = vunpack.c.l.b16 %v1399
        %v1609 = vunpack.c.h.b16 %v1399
        %v1610 = vunpack.c.l.b16 %v1400
        %v1611 = vunpack.c.l.b16 %v1401
        %v1612 = vunpack.c.h.b16 %v1401
        %v1613 = vunpack.c.l.b16 %v1402
        %v1614 = vunpack.c.l.b16 %v1403
        %v1615 = vunpack.c.h.b16 %v1403
        %v1616 = vunpack.c.l.b16 %v1404
        %v1617 = vunpack.c.l.b16 %v1405
        %v1618 = vunpack.c.h.b16 %v1405
        %v1619 = vunpack.c.l.b16 %v1406
        %v1620 = vunpack.c.l.b16 %v1407
        %v1621 = vunpack.c.h.b16 %v1407
        %v1622 = vunpack.c.l.b16 %v1408
        %v1623 = vunpack.c.l.b16 %v1409
        %v1624 = vunpack.c.h.b16 %v1409
        %v1625 = vunpack.c.l.b16 %v1410
        %v1626 = vunpack.c.l.b16 %v1411
        %v1627 = vunpack.c.h.b16 %v1411
        %v1628 = vunpack.c.l.b16 %v1412
        %v1629 = vunpack.c.l.b16 %v1413
        %v1630 = vunpack.c.h.b16 %v1413
        %v1631 = vunpack.c.l.b16 %v1414
        %v1632 = vunpack.c.l.b16 %v1415
        %v1633 = vunpack.c.h.b16 %v1415
        %v1634 = vunpack.c.l.b16 %v1416
        %v1635 = vunpack.c.l.b16 %v1417
        %v1636 = vunpack.c.h.b16 %v1417
        %v1637 = vunpack.c.l.b16 %v1418
        %v1638 = vunpack.c.l.b16 %v1419
        %v1639 = vunpack.c.h.b16 %v1419
        %v1640 = vunpack.c.l.b16 %v1420
        %v1641 = vunpack.c.l.b16 %v1421
        %v1642 = vunpack.c.h.b16 %v1421
        %v1643 = vunpack.c.l.b16 %v1422
        %v1644 = vunpack.c.l.b16 %v1423
        %v1645 = vunpack.c.h.b16 %v1423
        %v1646 = vunpack.c.l.b16 %v1424
        %v1647 = vunpack.c.l.b16 %v1425
        %v1648 = vunpack.c.h.b16 %v1425
        %v1649 = vunpack.c.l.b16 %v1426
        %v1650 = vunpack.c.l.b16 %v1427
        %v1651 = vunpack.c.h.b16 %v1427
        %v1652 = vunpack.c.l.b16 %v1428
        %v1653 = vunpack.c.l.b16 %v1429
        %v1654 = vunpack.c.h.b16 %v1429
        %v1655 = vunpack.c.l.b16 %v1430
        %v1656 = vunpack.c.l.b16 %v1431
        %v1657 = vunpack.c.h.b16 %v1431
        %v1658 = vunpack.c.l.b16 %v1432
        %v1659 = vunpack.c.l.b16 %v1433
        %v1660 = vunpack.c.h.b16 %v1433
        %v1661 = vunpack.c.l.b16 %v1434
        %v1662 = vunpack.c.l.b16 %v1435
        %v1663 = vunpack.c.h.b16 %v1435
        %v1664 = vunpack.c.l.b16 %v1436
        %v1665 = vunpack.c.l.b16 %v1437
        %v1666 = vunpack.c.h.b16 %v1437
        %v1667 = vunpack.c.l.b16 %v1438
        %v1668 = vunpack.c.l.b16 %v1439
        %v1669 = vunpack.c.h.b16 %v1439
        %v1670 = vunpack.c.l.b16 %v1440
        %v1671 = vunpack.c.l.b16 %v1441
        %v1672 = vunpack.c.h.b16 %v1441
        %v1673 = vunpack.c.l.b16 %v1442
        %v1674 = vunpack.c.l.b16 %v1443
        %v1675 = vunpack.c.h.b16 %v1443
        %v1676 = vunpack.c.l.b16 %v1444
        %v1677 = vunpack.c.l.b16 %v1445
        %v1678 = vunpack.c.h.b16 %v1445
        %v1679 = vunpack.c.l.b16 %v1446
        %v1680 = vunpack.c.l.b16 %v1447
        %v1681 = vunpack.c.h.b16 %v1447
        %v1682 = vunpack.c.l.b16 %v1448
        %v1683 = vunpack.c.l.b16 %v1449
        %v1684 = vunpack.c.h.b16 %v1449
        %v1685 = vunpack.c.l.b16 %v1450
        %v1686 = vunpack.c.l.b16 %v1451
        %v1687 = vunpack.c.h.b16 %v1451
        %v1688 = vunpack.c.l.b16 %v1452
        %v1689 = vunpack.c.l.b16 %v1453
        %v1690 = vunpack.c.h.b16 %v1453
        %v1691 = vunpack.c.l.b16 %v1454
        %v1692 = vunpack.c.l.b16 %v1455
        %v1693 = vunpack.c.h.b16 %v1455
        %v1694 = vunpack.c.l.b16 %v1456
        %v1695 = vunpack.c.l.b16 %v1457
        %v1696 = vunpack.c.h.b16 %v1457
        %v1697 = vunpack.c.l.b16 %v1458
        %v1698 = vunpack.c.l.b16 %v1459
        %v1699 = vunpack.c.h.b16 %v1459
        %v1700 = vunpack.c.l.b16 %v1460
        %v1701 = vunpack.c.l.b16 %v1461
        %v1702 = vunpack.c.h.b16 %v1461
        %v1703 = vunpack.c.l.b16 %v1462
        %v1704 = vunpack.c.l.b16 %v1463
        %v1705 = vunpack.c.h.b16 %v1463
        %v1706 = vunpack.c.l.b16 %v1464
        %v1707 = vunpack.c.l.b16 %v1465
        %v1708 = vunpack.c.h.b16 %v1465
        %v1709 = vunpack.c.l.b16 %v1466
        %v1710 = vunpack.c.l.b16 %v1467
        %v1711 = vunpack.c.h.b16 %v1467
        %v1712 = vunpack.c.l.b16 %v1468
        %v1713 = vunpack.c.l.b16 %v1469
        %v1714 = vunpack.c.h.b16 %v1469
        %v1715 = vunpack.c.l.b16 %v1470
        %v1716 = vunpack.c.l.b16 %v1471
        %v1717 = vunpack.c.h.b16 %v1471
        %v1718 = vunpack.c.l.b16 %v1472
        %v1719 = vunpack.c.l.b16 %v1473
        %v1720 = vunpack.c.h.b16 %v1473
        %v1721 = vunpack.c.l.b16 %v1474
        %v1722 = vunpack.c.l.b16 %v1475
        %v1723 = vunpack.c.h.b16 %v1475
        %v1724 = vunpack.c.l.b16 %v1476
        %v1725 = vunpack.c.l.b16 %v1477
        %v1726 = vunpack.c.h.b16 %v1477
        %v1727 = vunpack.c.l.b16 %v1478
        %v1728 = vunpack.c.l.b16 %v1479
        %v1729 = vunpack.c.h.b16 %v1479
        %v1730 = vunpack.c.l.b16 %v1480
        %v1731 = vunpack.c.l.b16 %v1481
        %v1732 = vunpack.c.h.b16 %v1481
        %v1733 = vunpack.c.l.b16 %v1482
        %v1734 = vunpack.c.l.b16 %v1483
        %v1735 = vunpack.c.h.b16 %v1483
        %v1736 = vunpack.c.l.b16 %v1484
        %v1737 = vunpack.c.l.b16 %v1485
        %v1738 = vunpack.c.h.b16 %v1485
        %v1739 = vunpack.c.l.b16 %v1486
        %v1740 = vunpack.c.l.b16 %v1487
        %v1741 = vunpack.c.h.b16 %v1487
        %v1742 = vunpack.c.l.b16 %v1488
        %v1743 = vunpack.c.l.b16 %v1489
        %v1744 = vunpack.c.h.b16 %v1489
        %v1745 = vunpack.c.l.b16 %v1490
        %v1746 = vunpack.c.l.b16 %v1491
        %v1747 = vunpack.c.h.b16 %v1491
        %v1748 = vunpack.c.l.b16 %v1492
        %v1749 = vunpack.c.l.b16 %v1493
        %v1750 = vunpack.c.h.b16 %v1493
        %v1751 = vunpack.c.l.b16 %v1494
        %v1752 = vunpack.c.l.b16 %v1495
        %v1753 = vunpack.c.h.b16 %v1495
        %v1754 = vunpack.c.l.b16 %v1496
        %v1755 = vpack.c.b16 %v1608, %v1605
        %v1756 = vpack.c.b16 %v1609, %v1606
        %v1757 = vpack.c.b16 %v1610, %v1607
        %v1758 = vpack.c.b16 %v1614, %v1611
        %v1759 = vpack.c.b16 %v1615, %v1612
        %v1760 = vpack.c.b16 %v1616, %v1613
        %v1761 = vpack.c.b16 %v1620, %v1617
        %v1762 = vpack.c.b16 %v1621, %v1618
        %v1763 = vpack.c.b16 %v1622, %v1619
        %v1764 = vpack.c.b16 %v1626, %v1623
        %v1765 = vpack.c.b16 %v1627, %v1624
        %v1766 = vpack.c.b16 %v1628, %v1625
        %v1767 = vpack.c.b16 %v1632, %v1629
        %v1768 = vpack.c.b16 %v1633, %v1630
        %v1769 = vpack.c.b16 %v1634, %v1631
        %v1770 = vpack.c.b16 %v1638, %v1635
        %v1771 = vpack.c.b16 %v1639, %v1636
        %v1772 = vpack.c.b16 %v1640, %v1637
        %v1773 = vpack.c.b16 %v1644, %v1641
        %v1774 = vpack.c.b16 %v1645, %v1642
        %v1775 = vpack.c.b16 %v1646, %v1643
        %v1776 = vpack.c.b16 %v1650, %v1647
        %v1777 = vpack.c.b16 %v1651, %v1648
        %v1778 = vpack.c.b16 %v1652, %v1649
        %v1779 = vpack.c.b16 %v1656, %v1653
        %v1780 = vpack.c.b16 %v1657, %v1654
        %v1781 = vpack.c.b16 %v1658, %v1655
        %v1782 = vpack.c.b16 %v1662, %v1659
        %v1783 = vpack.c.b16 %v1663, %v1660
        %v1784 = vpack.c.b16 %v1664, %v1661
        %v1785 = vpack.c.b16 %v1668, %v1665
        %v1786 = vpack.c.b16 %v1669, %v1666
        %v1787 = vpack.c.b16 %v1670, %v1667
        %v1788 = vpack.c.b16 %v1674, %v1671
        %v1789 = vpack.c.b16 %v1675, %v1672
        %v1790 = vpack.c.b16 %v1676, %v1673
        %v1791 = vpack.c.b16 %v1680, %v1677
        %v1792 = vpack.c.b16 %v1681, %v1678
        %v1793 = vpack.c.b16 %v1682, %v1679
        %v1794 = vpack.c.b16 %v1686, %v1683
        %v1795 = vpack.c.b16 %v1687, %v1684
        %v1796 = vpack.c.b16 %v1688, %v1685
        %v1797 = vpack.c.b16 %v1692, %v1689
        %v1798 = vpack.c.b16 %v1693, %v1690
        %v1799 = vpack.c.b16 %v1694, %v1691
        %v1800 = vpack.c.b16 %v1698, %v1695
        %v1801 = vpack.c.b16 %v1699, %v1696
        %v1802 = vpack.c.b16 %v1700, %v1697
        %v1803 = vpack.c.b16 %v1704, %v1701
        %v1804 = vpack.c.b16 %v1705, %v1702
        %v1805 = vpack.c.b16 %v1706, %v1703
        %v1806 = vpack.c.b16 %v1710, %v1707
        %v1807 = vpack.c.b16 %v1711, %v1708
        %v1808 = vpack.c.b16 %v1712, %v1709
        %v1809 = vpack.c.b16 %v1716, %v1713
        %v1810 = vpack.c.b16 %v1717, %v1714
        %v1811 = vpack.c.b16 %v1718, %v1715
        %v1812 = vpack.c.b16 %v1722, %v1719
        %v1813 = vpack.c.b16 %v1723, %v1720
        %v1814 = vpack.c.b16 %v1724, %v1721
        %v1815 = vpack.c.b16 %v1728, %v1725
        %v1816 = vpack.c.b16 %v1729, %v1726
        %v1817 = vpack.c.b16 %v1730, %v1727
        %v1818 = vpack.c.b16 %v1734, %v1731
        %v1819 = vpack.c.b16 %v1735, %v1732
        %v1820 = vpack.c.b16 %v1736, %v1733
        %v1821 = vpack.c.b16 %v1740, %v1737
        %v1822 = vpack.c.b16 %v1741, %v1738
        %v1823 = vpack.c.b16 %v1742, %v1739
        %v1824 = vpack.c.b16 %v1746, %v1743
        %v1825 = vpack.c.b16 %v1747, %v1744
        %v1826 = vpack.c.b16 %v1748, %v1745
        %v1827 = vpack.c.b16 %v1752, %v1749
        %v1828 = vpack.c.b16 %v1753, %v1750
        %v1829 = vpack.c.b16 %v1754, %v1751
        %v1906 = vsel %vm331, %v1368, 0
        %v1909 = vsel %vm331, %v1372, 0
        %v1912 = vsel %vm331, %v1376, 0
        %v1915 = vsel %vm331, %v1380, 0
        %v1918 = vsel %vm331, %v1384, 0
        %v1921 = vsel %vm331, %v1388, 0
        %v1924 = vsel %vm331, %v1392, 0
        %v1927 = vsel %vm331, %v1396, 0
        %1929 = vmatpush.bf16.msra.mxu0 %v1776
        %1930 = vmatpush.bf16.msra.mxu0 %v1773
        %1931 = vmatpush.bf16.msra.mxu0 %v1770
        %1932 = vmatpush.bf16.msra.mxu0 %v1767
        %1933 = vmatpush.bf16.msra.mxu0 %v1764
        %1934 = vmatpush.bf16.msra.mxu0 %v1761
        %1935 = vmatpush.bf16.msra.mxu0 %v1758
        %1936 = vmatpush.bf16.msra.mxu0 %v1755
        %1937 = vmatmul.bf16.gmra.mxu0 %v1365
        %v1938 = vpop.f32.mrf.mxu0
        %v1939 = vadd.f32 %v1499, %v1938
        %v1940 = vpop.f32.mrf.mxu0
        %v1941 = vadd.f32 %v1499, %v1940
        %1942 = vmatmul.bf16.gmra.mxu0 %v1369
        %v1943 = vpop.f32.mrf.mxu0
        %v1944 = vadd.f32 %v1499, %v1943
        %v1945 = vpop.f32.mrf.mxu0
        %v1946 = vadd.f32 %v1499, %v1945
        %1947 = vmatmul.bf16.gmra.mxu0 %v1373
        %v1948 = vpop.f32.mrf.mxu0
        %v1949 = vadd.f32 %v1499, %v1948
        %v1950 = vpop.f32.mrf.mxu0
        %v1951 = vadd.f32 %v1499, %v1950
        %1952 = vmatmul.bf16.gmra.mxu0 %v1377
        %v1953 = vpop.f32.mrf.mxu0
        %v1954 = vadd.f32 %v1499, %v1953
        %v1955 = vpop.f32.mrf.mxu0
        %v1956 = vadd.f32 %v1499, %v1955
        %1957 = vmatmul.bf16.gmra.mxu0 %v1381
        %v1958 = vpop.f32.mrf.mxu0
        %v1959 = vadd.f32 %v1499, %v1958
        %v1960 = vpop.f32.mrf.mxu0
        %v1961 = vadd.f32 %v1499, %v1960
        %1962 = vmatmul.bf16.gmra.mxu0 %v1385
        %v1963 = vpop.f32.mrf.mxu0
        %v1964 = vadd.f32 %v1499, %v1963
        %v1965 = vpop.f32.mrf.mxu0
        %v1966 = vadd.f32 %v1499, %v1965
        %1967 = vmatmul.bf16.gmra.mxu0 %v1389
        %v1968 = vpop.f32.mrf.mxu0
        %v1969 = vadd.f32 %v1499, %v1968
        %v1970 = vpop.f32.mrf.mxu0
        %v1971 = vadd.f32 %v1499, %v1970
        %1972 = vmatmul.bf16.gmra.mxu0 %v1393
        %v1973 = vpop.f32.mrf.mxu0
        %v1974 = vadd.f32 %v1499, %v1973
        %v1975 = vpop.f32.mrf.mxu0
        %v1976 = vadd.f32 %v1499, %v1975
        %1977 = vdwg.mxu0
        %1978 = vmatpush.bf16.msra.mxu0 %v1800
        %1979 = vmatpush.bf16.msra.mxu0 %v1797
        %1980 = vmatpush.bf16.msra.mxu0 %v1794
        %1981 = vmatpush.bf16.msra.mxu0 %v1791
        %1982 = vmatpush.bf16.msra.mxu0 %v1788
        %1983 = vmatpush.bf16.msra.mxu0 %v1785
        %1984 = vmatpush.bf16.msra.mxu0 %v1782
        %1985 = vmatpush.bf16.msra.mxu0 %v1779
        %1986 = vmatmul.bf16.gmra.mxu0 %v1366
        %v1987 = vpop.f32.mrf.mxu0
        %v1988 = vadd.f32 %v1939, %v1987
        %v1989 = vpop.f32.mrf.mxu0
        %v1990 = vadd.f32 %v1941, %v1989
        %1991 = vmatmul.bf16.gmra.mxu0 %v1370
        %v1992 = vpop.f32.mrf.mxu0
        %v1993 = vadd.f32 %v1944, %v1992
        %v1994 = vpop.f32.mrf.mxu0
        %v1995 = vadd.f32 %v1946, %v1994
        %1996 = vmatmul.bf16.gmra.mxu0 %v1374
        %v1997 = vpop.f32.mrf.mxu0
        %v1998 = vadd.f32 %v1949, %v1997
        %v1999 = vpop.f32.mrf.mxu0
        %v2000 = vadd.f32 %v1951, %v1999
        %2001 = vmatmul.bf16.gmra.mxu0 %v1378
        %v2002 = vpop.f32.mrf.mxu0
        %v2003 = vadd.f32 %v1954, %v2002
        %v2004 = vpop.f32.mrf.mxu0
        %v2005 = vadd.f32 %v1956, %v2004
        %2006 = vmatmul.bf16.gmra.mxu0 %v1382
        %v2007 = vpop.f32.mrf.mxu0
        %v2008 = vadd.f32 %v1959, %v2007
        %v2009 = vpop.f32.mrf.mxu0
        %v2010 = vadd.f32 %v1961, %v2009
        %2011 = vmatmul.bf16.gmra.mxu0 %v1386
        %v2012 = vpop.f32.mrf.mxu0
        %v2013 = vadd.f32 %v1964, %v2012
        %v2014 = vpop.f32.mrf.mxu0
        %v2015 = vadd.f32 %v1966, %v2014
        %2016 = vmatmul.bf16.gmra.mxu0 %v1390
        %v2017 = vpop.f32.mrf.mxu0
        %v2018 = vadd.f32 %v1969, %v2017
        %v2019 = vpop.f32.mrf.mxu0
        %v2020 = vadd.f32 %v1971, %v2019
        %2021 = vmatmul.bf16.gmra.mxu0 %v1394
        %v2022 = vpop.f32.mrf.mxu0
        %v2023 = vadd.f32 %v1974, %v2022
        %v2024 = vpop.f32.mrf.mxu0
        %v2025 = vadd.f32 %v1976, %v2024
        %2026 = vdwg.mxu0
        %2027 = vmatpush.bf16.msra.mxu0 %v1824
        %2028 = vmatpush.bf16.msra.mxu0 %v1821
        %2029 = vmatpush.bf16.msra.mxu0 %v1818
        %2030 = vmatpush.bf16.msra.mxu0 %v1815
        %2031 = vmatpush.bf16.msra.mxu0 %v1812
        %2032 = vmatpush.bf16.msra.mxu0 %v1809
        %2033 = vmatpush.bf16.msra.mxu0 %v1806
        %2034 = vmatpush.bf16.msra.mxu0 %v1803
        %2035 = vmatmul.bf16.gmra.mxu0 %v1367
        %v2036 = vpop.f32.mrf.mxu0
        %v2037 = vadd.f32 %v1988, %v2036
        %v2038 = vpop.f32.mrf.mxu0
        %v2039 = vadd.f32 %v1990, %v2038
        %2040 = vmatmul.bf16.gmra.mxu0 %v1371
        %v2041 = vpop.f32.mrf.mxu0
        %v2042 = vadd.f32 %v1993, %v2041
        %v2043 = vpop.f32.mrf.mxu0
        %v2044 = vadd.f32 %v1995, %v2043
        %2045 = vmatmul.bf16.gmra.mxu0 %v1375
        %v2046 = vpop.f32.mrf.mxu0
        %v2047 = vadd.f32 %v1998, %v2046
        %v2048 = vpop.f32.mrf.mxu0
        %v2049 = vadd.f32 %v2000, %v2048
        %2050 = vmatmul.bf16.gmra.mxu0 %v1379
        %v2051 = vpop.f32.mrf.mxu0
        %v2052 = vadd.f32 %v2003, %v2051
        %v2053 = vpop.f32.mrf.mxu0
        %v2054 = vadd.f32 %v2005, %v2053
        %2055 = vmatmul.bf16.gmra.mxu0 %v1383
        %v2056 = vpop.f32.mrf.mxu0
        %v2057 = vadd.f32 %v2008, %v2056
        %v2058 = vpop.f32.mrf.mxu0
        %v2059 = vadd.f32 %v2010, %v2058
        %2060 = vmatmul.bf16.gmra.mxu0 %v1387
        %v2061 = vpop.f32.mrf.mxu0
        %v2062 = vadd.f32 %v2013, %v2061
        %v2063 = vpop.f32.mrf.mxu0
        %v2064 = vadd.f32 %v2015, %v2063
        %2065 = vmatmul.bf16.gmra.mxu0 %v1391
        %v2066 = vpop.f32.mrf.mxu0
        %v2067 = vadd.f32 %v2018, %v2066
        %v2068 = vpop.f32.mrf.mxu0
        %v2069 = vadd.f32 %v2020, %v2068
        %2070 = vmatmul.bf16.gmra.mxu0 %v1395
        %v2071 = vpop.f32.mrf.mxu0
        %v2072 = vadd.f32 %v2023, %v2071
        %v2073 = vpop.f32.mrf.mxu0
        %v2074 = vadd.f32 %v2025, %v2073
        %2075 = vdwg.mxu0
        %2076 = vmatpush.bf16.msra.mxu0 0
        %2077 = vmatpush.bf16.msra.mxu0 0
        %2078 = vmatpush.bf16.msra.mxu0 0
        %2079 = vmatpush.bf16.msra.mxu0 0
        %2080 = vmatpush.bf16.msra.mxu0 0
        %2081 = vmatpush.bf16.msra.mxu0 0
        %2082 = vmatpush.bf16.msra.mxu0 0
        %2083 = vmatpush.bf16.msra.mxu0 %v1827
        %2084 = vmatmul.bf16.gmra.mxu0 %v1906
        %v2085 = vpop.f32.mrf.mxu0
        %v2086 = vadd.f32 %v2037, %v2085
        %v2087 = vpop.f32.mrf.mxu0
        %v2088 = vadd.f32 %v2039, %v2087
        %2089 = vmatmul.bf16.gmra.mxu0 %v1909
        %v2090 = vpop.f32.mrf.mxu0
        %v2091 = vadd.f32 %v2042, %v2090
        %v2092 = vpop.f32.mrf.mxu0
        %v2093 = vadd.f32 %v2044, %v2092
        %2094 = vmatmul.bf16.gmra.mxu0 %v1912
        %v2095 = vpop.f32.mrf.mxu0
        %v2096 = vadd.f32 %v2047, %v2095
        %v2097 = vpop.f32.mrf.mxu0
        %v2098 = vadd.f32 %v2049, %v2097
        %2099 = vmatmul.bf16.gmra.mxu0 %v1915
        %v2100 = vpop.f32.mrf.mxu0
        %v2101 = vadd.f32 %v2052, %v2100
        %v2102 = vpop.f32.mrf.mxu0
        %v2103 = vadd.f32 %v2054, %v2102
        %2104 = vmatmul.bf16.gmra.mxu0 %v1918
        %v2105 = vpop.f32.mrf.mxu0
        %v2106 = vadd.f32 %v2057, %v2105
        %v2107 = vpop.f32.mrf.mxu0
        %v2108 = vadd.f32 %v2059, %v2107
        %2109 = vmatmul.bf16.gmra.mxu0 %v1921
        %v2110 = vpop.f32.mrf.mxu0
        %v2111 = vadd.f32 %v2062, %v2110
        %v2112 = vpop.f32.mrf.mxu0
        %v2113 = vadd.f32 %v2064, %v2112
        %2114 = vmatmul.bf16.gmra.mxu0 %v1924
        %v2115 = vpop.f32.mrf.mxu0
        %v2116 = vadd.f32 %v2067, %v2115
        %v2117 = vpop.f32.mrf.mxu0
        %v2118 = vadd.f32 %v2069, %v2117
        %2119 = vmatmul.bf16.gmra.mxu0 %v1927
        %v2120 = vpop.f32.mrf.mxu0
        %v2121 = vadd.f32 %v2072, %v2120
        %v2122 = vpop.f32.mrf.mxu0
        %v2123 = vadd.f32 %v2074, %v2122
        %2124 = vdwg.mxu0
        %2125 = vmatpush.bf16.msra.mxu0 %v1777
        %2126 = vmatpush.bf16.msra.mxu0 %v1774
        %2127 = vmatpush.bf16.msra.mxu0 %v1771
        %2128 = vmatpush.bf16.msra.mxu0 %v1768
        %2129 = vmatpush.bf16.msra.mxu0 %v1765
        %2130 = vmatpush.bf16.msra.mxu0 %v1762
        %2131 = vmatpush.bf16.msra.mxu0 %v1759
        %2132 = vmatpush.bf16.msra.mxu0 %v1756
        %2133 = vmatmul.bf16.gmra.mxu0 %v1365
        %v2134 = vpop.f32.mrf.mxu0
        %v2135 = vadd.f32 %v1500, %v2134
        %v2136 = vpop.f32.mrf.mxu0
        %v2137 = vadd.f32 %v1500, %v2136
        %2138 = vmatmul.bf16.gmra.mxu0 %v1369
        %v2139 = vpop.f32.mrf.mxu0
        %v2140 = vadd.f32 %v1500, %v2139
        %v2141 = vpop.f32.mrf.mxu0
        %v2142 = vadd.f32 %v1500, %v2141
        %2143 = vmatmul.bf16.gmra.mxu0 %v1373
        %v2144 = vpop.f32.mrf.mxu0
        %v2145 = vadd.f32 %v1500, %v2144
        %v2146 = vpop.f32.mrf.mxu0
        %v2147 = vadd.f32 %v1500, %v2146
        %2148 = vmatmul.bf16.gmra.mxu0 %v1377
        %v2149 = vpop.f32.mrf.mxu0
        %v2150 = vadd.f32 %v1500, %v2149
        %v2151 = vpop.f32.mrf.mxu0
        %v2152 = vadd.f32 %v1500, %v2151
        %2153 = vmatmul.bf16.gmra.mxu0 %v1381
        %v2154 = vpop.f32.mrf.mxu0
        %v2155 = vadd.f32 %v1500, %v2154
        %v2156 = vpop.f32.mrf.mxu0
        %v2157 = vadd.f32 %v1500, %v2156
        %2158 = vmatmul.bf16.gmra.mxu0 %v1385
        %v2159 = vpop.f32.mrf.mxu0
        %v2160 = vadd.f32 %v1500, %v2159
        %v2161 = vpop.f32.mrf.mxu0
        %v2162 = vadd.f32 %v1500, %v2161
        %2163 = vmatmul.bf16.gmra.mxu0 %v1389
        %v2164 = vpop.f32.mrf.mxu0
        %v2165 = vadd.f32 %v1500, %v2164
        %v2166 = vpop.f32.mrf.mxu0
        %v2167 = vadd.f32 %v1500, %v2166
        %2168 = vmatmul.bf16.gmra.mxu0 %v1393
        %v2169 = vpop.f32.mrf.mxu0
        %v2170 = vadd.f32 %v1500, %v2169
        %v2171 = vpop.f32.mrf.mxu0
        %v2172 = vadd.f32 %v1500, %v2171
        %2173 = vdwg.mxu0
        %2174 = vmatpush.bf16.msra.mxu0 %v1801
        %2175 = vmatpush.bf16.msra.mxu0 %v1798
        %2176 = vmatpush.bf16.msra.mxu0 %v1795
        %2177 = vmatpush.bf16.msra.mxu0 %v1792
        %2178 = vmatpush.bf16.msra.mxu0 %v1789
        %2179 = vmatpush.bf16.msra.mxu0 %v1786
        %2180 = vmatpush.bf16.msra.mxu0 %v1783
        %2181 = vmatpush.bf16.msra.mxu0 %v1780
        %2182 = vmatmul.bf16.gmra.mxu0 %v1366
        %v2183 = vpop.f32.mrf.mxu0
        %v2184 = vadd.f32 %v2135, %v2183
        %v2185 = vpop.f32.mrf.mxu0
        %v2186 = vadd.f32 %v2137, %v2185
        %2187 = vmatmul.bf16.gmra.mxu0 %v1370
        %v2188 = vpop.f32.mrf.mxu0
        %v2189 = vadd.f32 %v2140, %v2188
        %v2190 = vpop.f32.mrf.mxu0
        %v2191 = vadd.f32 %v2142, %v2190
        %2192 = vmatmul.bf16.gmra.mxu0 %v1374
        %v2193 = vpop.f32.mrf.mxu0
        %v2194 = vadd.f32 %v2145, %v2193
        %v2195 = vpop.f32.mrf.mxu0
        %v2196 = vadd.f32 %v2147, %v2195
        %2197 = vmatmul.bf16.gmra.mxu0 %v1378
        %v2198 = vpop.f32.mrf.mxu0
        %v2199 = vadd.f32 %v2150, %v2198
        %v2200 = vpop.f32.mrf.mxu0
        %v2201 = vadd.f32 %v2152, %v2200
        %2202 = vmatmul.bf16.gmra.mxu0 %v1382
        %v2203 = vpop.f32.mrf.mxu0
        %v2204 = vadd.f32 %v2155, %v2203
        %v2205 = vpop.f32.mrf.mxu0
        %v2206 = vadd.f32 %v2157, %v2205
        %2207 = vmatmul.bf16.gmra.mxu0 %v1386
        %v2208 = vpop.f32.mrf.mxu0
        %v2209 = vadd.f32 %v2160, %v2208
        %v2210 = vpop.f32.mrf.mxu0
        %v2211 = vadd.f32 %v2162, %v2210
        %2212 = vmatmul.bf16.gmra.mxu0 %v1390
        %v2213 = vpop.f32.mrf.mxu0
        %v2214 = vadd.f32 %v2165, %v2213
        %v2215 = vpop.f32.mrf.mxu0
        %v2216 = vadd.f32 %v2167, %v2215
        %2217 = vmatmul.bf16.gmra.mxu0 %v1394
        %v2218 = vpop.f32.mrf.mxu0
        %v2219 = vadd.f32 %v2170, %v2218
        %v2220 = vpop.f32.mrf.mxu0
        %v2221 = vadd.f32 %v2172, %v2220
        %2222 = vdwg.mxu0
        %2223 = vmatpush.bf16.msra.mxu0 %v1825
        %2224 = vmatpush.bf16.msra.mxu0 %v1822
        %2225 = vmatpush.bf16.msra.mxu0 %v1819
        %2226 = vmatpush.bf16.msra.mxu0 %v1816
        %2227 = vmatpush.bf16.msra.mxu0 %v1813
        %2228 = vmatpush.bf16.msra.mxu0 %v1810
        %2229 = vmatpush.bf16.msra.mxu0 %v1807
        %2230 = vmatpush.bf16.msra.mxu0 %v1804
        %2231 = vmatmul.bf16.gmra.mxu0 %v1367
        %v2232 = vpop.f32.mrf.mxu0
        %v2233 = vadd.f32 %v2184, %v2232
        %v2234 = vpop.f32.mrf.mxu0
        %v2235 = vadd.f32 %v2186, %v2234
        %2236 = vmatmul.bf16.gmra.mxu0 %v1371
        %v2237 = vpop.f32.mrf.mxu0
        %v2238 = vadd.f32 %v2189, %v2237
        %v2239 = vpop.f32.mrf.mxu0
        %v2240 = vadd.f32 %v2191, %v2239
        %2241 = vmatmul.bf16.gmra.mxu0 %v1375
        %v2242 = vpop.f32.mrf.mxu0
        %v2243 = vadd.f32 %v2194, %v2242
        %v2244 = vpop.f32.mrf.mxu0
        %v2245 = vadd.f32 %v2196, %v2244
        %2246 = vmatmul.bf16.gmra.mxu0 %v1379
        %v2247 = vpop.f32.mrf.mxu0
        %v2248 = vadd.f32 %v2199, %v2247
        %v2249 = vpop.f32.mrf.mxu0
        %v2250 = vadd.f32 %v2201, %v2249
        %2251 = vmatmul.bf16.gmra.mxu0 %v1383
        %v2252 = vpop.f32.mrf.mxu0
        %v2253 = vadd.f32 %v2204, %v2252
        %v2254 = vpop.f32.mrf.mxu0
        %v2255 = vadd.f32 %v2206, %v2254
        %2256 = vmatmul.bf16.gmra.mxu0 %v1387
        %v2257 = vpop.f32.mrf.mxu0
        %v2258 = vadd.f32 %v2209, %v2257
        %v2259 = vpop.f32.mrf.mxu0
        %v2260 = vadd.f32 %v2211, %v2259
        %2261 = vmatmul.bf16.gmra.mxu0 %v1391
        %v2262 = vpop.f32.mrf.mxu0
        %v2263 = vadd.f32 %v2214, %v2262
        %v2264 = vpop.f32.mrf.mxu0
        %v2265 = vadd.f32 %v2216, %v2264
        %2266 = vmatmul.bf16.gmra.mxu0 %v1395
        %v2267 = vpop.f32.mrf.mxu0
        %v2268 = vadd.f32 %v2219, %v2267
        %v2269 = vpop.f32.mrf.mxu0
        %v2270 = vadd.f32 %v2221, %v2269
        %2271 = vdwg.mxu0
        %2272 = vmatpush.bf16.msra.mxu0 0
        %2273 = vmatpush.bf16.msra.mxu0 0
        %2274 = vmatpush.bf16.msra.mxu0 0
        %2275 = vmatpush.bf16.msra.mxu0 0
        %2276 = vmatpush.bf16.msra.mxu0 0
        %2277 = vmatpush.bf16.msra.mxu0 0
        %2278 = vmatpush.bf16.msra.mxu0 0
        %2279 = vmatpush.bf16.msra.mxu0 %v1828
        %2280 = vmatmul.bf16.gmra.mxu0 %v1906
        %v2281 = vpop.f32.mrf.mxu0
        %v2282 = vadd.f32 %v2233, %v2281
        %v2283 = vpop.f32.mrf.mxu0
        %v2284 = vadd.f32 %v2235, %v2283
        %2285 = vmatmul.bf16.gmra.mxu0 %v1909
        %v2286 = vpop.f32.mrf.mxu0
        %v2287 = vadd.f32 %v2238, %v2286
        %v2288 = vpop.f32.mrf.mxu0
        %v2289 = vadd.f32 %v2240, %v2288
        %2290 = vmatmul.bf16.gmra.mxu0 %v1912
        %v2291 = vpop.f32.mrf.mxu0
        %v2292 = vadd.f32 %v2243, %v2291
        %v2293 = vpop.f32.mrf.mxu0
        %v2294 = vadd.f32 %v2245, %v2293
        %2295 = vmatmul.bf16.gmra.mxu0 %v1915
        %v2296 = vpop.f32.mrf.mxu0
        %v2297 = vadd.f32 %v2248, %v2296
        %v2298 = vpop.f32.mrf.mxu0
        %v2299 = vadd.f32 %v2250, %v2298
        %2300 = vmatmul.bf16.gmra.mxu0 %v1918
        %v2301 = vpop.f32.mrf.mxu0
        %v2302 = vadd.f32 %v2253, %v2301
        %v2303 = vpop.f32.mrf.mxu0
        %v2304 = vadd.f32 %v2255, %v2303
        %2305 = vmatmul.bf16.gmra.mxu0 %v1921
        %v2306 = vpop.f32.mrf.mxu0
        %v2307 = vadd.f32 %v2258, %v2306
        %v2308 = vpop.f32.mrf.mxu0
        %v2309 = vadd.f32 %v2260, %v2308
        %2310 = vmatmul.bf16.gmra.mxu0 %v1924
        %v2311 = vpop.f32.mrf.mxu0
        %v2312 = vadd.f32 %v2263, %v2311
        %v2313 = vpop.f32.mrf.mxu0
        %v2314 = vadd.f32 %v2265, %v2313
        %2315 = vmatmul.bf16.gmra.mxu0 %v1927
        %v2316 = vpop.f32.mrf.mxu0
        %v2317 = vadd.f32 %v2268, %v2316
        %v2318 = vpop.f32.mrf.mxu0
        %v2319 = vadd.f32 %v2270, %v2318
        %2320 = vdwg.mxu0
        %2321 = vmatpush.bf16.msra.mxu0 %v1778
        %2322 = vmatpush.bf16.msra.mxu0 %v1775
        %2323 = vmatpush.bf16.msra.mxu0 %v1772
        %2324 = vmatpush.bf16.msra.mxu0 %v1769
        %2325 = vmatpush.bf16.msra.mxu0 %v1766
        %2326 = vmatpush.bf16.msra.mxu0 %v1763
        %2327 = vmatpush.bf16.msra.mxu0 %v1760
        %2328 = vmatpush.bf16.msra.mxu0 %v1757
        %2329 = vmatmul.bf16.gmra.mxu0 %v1365
        %v2330 = vpop.f32.mrf.mxu0
        %v2331 = vadd.f32 %v1501, %v2330
        %v2332 = vpop.f32.mrf.mxu0
        %v2333 = vadd.f32 %v1501, %v2332
        %2334 = vmatmul.bf16.gmra.mxu0 %v1369
        %v2335 = vpop.f32.mrf.mxu0
        %v2336 = vadd.f32 %v1501, %v2335
        %v2337 = vpop.f32.mrf.mxu0
        %v2338 = vadd.f32 %v1501, %v2337
        %2339 = vmatmul.bf16.gmra.mxu0 %v1373
        %v2340 = vpop.f32.mrf.mxu0
        %v2341 = vadd.f32 %v1501, %v2340
        %v2342 = vpop.f32.mrf.mxu0
        %v2343 = vadd.f32 %v1501, %v2342
        %2344 = vmatmul.bf16.gmra.mxu0 %v1377
        %v2345 = vpop.f32.mrf.mxu0
        %v2346 = vadd.f32 %v1501, %v2345
        %v2347 = vpop.f32.mrf.mxu0
        %v2348 = vadd.f32 %v1501, %v2347
        %2349 = vmatmul.bf16.gmra.mxu0 %v1381
        %v2350 = vpop.f32.mrf.mxu0
        %v2351 = vadd.f32 %v1501, %v2350
        %v2352 = vpop.f32.mrf.mxu0
        %v2353 = vadd.f32 %v1501, %v2352
        %2354 = vmatmul.bf16.gmra.mxu0 %v1385
        %v2355 = vpop.f32.mrf.mxu0
        %v2356 = vadd.f32 %v1501, %v2355
        %v2357 = vpop.f32.mrf.mxu0
        %v2358 = vadd.f32 %v1501, %v2357
        %2359 = vmatmul.bf16.gmra.mxu0 %v1389
        %v2360 = vpop.f32.mrf.mxu0
        %v2361 = vadd.f32 %v1501, %v2360
        %v2362 = vpop.f32.mrf.mxu0
        %v2363 = vadd.f32 %v1501, %v2362
        %2364 = vmatmul.bf16.gmra.mxu0 %v1393
        %v2365 = vpop.f32.mrf.mxu0
        %v2366 = vadd.f32 %v1501, %v2365
        %v2367 = vpop.f32.mrf.mxu0
        %v2368 = vadd.f32 %v1501, %v2367
        %2369 = vdwg.mxu0
        %2370 = vmatpush.bf16.msra.mxu0 %v1802
        %2371 = vmatpush.bf16.msra.mxu0 %v1799
        %2372 = vmatpush.bf16.msra.mxu0 %v1796
        %2373 = vmatpush.bf16.msra.mxu0 %v1793
        %2374 = vmatpush.bf16.msra.mxu0 %v1790
        %2375 = vmatpush.bf16.msra.mxu0 %v1787
        %2376 = vmatpush.bf16.msra.mxu0 %v1784
        %2377 = vmatpush.bf16.msra.mxu0 %v1781
        %2378 = vmatmul.bf16.gmra.mxu0 %v1366
        %v2379 = vpop.f32.mrf.mxu0
        %v2380 = vadd.f32 %v2331, %v2379
        %v2381 = vpop.f32.mrf.mxu0
        %v2382 = vadd.f32 %v2333, %v2381
        %2383 = vmatmul.bf16.gmra.mxu0 %v1370
        %v2384 = vpop.f32.mrf.mxu0
        %v2385 = vadd.f32 %v2336, %v2384
        %v2386 = vpop.f32.mrf.mxu0
        %v2387 = vadd.f32 %v2338, %v2386
        %2388 = vmatmul.bf16.gmra.mxu0 %v1374
        %v2389 = vpop.f32.mrf.mxu0
        %v2390 = vadd.f32 %v2341, %v2389
        %v2391 = vpop.f32.mrf.mxu0
        %v2392 = vadd.f32 %v2343, %v2391
        %2393 = vmatmul.bf16.gmra.mxu0 %v1378
        %v2394 = vpop.f32.mrf.mxu0
        %v2395 = vadd.f32 %v2346, %v2394
        %v2396 = vpop.f32.mrf.mxu0
        %v2397 = vadd.f32 %v2348, %v2396
        %2398 = vmatmul.bf16.gmra.mxu0 %v1382
        %v2399 = vpop.f32.mrf.mxu0
        %v2400 = vadd.f32 %v2351, %v2399
        %v2401 = vpop.f32.mrf.mxu0
        %v2402 = vadd.f32 %v2353, %v2401
        %2403 = vmatmul.bf16.gmra.mxu0 %v1386
        %v2404 = vpop.f32.mrf.mxu0
        %v2405 = vadd.f32 %v2356, %v2404
        %v2406 = vpop.f32.mrf.mxu0
        %v2407 = vadd.f32 %v2358, %v2406
        %2408 = vmatmul.bf16.gmra.mxu0 %v1390
        %v2409 = vpop.f32.mrf.mxu0
        %v2410 = vadd.f32 %v2361, %v2409
        %v2411 = vpop.f32.mrf.mxu0
        %v2412 = vadd.f32 %v2363, %v2411
        %2413 = vmatmul.bf16.gmra.mxu0 %v1394
        %v2414 = vpop.f32.mrf.mxu0
        %v2415 = vadd.f32 %v2366, %v2414
        %v2416 = vpop.f32.mrf.mxu0
        %v2417 = vadd.f32 %v2368, %v2416
        %2418 = vdwg.mxu0
        %2419 = vmatpush.bf16.msra.mxu0 %v1826
        %2420 = vmatpush.bf16.msra.mxu0 %v1823
        %2421 = vmatpush.bf16.msra.mxu0 %v1820
        %2422 = vmatpush.bf16.msra.mxu0 %v1817
        %2423 = vmatpush.bf16.msra.mxu0 %v1814
        %2424 = vmatpush.bf16.msra.mxu0 %v1811
        %2425 = vmatpush.bf16.msra.mxu0 %v1808
        %2426 = vmatpush.bf16.msra.mxu0 %v1805
        %2427 = vmatmul.bf16.gmra.mxu0 %v1367
        %v2428 = vpop.f32.mrf.mxu0
        %v2429 = vadd.f32 %v2380, %v2428
        %v2430 = vpop.f32.mrf.mxu0
        %v2431 = vadd.f32 %v2382, %v2430
        %2432 = vmatmul.bf16.gmra.mxu0 %v1371
        %v2433 = vpop.f32.mrf.mxu0
        %v2434 = vadd.f32 %v2385, %v2433
        %v2435 = vpop.f32.mrf.mxu0
        %v2436 = vadd.f32 %v2387, %v2435
        %2437 = vmatmul.bf16.gmra.mxu0 %v1375
        %v2438 = vpop.f32.mrf.mxu0
        %v2439 = vadd.f32 %v2390, %v2438
        %v2440 = vpop.f32.mrf.mxu0
        %v2441 = vadd.f32 %v2392, %v2440
        %2442 = vmatmul.bf16.gmra.mxu0 %v1379
        %v2443 = vpop.f32.mrf.mxu0
        %v2444 = vadd.f32 %v2395, %v2443
        %v2445 = vpop.f32.mrf.mxu0
        %v2446 = vadd.f32 %v2397, %v2445
        %2447 = vmatmul.bf16.gmra.mxu0 %v1383
        %v2448 = vpop.f32.mrf.mxu0
        %v2449 = vadd.f32 %v2400, %v2448
        %v2450 = vpop.f32.mrf.mxu0
        %v2451 = vadd.f32 %v2402, %v2450
        %2452 = vmatmul.bf16.gmra.mxu0 %v1387
        %v2453 = vpop.f32.mrf.mxu0
        %v2454 = vadd.f32 %v2405, %v2453
        %v2455 = vpop.f32.mrf.mxu0
        %v2456 = vadd.f32 %v2407, %v2455
        %2457 = vmatmul.bf16.gmra.mxu0 %v1391
        %v2458 = vpop.f32.mrf.mxu0
        %v2459 = vadd.f32 %v2410, %v2458
        %v2460 = vpop.f32.mrf.mxu0
        %v2461 = vadd.f32 %v2412, %v2460
        %2462 = vmatmul.bf16.gmra.mxu0 %v1395
        %v2463 = vpop.f32.mrf.mxu0
        %v2464 = vadd.f32 %v2415, %v2463
        %v2465 = vpop.f32.mrf.mxu0
        %v2466 = vadd.f32 %v2417, %v2465
        %2467 = vdwg.mxu0
        %2468 = vmatpush.bf16.msra.mxu0 0
        %2469 = vmatpush.bf16.msra.mxu0 0
        %2470 = vmatpush.bf16.msra.mxu0 0
        %2471 = vmatpush.bf16.msra.mxu0 0
        %2472 = vmatpush.bf16.msra.mxu0 0
        %2473 = vmatpush.bf16.msra.mxu0 0
        %2474 = vmatpush.bf16.msra.mxu0 0
        %2475 = vmatpush.bf16.msra.mxu0 %v1829
        %2476 = vmatmul.bf16.gmra.mxu0 %v1906
        %v2477 = vpop.f32.mrf.mxu0
        %v2478 = vadd.f32 %v2429, %v2477
        %v2479 = vpop.f32.mrf.mxu0
        %v2480 = vadd.f32 %v2431, %v2479
        %2481 = vmatmul.bf16.gmra.mxu0 %v1909
        %v2482 = vpop.f32.mrf.mxu0
        %v2483 = vadd.f32 %v2434, %v2482
        %v2484 = vpop.f32.mrf.mxu0
        %v2485 = vadd.f32 %v2436, %v2484
        %2486 = vmatmul.bf16.gmra.mxu0 %v1912
        %v2487 = vpop.f32.mrf.mxu0
        %v2488 = vadd.f32 %v2439, %v2487
        %v2489 = vpop.f32.mrf.mxu0
        %v2490 = vadd.f32 %v2441, %v2489
        %2491 = vmatmul.bf16.gmra.mxu0 %v1915
        %v2492 = vpop.f32.mrf.mxu0
        %v2493 = vadd.f32 %v2444, %v2492
        %v2494 = vpop.f32.mrf.mxu0
        %v2495 = vadd.f32 %v2446, %v2494
        %2496 = vmatmul.bf16.gmra.mxu0 %v1918
        %v2497 = vpop.f32.mrf.mxu0
        %v2498 = vadd.f32 %v2449, %v2497
        %v2499 = vpop.f32.mrf.mxu0
        %v2500 = vadd.f32 %v2451, %v2499
        %2501 = vmatmul.bf16.gmra.mxu0 %v1921
        %v2502 = vpop.f32.mrf.mxu0
        %v2503 = vadd.f32 %v2454, %v2502
        %v2504 = vpop.f32.mrf.mxu0
        %v2505 = vadd.f32 %v2456, %v2504
        %2506 = vmatmul.bf16.gmra.mxu0 %v1924
        %v2507 = vpop.f32.mrf.mxu0
        %v2508 = vadd.f32 %v2459, %v2507
        %v2509 = vpop.f32.mrf.mxu0
        %v2510 = vadd.f32 %v2461, %v2509
        %2511 = vmatmul.bf16.gmra.mxu0 %v1927
        %v2512 = vpop.f32.mrf.mxu0
        %v2513 = vadd.f32 %v2464, %v2512
        %v2514 = vpop.f32.mrf.mxu0
        %v2515 = vadd.f32 %v2466, %v2514
        %2516 = vdwg.mxu0
        %v2517 = vld [vmem:[%s4] ss:$4 sm:$0x7]
        %2519 = vset.pattern.permute.xlu0 16
        %2520 = vperm.xlu0 %2519, %v273
        %v2521 = vpop.permute.xlu0 %2520
        %2524 = vset.pattern.permute.xlu0 16
        %2525 = vperm.xlu0 %2524, %v274
        %v2526 = vpop.permute.xlu0 %2525
        %2529 = vset.pattern.permute.xlu0 16
        %2530 = vperm.xlu0 %2529, %v275
        %v2531 = vpop.permute.xlu0 %2530
        %2534 = vset.pattern.permute.xlu0 16
        %2535 = vperm.xlu0 %2534, %v276
        %v2536 = vpop.permute.xlu0 %2535
        %2539 = vset.pattern.permute.xlu0 16
        %2540 = vperm.xlu0 %2539, %v277
        %v2541 = vpop.permute.xlu0 %2540
        %2544 = vset.pattern.permute.xlu0 16
        %2545 = vperm.xlu0 %2544, %v278
        %v2546 = vpop.permute.xlu0 %2545
        %2549 = vset.pattern.permute.xlu0 16
        %2550 = vperm.xlu0 %2549, %v279
        %v2551 = vpop.permute.xlu0 %2550
        %2554 = vset.pattern.permute.xlu0 16
        %2555 = vperm.xlu0 %2554, %v280
        %v2556 = vpop.permute.xlu0 %2555
        %2559 = vset.pattern.permute.xlu0 16
        %2560 = vperm.xlu0 %2559, %v281
        %v2561 = vpop.permute.xlu0 %2560
        %2564 = vset.pattern.permute.xlu0 16
        %2565 = vperm.xlu0 %2564, %v282
        %v2566 = vpop.permute.xlu0 %2565
        %2569 = vset.pattern.permute.xlu0 16
        %2570 = vperm.xlu0 %2569, %v283
        %v2571 = vpop.permute.xlu0 %2570
        %2574 = vset.pattern.permute.xlu0 16
        %2575 = vperm.xlu0 %2574, %v284
        %v2576 = vpop.permute.xlu0 %2575
        %2579 = vset.pattern.permute.xlu0 16
        %2580 = vperm.xlu0 %2579, %v285
        %v2581 = vpop.permute.xlu0 %2580
        %2584 = vset.pattern.permute.xlu0 16
        %2585 = vperm.xlu0 %2584, %v286
        %v2586 = vpop.permute.xlu0 %2585
        %2589 = vset.pattern.permute.xlu0 16
        %2590 = vperm.xlu0 %2589, %v287
        %v2591 = vpop.permute.xlu0 %2590
        %2594 = vset.pattern.permute.xlu0 16
        %2595 = vperm.xlu0 %2594, %v288
        %v2596 = vpop.permute.xlu0 %2595
        %v2599 = vperm.slane %v2517, 0
        %v2600 = vperm.slane %v2517, 1
        %v2601 = vperm.slane %v2517, 2
        %v2605 = vmul.f32 %v2521, %v2599
        %v2606 = vmul.f32 %v2521, %v2600
        %v2607 = vmul.f32 %v2521, %v2601
        %v2608 = vmul.f32 %v2526, %v2599
        %v2609 = vmul.f32 %v2526, %v2600
        %v2610 = vmul.f32 %v2526, %v2601
        %v2611 = vmul.f32 %v2531, %v2599
        %v2612 = vmul.f32 %v2531, %v2600
        %v2613 = vmul.f32 %v2531, %v2601
        %v2614 = vmul.f32 %v2536, %v2599
        %v2615 = vmul.f32 %v2536, %v2600
        %v2616 = vmul.f32 %v2536, %v2601
        %v2617 = vmul.f32 %v2541, %v2599
        %v2618 = vmul.f32 %v2541, %v2600
        %v2619 = vmul.f32 %v2541, %v2601
        %v2620 = vmul.f32 %v2546, %v2599
        %v2621 = vmul.f32 %v2546, %v2600
        %v2622 = vmul.f32 %v2546, %v2601
        %v2623 = vmul.f32 %v2551, %v2599
        %v2624 = vmul.f32 %v2551, %v2600
        %v2625 = vmul.f32 %v2551, %v2601
        %v2626 = vmul.f32 %v2556, %v2599
        %v2627 = vmul.f32 %v2556, %v2600
        %v2628 = vmul.f32 %v2556, %v2601
        %v2629 = vmul.f32 %v2561, %v2599
        %v2630 = vmul.f32 %v2561, %v2600
        %v2631 = vmul.f32 %v2561, %v2601
        %v2632 = vmul.f32 %v2566, %v2599
        %v2633 = vmul.f32 %v2566, %v2600
        %v2634 = vmul.f32 %v2566, %v2601
        %v2635 = vmul.f32 %v2571, %v2599
        %v2636 = vmul.f32 %v2571, %v2600
        %v2637 = vmul.f32 %v2571, %v2601
        %v2638 = vmul.f32 %v2576, %v2599
        %v2639 = vmul.f32 %v2576, %v2600
        %v2640 = vmul.f32 %v2576, %v2601
        %v2641 = vmul.f32 %v2581, %v2599
        %v2642 = vmul.f32 %v2581, %v2600
        %v2643 = vmul.f32 %v2581, %v2601
        %v2644 = vmul.f32 %v2586, %v2599
        %v2645 = vmul.f32 %v2586, %v2600
        %v2646 = vmul.f32 %v2586, %v2601
        %v2647 = vmul.f32 %v2591, %v2599
        %v2648 = vmul.f32 %v2591, %v2600
        %v2649 = vmul.f32 %v2591, %v2601
        %v2650 = vmul.f32 %v2596, %v2599
        %v2651 = vmul.f32 %v2596, %v2600
        %v2652 = vmul.f32 %v2596, %v2601
        %v2653 = vadd.f32 %v2086, %v2605
        %v2654 = vadd.f32 %v2282, %v2606
        %v2655 = vadd.f32 %v2478, %v2607
        %v2656 = vadd.f32 %v2088, %v2608
        %v2657 = vadd.f32 %v2284, %v2609
        %v2658 = vadd.f32 %v2480, %v2610
        %v2659 = vadd.f32 %v2091, %v2611
        %v2660 = vadd.f32 %v2287, %v2612
        %v2661 = vadd.f32 %v2483, %v2613
        %v2662 = vadd.f32 %v2093, %v2614
        %v2663 = vadd.f32 %v2289, %v2615
        %v2664 = vadd.f32 %v2485, %v2616
        %v2665 = vadd.f32 %v2096, %v2617
        %v2666 = vadd.f32 %v2292, %v2618
        %v2667 = vadd.f32 %v2488, %v2619
        %v2668 = vadd.f32 %v2098, %v2620
        %v2669 = vadd.f32 %v2294, %v2621
        %v2670 = vadd.f32 %v2490, %v2622
        %v2671 = vadd.f32 %v2101, %v2623
        %v2672 = vadd.f32 %v2297, %v2624
        %v2673 = vadd.f32 %v2493, %v2625
        %v2674 = vadd.f32 %v2103, %v2626
        %v2675 = vadd.f32 %v2299, %v2627
        %v2676 = vadd.f32 %v2495, %v2628
        %v2677 = vadd.f32 %v2106, %v2629
        %v2678 = vadd.f32 %v2302, %v2630
        %v2679 = vadd.f32 %v2498, %v2631
        %v2680 = vadd.f32 %v2108, %v2632
        %v2681 = vadd.f32 %v2304, %v2633
        %v2682 = vadd.f32 %v2500, %v2634
        %v2683 = vadd.f32 %v2111, %v2635
        %v2684 = vadd.f32 %v2307, %v2636
        %v2685 = vadd.f32 %v2503, %v2637
        %v2686 = vadd.f32 %v2113, %v2638
        %v2687 = vadd.f32 %v2309, %v2639
        %v2688 = vadd.f32 %v2505, %v2640
        %v2689 = vadd.f32 %v2116, %v2641
        %v2690 = vadd.f32 %v2312, %v2642
        %v2691 = vadd.f32 %v2508, %v2643
        %v2692 = vadd.f32 %v2118, %v2644
        %v2693 = vadd.f32 %v2314, %v2645
        %v2694 = vadd.f32 %v2510, %v2646
        %v2695 = vadd.f32 %v2121, %v2647
        %v2696 = vadd.f32 %v2317, %v2648
        %v2697 = vadd.f32 %v2513, %v2649
        %v2698 = vadd.f32 %v2123, %v2650
        %v2699 = vadd.f32 %v2319, %v2651
        %v2700 = vadd.f32 %v2515, %v2652
        %s2701 = scalar_lea.vmem %s4, 1
        %v2702 = vld [vmem:[%s2701] ss:$4 sm:$0x7]
        %2703 = vset.pattern.permute.xlu0 17
        %2704 = vperm.xlu0 %2703, %v273
        %v2705 = vpop.permute.xlu0 %2704
        %2707 = vset.pattern.permute.xlu0 17
        %2708 = vperm.xlu0 %2707, %v274
        %v2709 = vpop.permute.xlu0 %2708
        %2711 = vset.pattern.permute.xlu0 17
        %2712 = vperm.xlu0 %2711, %v275
        %v2713 = vpop.permute.xlu0 %2712
        %2715 = vset.pattern.permute.xlu0 17
        %2716 = vperm.xlu0 %2715, %v276
        %v2717 = vpop.permute.xlu0 %2716
        %2719 = vset.pattern.permute.xlu0 17
        %2720 = vperm.xlu0 %2719, %v277
        %v2721 = vpop.permute.xlu0 %2720
        %2723 = vset.pattern.permute.xlu0 17
        %2724 = vperm.xlu0 %2723, %v278
        %v2725 = vpop.permute.xlu0 %2724
        %2727 = vset.pattern.permute.xlu0 17
        %2728 = vperm.xlu0 %2727, %v279
        %v2729 = vpop.permute.xlu0 %2728
        %2731 = vset.pattern.permute.xlu0 17
        %2732 = vperm.xlu0 %2731, %v280
        %v2733 = vpop.permute.xlu0 %2732
        %2735 = vset.pattern.permute.xlu0 17
        %2736 = vperm.xlu0 %2735, %v281
        %v2737 = vpop.permute.xlu0 %2736
        %2739 = vset.pattern.permute.xlu0 17
        %2740 = vperm.xlu0 %2739, %v282
        %v2741 = vpop.permute.xlu0 %2740
        %2743 = vset.pattern.permute.xlu0 17
        %2744 = vperm.xlu0 %2743, %v283
        %v2745 = vpop.permute.xlu0 %2744
        %2747 = vset.pattern.permute.xlu0 17
        %2748 = vperm.xlu0 %2747, %v284
        %v2749 = vpop.permute.xlu0 %2748
        %2751 = vset.pattern.permute.xlu0 17
        %2752 = vperm.xlu0 %2751, %v285
        %v2753 = vpop.permute.xlu0 %2752
        %2755 = vset.pattern.permute.xlu0 17
        %2756 = vperm.xlu0 %2755, %v286
        %v2757 = vpop.permute.xlu0 %2756
        %2759 = vset.pattern.permute.xlu0 17
        %2760 = vperm.xlu0 %2759, %v287
        %v2761 = vpop.permute.xlu0 %2760
        %2763 = vset.pattern.permute.xlu0 17
        %2764 = vperm.xlu0 %2763, %v288
        %v2765 = vpop.permute.xlu0 %2764
        %v2768 = vperm.slane %v2702, 0
        %v2769 = vperm.slane %v2702, 1
        %v2770 = vperm.slane %v2702, 2
        %v2774 = vmul.f32 %v2705, %v2768
        %v2775 = vmul.f32 %v2705, %v2769
        %v2776 = vmul.f32 %v2705, %v2770
        %v2777 = vmul.f32 %v2709, %v2768
        %v2778 = vmul.f32 %v2709, %v2769
        %v2779 = vmul.f32 %v2709, %v2770
        %v2780 = vmul.f32 %v2713, %v2768
        %v2781 = vmul.f32 %v2713, %v2769
        %v2782 = vmul.f32 %v2713, %v2770
        %v2783 = vmul.f32 %v2717, %v2768
        %v2784 = vmul.f32 %v2717, %v2769
        %v2785 = vmul.f32 %v2717, %v2770
        %v2786 = vmul.f32 %v2721, %v2768
        %v2787 = vmul.f32 %v2721, %v2769
        %v2788 = vmul.f32 %v2721, %v2770
        %v2789 = vmul.f32 %v2725, %v2768
        %v2790 = vmul.f32 %v2725, %v2769
        %v2791 = vmul.f32 %v2725, %v2770
        %v2792 = vmul.f32 %v2729, %v2768
        %v2793 = vmul.f32 %v2729, %v2769
        %v2794 = vmul.f32 %v2729, %v2770
        %v2795 = vmul.f32 %v2733, %v2768
        %v2796 = vmul.f32 %v2733, %v2769
        %v2797 = vmul.f32 %v2733, %v2770
        %v2798 = vmul.f32 %v2737, %v2768
        %v2799 = vmul.f32 %v2737, %v2769
        %v2800 = vmul.f32 %v2737, %v2770
        %v2801 = vmul.f32 %v2741, %v2768
        %v2802 = vmul.f32 %v2741, %v2769
        %v2803 = vmul.f32 %v2741, %v2770
        %v2804 = vmul.f32 %v2745, %v2768
        %v2805 = vmul.f32 %v2745, %v2769
        %v2806 = vmul.f32 %v2745, %v2770
        %v2807 = vmul.f32 %v2749, %v2768
        %v2808 = vmul.f32 %v2749, %v2769
        %v2809 = vmul.f32 %v2749, %v2770
        %v2810 = vmul.f32 %v2753, %v2768
        %v2811 = vmul.f32 %v2753, %v2769
        %v2812 = vmul.f32 %v2753, %v2770
        %v2813 = vmul.f32 %v2757, %v2768
        %v2814 = vmul.f32 %v2757, %v2769
        %v2815 = vmul.f32 %v2757, %v2770
        %v2816 = vmul.f32 %v2761, %v2768
        %v2817 = vmul.f32 %v2761, %v2769
        %v2818 = vmul.f32 %v2761, %v2770
        %v2819 = vmul.f32 %v2765, %v2768
        %v2820 = vmul.f32 %v2765, %v2769
        %v2821 = vmul.f32 %v2765, %v2770
        %v2822 = vadd.f32 %v2653, %v2774
        %v2823 = vadd.f32 %v2654, %v2775
        %v2824 = vadd.f32 %v2655, %v2776
        %v2825 = vadd.f32 %v2656, %v2777
        %v2826 = vadd.f32 %v2657, %v2778
        %v2827 = vadd.f32 %v2658, %v2779
        %v2828 = vadd.f32 %v2659, %v2780
        %v2829 = vadd.f32 %v2660, %v2781
        %v2830 = vadd.f32 %v2661, %v2782
        %v2831 = vadd.f32 %v2662, %v2783
        %v2832 = vadd.f32 %v2663, %v2784
        %v2833 = vadd.f32 %v2664, %v2785
        %v2834 = vadd.f32 %v2665, %v2786
        %v2835 = vadd.f32 %v2666, %v2787
        %v2836 = vadd.f32 %v2667, %v2788
        %v2837 = vadd.f32 %v2668, %v2789
        %v2838 = vadd.f32 %v2669, %v2790
        %v2839 = vadd.f32 %v2670, %v2791
        %v2840 = vadd.f32 %v2671, %v2792
        %v2841 = vadd.f32 %v2672, %v2793
        %v2842 = vadd.f32 %v2673, %v2794
        %v2843 = vadd.f32 %v2674, %v2795
        %v2844 = vadd.f32 %v2675, %v2796
        %v2845 = vadd.f32 %v2676, %v2797
        %v2846 = vadd.f32 %v2677, %v2798
        %v2847 = vadd.f32 %v2678, %v2799
        %v2848 = vadd.f32 %v2679, %v2800
        %v2849 = vadd.f32 %v2680, %v2801
        %v2850 = vadd.f32 %v2681, %v2802
        %v2851 = vadd.f32 %v2682, %v2803
        %v2852 = vadd.f32 %v2683, %v2804
        %v2853 = vadd.f32 %v2684, %v2805
        %v2854 = vadd.f32 %v2685, %v2806
        %v2855 = vadd.f32 %v2686, %v2807
        %v2856 = vadd.f32 %v2687, %v2808
        %v2857 = vadd.f32 %v2688, %v2809
        %v2858 = vadd.f32 %v2689, %v2810
        %v2859 = vadd.f32 %v2690, %v2811
        %v2860 = vadd.f32 %v2691, %v2812
        %v2861 = vadd.f32 %v2692, %v2813
        %v2862 = vadd.f32 %v2693, %v2814
        %v2863 = vadd.f32 %v2694, %v2815
        %v2864 = vadd.f32 %v2695, %v2816
        %v2865 = vadd.f32 %v2696, %v2817
        %v2866 = vadd.f32 %v2697, %v2818
        %v2867 = vadd.f32 %v2698, %v2819
        %v2868 = vadd.f32 %v2699, %v2820
        %v2869 = vadd.f32 %v2700, %v2821
        %s2870 = scalar_lea.vmem %s4, 2
        %v2871 = vld [vmem:[%s2870] ss:$4 sm:$0x7]
        %2872 = vset.pattern.permute.xlu0 18
        %2873 = vperm.xlu0 %2872, %v273
        %v2874 = vpop.permute.xlu0 %2873
        %2876 = vset.pattern.permute.xlu0 18
        %2877 = vperm.xlu0 %2876, %v274
        %v2878 = vpop.permute.xlu0 %2877
        %2880 = vset.pattern.permute.xlu0 18
        %2881 = vperm.xlu0 %2880, %v275
        %v2882 = vpop.permute.xlu0 %2881
        %2884 = vset.pattern.permute.xlu0 18
        %2885 = vperm.xlu0 %2884, %v276
        %v2886 = vpop.permute.xlu0 %2885
        %2888 = vset.pattern.permute.xlu0 18
        %2889 = vperm.xlu0 %2888, %v277
        %v2890 = vpop.permute.xlu0 %2889
        %2892 = vset.pattern.permute.xlu0 18
        %2893 = vperm.xlu0 %2892, %v278
        %v2894 = vpop.permute.xlu0 %2893
        %2896 = vset.pattern.permute.xlu0 18
        %2897 = vperm.xlu0 %2896, %v279
        %v2898 = vpop.permute.xlu0 %2897
        %2900 = vset.pattern.permute.xlu0 18
        %2901 = vperm.xlu0 %2900, %v280
        %v2902 = vpop.permute.xlu0 %2901
        %2904 = vset.pattern.permute.xlu0 18
        %2905 = vperm.xlu0 %2904, %v281
        %v2906 = vpop.permute.xlu0 %2905
        %2908 = vset.pattern.permute.xlu0 18
        %2909 = vperm.xlu0 %2908, %v282
        %v2910 = vpop.permute.xlu0 %2909
        %2912 = vset.pattern.permute.xlu0 18
        %2913 = vperm.xlu0 %2912, %v283
        %v2914 = vpop.permute.xlu0 %2913
        %2916 = vset.pattern.permute.xlu0 18
        %2917 = vperm.xlu0 %2916, %v284
        %v2918 = vpop.permute.xlu0 %2917
        %2920 = vset.pattern.permute.xlu0 18
        %2921 = vperm.xlu0 %2920, %v285
        %v2922 = vpop.permute.xlu0 %2921
        %2924 = vset.pattern.permute.xlu0 18
        %2925 = vperm.xlu0 %2924, %v286
        %v2926 = vpop.permute.xlu0 %2925
        %2928 = vset.pattern.permute.xlu0 18
        %2929 = vperm.xlu0 %2928, %v287
        %v2930 = vpop.permute.xlu0 %2929
        %2932 = vset.pattern.permute.xlu0 18
        %2933 = vperm.xlu0 %2932, %v288
        %v2934 = vpop.permute.xlu0 %2933
        %v2937 = vperm.slane %v2871, 0
        %v2938 = vperm.slane %v2871, 1
        %v2939 = vperm.slane %v2871, 2
        %v2943 = vmul.f32 %v2874, %v2937
        %v2944 = vmul.f32 %v2874, %v2938
        %v2945 = vmul.f32 %v2874, %v2939
        %v2946 = vmul.f32 %v2878, %v2937
        %v2947 = vmul.f32 %v2878, %v2938
        %v2948 = vmul.f32 %v2878, %v2939
        %v2949 = vmul.f32 %v2882, %v2937
        %v2950 = vmul.f32 %v2882, %v2938
        %v2951 = vmul.f32 %v2882, %v2939
        %v2952 = vmul.f32 %v2886, %v2937
        %v2953 = vmul.f32 %v2886, %v2938
        %v2954 = vmul.f32 %v2886, %v2939
        %v2955 = vmul.f32 %v2890, %v2937
        %v2956 = vmul.f32 %v2890, %v2938
        %v2957 = vmul.f32 %v2890, %v2939
        %v2958 = vmul.f32 %v2894, %v2937
        %v2959 = vmul.f32 %v2894, %v2938
        %v2960 = vmul.f32 %v2894, %v2939
        %v2961 = vmul.f32 %v2898, %v2937
        %v2962 = vmul.f32 %v2898, %v2938
        %v2963 = vmul.f32 %v2898, %v2939
        %v2964 = vmul.f32 %v2902, %v2937
        %v2965 = vmul.f32 %v2902, %v2938
        %v2966 = vmul.f32 %v2902, %v2939
        %v2967 = vmul.f32 %v2906, %v2937
        %v2968 = vmul.f32 %v2906, %v2938
        %v2969 = vmul.f32 %v2906, %v2939
        %v2970 = vmul.f32 %v2910, %v2937
        %v2971 = vmul.f32 %v2910, %v2938
        %v2972 = vmul.f32 %v2910, %v2939
        %v2973 = vmul.f32 %v2914, %v2937
        %v2974 = vmul.f32 %v2914, %v2938
        %v2975 = vmul.f32 %v2914, %v2939
        %v2976 = vmul.f32 %v2918, %v2937
        %v2977 = vmul.f32 %v2918, %v2938
        %v2978 = vmul.f32 %v2918, %v2939
        %v2979 = vmul.f32 %v2922, %v2937
        %v2980 = vmul.f32 %v2922, %v2938
        %v2981 = vmul.f32 %v2922, %v2939
        %v2982 = vmul.f32 %v2926, %v2937
        %v2983 = vmul.f32 %v2926, %v2938
        %v2984 = vmul.f32 %v2926, %v2939
        %v2985 = vmul.f32 %v2930, %v2937
        %v2986 = vmul.f32 %v2930, %v2938
        %v2987 = vmul.f32 %v2930, %v2939
        %v2988 = vmul.f32 %v2934, %v2937
        %v2989 = vmul.f32 %v2934, %v2938
        %v2990 = vmul.f32 %v2934, %v2939
        %v2991 = vadd.f32 %v2822, %v2943
        %v2992 = vadd.f32 %v2823, %v2944
        %v2993 = vadd.f32 %v2824, %v2945
        %v2994 = vadd.f32 %v2825, %v2946
        %v2995 = vadd.f32 %v2826, %v2947
        %v2996 = vadd.f32 %v2827, %v2948
        %v2997 = vadd.f32 %v2828, %v2949
        %v2998 = vadd.f32 %v2829, %v2950
        %v2999 = vadd.f32 %v2830, %v2951
        %v3000 = vadd.f32 %v2831, %v2952
        %v3001 = vadd.f32 %v2832, %v2953
        %v3002 = vadd.f32 %v2833, %v2954
        %v3003 = vadd.f32 %v2834, %v2955
        %v3004 = vadd.f32 %v2835, %v2956
        %v3005 = vadd.f32 %v2836, %v2957
        %v3006 = vadd.f32 %v2837, %v2958
        %v3007 = vadd.f32 %v2838, %v2959
        %v3008 = vadd.f32 %v2839, %v2960
        %v3009 = vadd.f32 %v2840, %v2961
        %v3010 = vadd.f32 %v2841, %v2962
        %v3011 = vadd.f32 %v2842, %v2963
        %v3012 = vadd.f32 %v2843, %v2964
        %v3013 = vadd.f32 %v2844, %v2965
        %v3014 = vadd.f32 %v2845, %v2966
        %v3015 = vadd.f32 %v2846, %v2967
        %v3016 = vadd.f32 %v2847, %v2968
        %v3017 = vadd.f32 %v2848, %v2969
        %v3018 = vadd.f32 %v2849, %v2970
        %v3019 = vadd.f32 %v2850, %v2971
        %v3020 = vadd.f32 %v2851, %v2972
        %v3021 = vadd.f32 %v2852, %v2973
        %v3022 = vadd.f32 %v2853, %v2974
        %v3023 = vadd.f32 %v2854, %v2975
        %v3024 = vadd.f32 %v2855, %v2976
        %v3025 = vadd.f32 %v2856, %v2977
        %v3026 = vadd.f32 %v2857, %v2978
        %v3027 = vadd.f32 %v2858, %v2979
        %v3028 = vadd.f32 %v2859, %v2980
        %v3029 = vadd.f32 %v2860, %v2981
        %v3030 = vadd.f32 %v2861, %v2982
        %v3031 = vadd.f32 %v2862, %v2983
        %v3032 = vadd.f32 %v2863, %v2984
        %v3033 = vadd.f32 %v2864, %v2985
        %v3034 = vadd.f32 %v2865, %v2986
        %v3035 = vadd.f32 %v2866, %v2987
        %v3036 = vadd.f32 %v2867, %v2988
        %v3037 = vadd.f32 %v2868, %v2989
        %v3038 = vadd.f32 %v2869, %v2990
        %s3039 = scalar_lea.vmem %s4, 3
        %v3040 = vld [vmem:[%s3039] ss:$4 sm:$0x7]
        %3041 = vset.pattern.permute.xlu0 19
        %3042 = vperm.xlu0 %3041, %v273
        %v3043 = vpop.permute.xlu0 %3042
        %3045 = vset.pattern.permute.xlu0 19
        %3046 = vperm.xlu0 %3045, %v274
        %v3047 = vpop.permute.xlu0 %3046
        %3049 = vset.pattern.permute.xlu0 19
        %3050 = vperm.xlu0 %3049, %v275
        %v3051 = vpop.permute.xlu0 %3050
        %3053 = vset.pattern.permute.xlu0 19
        %3054 = vperm.xlu0 %3053, %v276
        %v3055 = vpop.permute.xlu0 %3054
        %3057 = vset.pattern.permute.xlu0 19
        %3058 = vperm.xlu0 %3057, %v277
        %v3059 = vpop.permute.xlu0 %3058
        %3061 = vset.pattern.permute.xlu0 19
        %3062 = vperm.xlu0 %3061, %v278
        %v3063 = vpop.permute.xlu0 %3062
        %3065 = vset.pattern.permute.xlu0 19
        %3066 = vperm.xlu0 %3065, %v279
        %v3067 = vpop.permute.xlu0 %3066
        %3069 = vset.pattern.permute.xlu0 19
        %3070 = vperm.xlu0 %3069, %v280
        %v3071 = vpop.permute.xlu0 %3070
        %3073 = vset.pattern.permute.xlu0 19
        %3074 = vperm.xlu0 %3073, %v281
        %v3075 = vpop.permute.xlu0 %3074
        %3077 = vset.pattern.permute.xlu0 19
        %3078 = vperm.xlu0 %3077, %v282
        %v3079 = vpop.permute.xlu0 %3078
        %3081 = vset.pattern.permute.xlu0 19
        %3082 = vperm.xlu0 %3081, %v283
        %v3083 = vpop.permute.xlu0 %3082
        %3085 = vset.pattern.permute.xlu0 19
        %3086 = vperm.xlu0 %3085, %v284
        %v3087 = vpop.permute.xlu0 %3086
        %3089 = vset.pattern.permute.xlu0 19
        %3090 = vperm.xlu0 %3089, %v285
        %v3091 = vpop.permute.xlu0 %3090
        %3093 = vset.pattern.permute.xlu0 19
        %3094 = vperm.xlu0 %3093, %v286
        %v3095 = vpop.permute.xlu0 %3094
        %3097 = vset.pattern.permute.xlu0 19
        %3098 = vperm.xlu0 %3097, %v287
        %v3099 = vpop.permute.xlu0 %3098
        %3101 = vset.pattern.permute.xlu0 19
        %3102 = vperm.xlu0 %3101, %v288
        %v3103 = vpop.permute.xlu0 %3102
        %v3106 = vperm.slane %v3040, 0
        %v3107 = vperm.slane %v3040, 1
        %v3108 = vperm.slane %v3040, 2
        %v3112 = vmul.f32 %v3043, %v3106
        %v3113 = vmul.f32 %v3043, %v3107
        %v3114 = vmul.f32 %v3043, %v3108
        %v3115 = vmul.f32 %v3047, %v3106
        %v3116 = vmul.f32 %v3047, %v3107
        %v3117 = vmul.f32 %v3047, %v3108
        %v3118 = vmul.f32 %v3051, %v3106
        %v3119 = vmul.f32 %v3051, %v3107
        %v3120 = vmul.f32 %v3051, %v3108
        %v3121 = vmul.f32 %v3055, %v3106
        %v3122 = vmul.f32 %v3055, %v3107
        %v3123 = vmul.f32 %v3055, %v3108
        %v3124 = vmul.f32 %v3059, %v3106
        %v3125 = vmul.f32 %v3059, %v3107
        %v3126 = vmul.f32 %v3059, %v3108
        %v3127 = vmul.f32 %v3063, %v3106
        %v3128 = vmul.f32 %v3063, %v3107
        %v3129 = vmul.f32 %v3063, %v3108
        %v3130 = vmul.f32 %v3067, %v3106
        %v3131 = vmul.f32 %v3067, %v3107
        %v3132 = vmul.f32 %v3067, %v3108
        %v3133 = vmul.f32 %v3071, %v3106
        %v3134 = vmul.f32 %v3071, %v3107
        %v3135 = vmul.f32 %v3071, %v3108
        %v3136 = vmul.f32 %v3075, %v3106
        %v3137 = vmul.f32 %v3075, %v3107
        %v3138 = vmul.f32 %v3075, %v3108
        %v3139 = vmul.f32 %v3079, %v3106
        %v3140 = vmul.f32 %v3079, %v3107
        %v3141 = vmul.f32 %v3079, %v3108
        %v3142 = vmul.f32 %v3083, %v3106
        %v3143 = vmul.f32 %v3083, %v3107
        %v3144 = vmul.f32 %v3083, %v3108
        %v3145 = vmul.f32 %v3087, %v3106
        %v3146 = vmul.f32 %v3087, %v3107
        %v3147 = vmul.f32 %v3087, %v3108
        %v3148 = vmul.f32 %v3091, %v3106
        %v3149 = vmul.f32 %v3091, %v3107
        %v3150 = vmul.f32 %v3091, %v3108
        %v3151 = vmul.f32 %v3095, %v3106
        %v3152 = vmul.f32 %v3095, %v3107
        %v3153 = vmul.f32 %v3095, %v3108
        %v3154 = vmul.f32 %v3099, %v3106
        %v3155 = vmul.f32 %v3099, %v3107
        %v3156 = vmul.f32 %v3099, %v3108
        %v3157 = vmul.f32 %v3103, %v3106
        %v3158 = vmul.f32 %v3103, %v3107
        %v3159 = vmul.f32 %v3103, %v3108
        %v3160 = vadd.f32 %v2991, %v3112
        %v3161 = vadd.f32 %v2992, %v3113
        %v3162 = vadd.f32 %v2993, %v3114
        %v3163 = vadd.f32 %v2994, %v3115
        %v3164 = vadd.f32 %v2995, %v3116
        %v3165 = vadd.f32 %v2996, %v3117
        %v3166 = vadd.f32 %v2997, %v3118
        %v3167 = vadd.f32 %v2998, %v3119
        %v3168 = vadd.f32 %v2999, %v3120
        %v3169 = vadd.f32 %v3000, %v3121
        %v3170 = vadd.f32 %v3001, %v3122
        %v3171 = vadd.f32 %v3002, %v3123
        %v3172 = vadd.f32 %v3003, %v3124
        %v3173 = vadd.f32 %v3004, %v3125
        %v3174 = vadd.f32 %v3005, %v3126
        %v3175 = vadd.f32 %v3006, %v3127
        %v3176 = vadd.f32 %v3007, %v3128
        %v3177 = vadd.f32 %v3008, %v3129
        %v3178 = vadd.f32 %v3009, %v3130
        %v3179 = vadd.f32 %v3010, %v3131
        %v3180 = vadd.f32 %v3011, %v3132
        %v3181 = vadd.f32 %v3012, %v3133
        %v3182 = vadd.f32 %v3013, %v3134
        %v3183 = vadd.f32 %v3014, %v3135
        %v3184 = vadd.f32 %v3015, %v3136
        %v3185 = vadd.f32 %v3016, %v3137
        %v3186 = vadd.f32 %v3017, %v3138
        %v3187 = vadd.f32 %v3018, %v3139
        %v3188 = vadd.f32 %v3019, %v3140
        %v3189 = vadd.f32 %v3020, %v3141
        %v3190 = vadd.f32 %v3021, %v3142
        %v3191 = vadd.f32 %v3022, %v3143
        %v3192 = vadd.f32 %v3023, %v3144
        %v3193 = vadd.f32 %v3024, %v3145
        %v3194 = vadd.f32 %v3025, %v3146
        %v3195 = vadd.f32 %v3026, %v3147
        %v3196 = vadd.f32 %v3027, %v3148
        %v3197 = vadd.f32 %v3028, %v3149
        %v3198 = vadd.f32 %v3029, %v3150
        %v3199 = vadd.f32 %v3030, %v3151
        %v3200 = vadd.f32 %v3031, %v3152
        %v3201 = vadd.f32 %v3032, %v3153
        %v3202 = vadd.f32 %v3033, %v3154
        %v3203 = vadd.f32 %v3034, %v3155
        %v3204 = vadd.f32 %v3035, %v3156
        %v3205 = vadd.f32 %v3036, %v3157
        %v3206 = vadd.f32 %v3037, %v3158
        %v3207 = vadd.f32 %v3038, %v3159
        %s3208 = scalar_lea.vmem %s5, 1
        %v3209 = vld [vmem:[%s3208] ss:$8 sm:$0x7]
        %s3210 = scalar_lea.vmem %s5, 2
        %v3211 = vld [vmem:[%s3210] ss:$8 sm:$0x7]
        %v3212 = vadd.f32 %v3160, %v3161
        %vm3213 = vcmask 359424
        %v3214 = vsel %vm3213, %v3162, 0.0
        %v3215 = vadd.f32 %v3212, %v3214
        %3216 = vadd.xlane.f32.xlu0 %v3215
        %v3217 = vpop.xlane.xlu0 %3216
        %v3218 = vadd.f32 %v3163, %v3164
        %v3219 = vsel %vm3213, %v3165, 0.0
        %v3220 = vadd.f32 %v3218, %v3219
        %3221 = vadd.xlane.f32.xlu0 %v3220
        %v3222 = vpop.xlane.xlu0 %3221
        %v3223 = vadd.f32 %v3166, %v3167
        %v3224 = vsel %vm3213, %v3168, 0.0
        %v3225 = vadd.f32 %v3223, %v3224
        %3226 = vadd.xlane.f32.xlu0 %v3225
        %v3227 = vpop.xlane.xlu0 %3226
        %v3228 = vadd.f32 %v3169, %v3170
        %v3229 = vsel %vm3213, %v3171, 0.0
        %v3230 = vadd.f32 %v3228, %v3229
        %3231 = vadd.xlane.f32.xlu0 %v3230
        %v3232 = vpop.xlane.xlu0 %3231
        %v3233 = vadd.f32 %v3172, %v3173
        %v3234 = vsel %vm3213, %v3174, 0.0
        %v3235 = vadd.f32 %v3233, %v3234
        %3236 = vadd.xlane.f32.xlu0 %v3235
        %v3237 = vpop.xlane.xlu0 %3236
        %v3238 = vadd.f32 %v3175, %v3176
        %v3239 = vsel %vm3213, %v3177, 0.0
        %v3240 = vadd.f32 %v3238, %v3239
        %3241 = vadd.xlane.f32.xlu0 %v3240
        %v3242 = vpop.xlane.xlu0 %3241
        %v3243 = vadd.f32 %v3178, %v3179
        %v3244 = vsel %vm3213, %v3180, 0.0
        %v3245 = vadd.f32 %v3243, %v3244
        %3246 = vadd.xlane.f32.xlu0 %v3245
        %v3247 = vpop.xlane.xlu0 %3246
        %v3248 = vadd.f32 %v3181, %v3182
        %v3249 = vsel %vm3213, %v3183, 0.0
        %v3250 = vadd.f32 %v3248, %v3249
        %3251 = vadd.xlane.f32.xlu0 %v3250
        %v3252 = vpop.xlane.xlu0 %3251
        %v3253 = vadd.f32 %v3184, %v3185
        %v3254 = vsel %vm3213, %v3186, 0.0
        %v3255 = vadd.f32 %v3253, %v3254
        %3256 = vadd.xlane.f32.xlu0 %v3255
        %v3257 = vpop.xlane.xlu0 %3256
        %v3258 = vadd.f32 %v3187, %v3188
        %v3259 = vsel %vm3213, %v3189, 0.0
        %v3260 = vadd.f32 %v3258, %v3259
        %3261 = vadd.xlane.f32.xlu0 %v3260
        %v3262 = vpop.xlane.xlu0 %3261
        %v3263 = vadd.f32 %v3190, %v3191
        %v3264 = vsel %vm3213, %v3192, 0.0
        %v3265 = vadd.f32 %v3263, %v3264
        %3266 = vadd.xlane.f32.xlu0 %v3265
        %v3267 = vpop.xlane.xlu0 %3266
        %v3268 = vadd.f32 %v3193, %v3194
        %v3269 = vsel %vm3213, %v3195, 0.0
        %v3270 = vadd.f32 %v3268, %v3269
        %3271 = vadd.xlane.f32.xlu0 %v3270
        %v3272 = vpop.xlane.xlu0 %3271
        %v3273 = vadd.f32 %v3196, %v3197
        %v3274 = vsel %vm3213, %v3198, 0.0
        %v3275 = vadd.f32 %v3273, %v3274
        %3276 = vadd.xlane.f32.xlu0 %v3275
        %v3277 = vpop.xlane.xlu0 %3276
        %v3278 = vadd.f32 %v3199, %v3200
        %v3279 = vsel %vm3213, %v3201, 0.0
        %v3280 = vadd.f32 %v3278, %v3279
        %3281 = vadd.xlane.f32.xlu0 %v3280
        %v3282 = vpop.xlane.xlu0 %3281
        %v3283 = vadd.f32 %v3202, %v3203
        %v3284 = vsel %vm3213, %v3204, 0.0
        %v3285 = vadd.f32 %v3283, %v3284
        %3286 = vadd.xlane.f32.xlu0 %v3285
        %v3287 = vpop.xlane.xlu0 %3286
        %v3288 = vadd.f32 %v3205, %v3206
        %v3289 = vsel %vm3213, %v3207, 0.0
        %v3290 = vadd.f32 %v3288, %v3289
        %3291 = vadd.xlane.f32.xlu0 %v3290
        %v3292 = vpop.xlane.xlu0 %3291
        %v3293 = vrcp.pop 300.0
        %v3294 = vmul.f32 300.0, %v3293
        %v3295 = vsub.f32 1.0, %v3294
        %v3296 = vmul.f32 %v3293, %v3295
        %v3297 = vadd.f32 %v3293, %v3296
        %vm3298 = vweird.f32 %v3293
        %v3299 = vsel %vm3298, %v3293, %v3297
        %v3300 = vmul.f32 %v3217, %v3299
        %v3301 = vmul.f32 %v3222, %v3299
        %v3302 = vmul.f32 %v3227, %v3299
        %v3303 = vmul.f32 %v3232, %v3299
        %v3304 = vmul.f32 %v3237, %v3299
        %v3305 = vmul.f32 %v3242, %v3299
        %v3306 = vmul.f32 %v3247, %v3299
        %v3307 = vmul.f32 %v3252, %v3299
        %v3308 = vmul.f32 %v3257, %v3299
        %v3309 = vmul.f32 %v3262, %v3299
        %v3310 = vmul.f32 %v3267, %v3299
        %v3311 = vmul.f32 %v3272, %v3299
        %v3312 = vmul.f32 %v3277, %v3299
        %v3313 = vmul.f32 %v3282, %v3299
        %v3314 = vmul.f32 %v3287, %v3299
        %v3315 = vmul.f32 %v3292, %v3299
        %v3316 = vsub.f32 %v3160, %v3300
        %v3317 = vsub.f32 %v3161, %v3300
        %v3318 = vsub.f32 %v3162, %v3300
        %v3319 = vsub.f32 %v3163, %v3301
        %v3320 = vsub.f32 %v3164, %v3301
        %v3321 = vsub.f32 %v3165, %v3301
        %v3322 = vsub.f32 %v3166, %v3302
        %v3323 = vsub.f32 %v3167, %v3302
        %v3324 = vsub.f32 %v3168, %v3302
        %v3325 = vsub.f32 %v3169, %v3303
        %v3326 = vsub.f32 %v3170, %v3303
        %v3327 = vsub.f32 %v3171, %v3303
        %v3328 = vsub.f32 %v3172, %v3304
        %v3329 = vsub.f32 %v3173, %v3304
        %v3330 = vsub.f32 %v3174, %v3304
        %v3331 = vsub.f32 %v3175, %v3305
        %v3332 = vsub.f32 %v3176, %v3305
        %v3333 = vsub.f32 %v3177, %v3305
        %v3334 = vsub.f32 %v3178, %v3306
        %v3335 = vsub.f32 %v3179, %v3306
        %v3336 = vsub.f32 %v3180, %v3306
        %v3337 = vsub.f32 %v3181, %v3307
        %v3338 = vsub.f32 %v3182, %v3307
        %v3339 = vsub.f32 %v3183, %v3307
        %v3340 = vsub.f32 %v3184, %v3308
        %v3341 = vsub.f32 %v3185, %v3308
        %v3342 = vsub.f32 %v3186, %v3308
        %v3343 = vsub.f32 %v3187, %v3309
        %v3344 = vsub.f32 %v3188, %v3309
        %v3345 = vsub.f32 %v3189, %v3309
        %v3346 = vsub.f32 %v3190, %v3310
        %v3347 = vsub.f32 %v3191, %v3310
        %v3348 = vsub.f32 %v3192, %v3310
        %v3349 = vsub.f32 %v3193, %v3311
        %v3350 = vsub.f32 %v3194, %v3311
        %v3351 = vsub.f32 %v3195, %v3311
        %v3352 = vsub.f32 %v3196, %v3312
        %v3353 = vsub.f32 %v3197, %v3312
        %v3354 = vsub.f32 %v3198, %v3312
        %v3355 = vsub.f32 %v3199, %v3313
        %v3356 = vsub.f32 %v3200, %v3313
        %v3357 = vsub.f32 %v3201, %v3313
        %v3358 = vsub.f32 %v3202, %v3314
        %v3359 = vsub.f32 %v3203, %v3314
        %v3360 = vsub.f32 %v3204, %v3314
        %v3361 = vsub.f32 %v3205, %v3315
        %v3362 = vsub.f32 %v3206, %v3315
        %v3363 = vsub.f32 %v3207, %v3315
        %v3364 = vmul.f32 %v3316, %v3316
        %v3365 = vmul.f32 %v3317, %v3317
        %v3366 = vmul.f32 %v3318, %v3318
        %v3367 = vmul.f32 %v3319, %v3319
        %v3368 = vmul.f32 %v3320, %v3320
        %v3369 = vmul.f32 %v3321, %v3321
        %v3370 = vmul.f32 %v3322, %v3322
        %v3371 = vmul.f32 %v3323, %v3323
        %v3372 = vmul.f32 %v3324, %v3324
        %v3373 = vmul.f32 %v3325, %v3325
        %v3374 = vmul.f32 %v3326, %v3326
        %v3375 = vmul.f32 %v3327, %v3327
        %v3376 = vmul.f32 %v3328, %v3328
        %v3377 = vmul.f32 %v3329, %v3329
        %v3378 = vmul.f32 %v3330, %v3330
        %v3379 = vmul.f32 %v3331, %v3331
        %v3380 = vmul.f32 %v3332, %v3332
        %v3381 = vmul.f32 %v3333, %v3333
        %v3382 = vmul.f32 %v3334, %v3334
        %v3383 = vmul.f32 %v3335, %v3335
        %v3384 = vmul.f32 %v3336, %v3336
        %v3385 = vmul.f32 %v3337, %v3337
        %v3386 = vmul.f32 %v3338, %v3338
        %v3387 = vmul.f32 %v3339, %v3339
        %v3388 = vmul.f32 %v3340, %v3340
        %v3389 = vmul.f32 %v3341, %v3341
        %v3390 = vmul.f32 %v3342, %v3342
        %v3391 = vmul.f32 %v3343, %v3343
        %v3392 = vmul.f32 %v3344, %v3344
        %v3393 = vmul.f32 %v3345, %v3345
        %v3394 = vmul.f32 %v3346, %v3346
        %v3395 = vmul.f32 %v3347, %v3347
        %v3396 = vmul.f32 %v3348, %v3348
        %v3397 = vmul.f32 %v3349, %v3349
        %v3398 = vmul.f32 %v3350, %v3350
        %v3399 = vmul.f32 %v3351, %v3351
        %v3400 = vmul.f32 %v3352, %v3352
        %v3401 = vmul.f32 %v3353, %v3353
        %v3402 = vmul.f32 %v3354, %v3354
        %v3403 = vmul.f32 %v3355, %v3355
        %v3404 = vmul.f32 %v3356, %v3356
        %v3405 = vmul.f32 %v3357, %v3357
        %v3406 = vmul.f32 %v3358, %v3358
        %v3407 = vmul.f32 %v3359, %v3359
        %v3408 = vmul.f32 %v3360, %v3360
        %v3409 = vmul.f32 %v3361, %v3361
        %v3410 = vmul.f32 %v3362, %v3362
        %v3411 = vmul.f32 %v3363, %v3363
        %v3412 = vadd.f32 %v3364, %v3365
        %v3413 = vsel %vm3213, %v3366, 0.0
        %v3414 = vadd.f32 %v3412, %v3413
        %3415 = vadd.xlane.f32.xlu0 %v3414
        %v3416 = vpop.xlane.xlu0 %3415
        %v3417 = vadd.f32 %v3367, %v3368
        %v3418 = vsel %vm3213, %v3369, 0.0
        %v3419 = vadd.f32 %v3417, %v3418
        %3420 = vadd.xlane.f32.xlu0 %v3419
        %v3421 = vpop.xlane.xlu0 %3420
        %v3422 = vadd.f32 %v3370, %v3371
        %v3423 = vsel %vm3213, %v3372, 0.0
        %v3424 = vadd.f32 %v3422, %v3423
        %3425 = vadd.xlane.f32.xlu0 %v3424
        %v3426 = vpop.xlane.xlu0 %3425
        %v3427 = vadd.f32 %v3373, %v3374
        %v3428 = vsel %vm3213, %v3375, 0.0
        %v3429 = vadd.f32 %v3427, %v3428
        %3430 = vadd.xlane.f32.xlu0 %v3429
        %v3431 = vpop.xlane.xlu0 %3430
        %v3432 = vadd.f32 %v3376, %v3377
        %v3433 = vsel %vm3213, %v3378, 0.0
        %v3434 = vadd.f32 %v3432, %v3433
        %3435 = vadd.xlane.f32.xlu0 %v3434
        %v3436 = vpop.xlane.xlu0 %3435
        %v3437 = vadd.f32 %v3379, %v3380
        %v3438 = vsel %vm3213, %v3381, 0.0
        %v3439 = vadd.f32 %v3437, %v3438
        %3440 = vadd.xlane.f32.xlu0 %v3439
        %v3441 = vpop.xlane.xlu0 %3440
        %v3442 = vadd.f32 %v3382, %v3383
        %v3443 = vsel %vm3213, %v3384, 0.0
        %v3444 = vadd.f32 %v3442, %v3443
        %3445 = vadd.xlane.f32.xlu0 %v3444
        %v3446 = vpop.xlane.xlu0 %3445
        %v3447 = vadd.f32 %v3385, %v3386
        %v3448 = vsel %vm3213, %v3387, 0.0
        %v3449 = vadd.f32 %v3447, %v3448
        %3450 = vadd.xlane.f32.xlu0 %v3449
        %v3451 = vpop.xlane.xlu0 %3450
        %v3452 = vadd.f32 %v3388, %v3389
        %v3453 = vsel %vm3213, %v3390, 0.0
        %v3454 = vadd.f32 %v3452, %v3453
        %3455 = vadd.xlane.f32.xlu0 %v3454
        %v3456 = vpop.xlane.xlu0 %3455
        %v3457 = vadd.f32 %v3391, %v3392
        %v3458 = vsel %vm3213, %v3393, 0.0
        %v3459 = vadd.f32 %v3457, %v3458
        %3460 = vadd.xlane.f32.xlu0 %v3459
        %v3461 = vpop.xlane.xlu0 %3460
        %v3462 = vadd.f32 %v3394, %v3395
        %v3463 = vsel %vm3213, %v3396, 0.0
        %v3464 = vadd.f32 %v3462, %v3463
        %3465 = vadd.xlane.f32.xlu0 %v3464
        %v3466 = vpop.xlane.xlu0 %3465
        %v3467 = vadd.f32 %v3397, %v3398
        %v3468 = vsel %vm3213, %v3399, 0.0
        %v3469 = vadd.f32 %v3467, %v3468
        %3470 = vadd.xlane.f32.xlu0 %v3469
        %v3471 = vpop.xlane.xlu0 %3470
        %v3472 = vadd.f32 %v3400, %v3401
        %v3473 = vsel %vm3213, %v3402, 0.0
        %v3474 = vadd.f32 %v3472, %v3473
        %3475 = vadd.xlane.f32.xlu0 %v3474
        %v3476 = vpop.xlane.xlu0 %3475
        %v3477 = vadd.f32 %v3403, %v3404
        %v3478 = vsel %vm3213, %v3405, 0.0
        %v3479 = vadd.f32 %v3477, %v3478
        %3480 = vadd.xlane.f32.xlu0 %v3479
        %v3481 = vpop.xlane.xlu0 %3480
        %v3482 = vadd.f32 %v3406, %v3407
        %v3483 = vsel %vm3213, %v3408, 0.0
        %v3484 = vadd.f32 %v3482, %v3483
        %3485 = vadd.xlane.f32.xlu0 %v3484
        %v3486 = vpop.xlane.xlu0 %3485
        %v3487 = vadd.f32 %v3409, %v3410
        %v3488 = vsel %vm3213, %v3411, 0.0
        %v3489 = vadd.f32 %v3487, %v3488
        %3490 = vadd.xlane.f32.xlu0 %v3489
        %v3491 = vpop.xlane.xlu0 %3490
        %v3492 = vmul.f32 %v3416, %v3299
        %v3493 = vmul.f32 %v3421, %v3299
        %v3494 = vmul.f32 %v3426, %v3299
        %v3495 = vmul.f32 %v3431, %v3299
        %v3496 = vmul.f32 %v3436, %v3299
        %v3497 = vmul.f32 %v3441, %v3299
        %v3498 = vmul.f32 %v3446, %v3299
        %v3499 = vmul.f32 %v3451, %v3299
        %v3500 = vmul.f32 %v3456, %v3299
        %v3501 = vmul.f32 %v3461, %v3299
        %v3502 = vmul.f32 %v3466, %v3299
        %v3503 = vmul.f32 %v3471, %v3299
        %v3504 = vmul.f32 %v3476, %v3299
        %v3505 = vmul.f32 %v3481, %v3299
        %v3506 = vmul.f32 %v3486, %v3299
        %v3507 = vmul.f32 %v3491, %v3299
        %v3508 = vadd.f32 %v3492, 1e-05
        %v3509 = vadd.f32 %v3493, 1e-05
        %v3510 = vadd.f32 %v3494, 1e-05
        %v3511 = vadd.f32 %v3495, 1e-05
        %v3512 = vadd.f32 %v3496, 1e-05
        %v3513 = vadd.f32 %v3497, 1e-05
        %v3514 = vadd.f32 %v3498, 1e-05
        %v3515 = vadd.f32 %v3499, 1e-05
        %v3516 = vadd.f32 %v3500, 1e-05
        %v3517 = vadd.f32 %v3501, 1e-05
        %v3518 = vadd.f32 %v3502, 1e-05
        %v3519 = vadd.f32 %v3503, 1e-05
        %v3520 = vadd.f32 %v3504, 1e-05
        %v3521 = vadd.f32 %v3505, 1e-05
        %v3522 = vadd.f32 %v3506, 1e-05
        %v3523 = vadd.f32 %v3507, 1e-05
        %v3524 = vrsqrt.pop %v3508
        %v3525 = vmul.f32 %v3524, %v3508
        %v3526 = vmul.f32 %v3525, %v3524
        %v3527 = vmul.f32 0.5, %v3526
        %v3528 = vsub.f32 1.5, %v3527
        %v3529 = vmul.f32 %v3524, %v3528
        %vm3530 = vweird.f32 %v3508
        %vm3531 = vweird.f32 %v3524
        %vm3532 = vmor %vm3530, %vm3531
        %v3533 = vsel %vm3532, %v3524, %v3529
        %v3534 = vrsqrt.pop %v3509
        %v3535 = vmul.f32 %v3534, %v3509
        %v3536 = vmul.f32 %v3535, %v3534
        %v3537 = vmul.f32 0.5, %v3536
        %v3538 = vsub.f32 1.5, %v3537
        %v3539 = vmul.f32 %v3534, %v3538
        %vm3540 = vweird.f32 %v3509
        %vm3541 = vweird.f32 %v3534
        %vm3542 = vmor %vm3540, %vm3541
        %v3543 = vsel %vm3542, %v3534, %v3539
        %v3544 = vrsqrt.pop %v3510
        %v3545 = vmul.f32 %v3544, %v3510
        %v3546 = vmul.f32 %v3545, %v3544
        %v3547 = vmul.f32 0.5, %v3546
        %v3548 = vsub.f32 1.5, %v3547
        %v3549 = vmul.f32 %v3544, %v3548
        %vm3550 = vweird.f32 %v3510
        %vm3551 = vweird.f32 %v3544
        %vm3552 = vmor %vm3550, %vm3551
        %v3553 = vsel %vm3552, %v3544, %v3549
        %v3554 = vrsqrt.pop %v3511
        %v3555 = vmul.f32 %v3554, %v3511
        %v3556 = vmul.f32 %v3555, %v3554
        %v3557 = vmul.f32 0.5, %v3556
        %v3558 = vsub.f32 1.5, %v3557
        %v3559 = vmul.f32 %v3554, %v3558
        %vm3560 = vweird.f32 %v3511
        %vm3561 = vweird.f32 %v3554
        %vm3562 = vmor %vm3560, %vm3561
        %v3563 = vsel %vm3562, %v3554, %v3559
        %v3564 = vrsqrt.pop %v3512
        %v3565 = vmul.f32 %v3564, %v3512
        %v3566 = vmul.f32 %v3565, %v3564
        %v3567 = vmul.f32 0.5, %v3566
        %v3568 = vsub.f32 1.5, %v3567
        %v3569 = vmul.f32 %v3564, %v3568
        %vm3570 = vweird.f32 %v3512
        %vm3571 = vweird.f32 %v3564
        %vm3572 = vmor %vm3570, %vm3571
        %v3573 = vsel %vm3572, %v3564, %v3569
        %v3574 = vrsqrt.pop %v3513
        %v3575 = vmul.f32 %v3574, %v3513
        %v3576 = vmul.f32 %v3575, %v3574
        %v3577 = vmul.f32 0.5, %v3576
        %v3578 = vsub.f32 1.5, %v3577
        %v3579 = vmul.f32 %v3574, %v3578
        %vm3580 = vweird.f32 %v3513
        %vm3581 = vweird.f32 %v3574
        %vm3582 = vmor %vm3580, %vm3581
        %v3583 = vsel %vm3582, %v3574, %v3579
        %v3584 = vrsqrt.pop %v3514
        %v3585 = vmul.f32 %v3584, %v3514
        %v3586 = vmul.f32 %v3585, %v3584
        %v3587 = vmul.f32 0.5, %v3586
        %v3588 = vsub.f32 1.5, %v3587
        %v3589 = vmul.f32 %v3584, %v3588
        %vm3590 = vweird.f32 %v3514
        %vm3591 = vweird.f32 %v3584
        %vm3592 = vmor %vm3590, %vm3591
        %v3593 = vsel %vm3592, %v3584, %v3589
        %v3594 = vrsqrt.pop %v3515
        %v3595 = vmul.f32 %v3594, %v3515
        %v3596 = vmul.f32 %v3595, %v3594
        %v3597 = vmul.f32 0.5, %v3596
        %v3598 = vsub.f32 1.5, %v3597
        %v3599 = vmul.f32 %v3594, %v3598
        %vm3600 = vweird.f32 %v3515
        %vm3601 = vweird.f32 %v3594
        %vm3602 = vmor %vm3600, %vm3601
        %v3603 = vsel %vm3602, %v3594, %v3599
        %v3604 = vrsqrt.pop %v3516
        %v3605 = vmul.f32 %v3604, %v3516
        %v3606 = vmul.f32 %v3605, %v3604
        %v3607 = vmul.f32 0.5, %v3606
        %v3608 = vsub.f32 1.5, %v3607
        %v3609 = vmul.f32 %v3604, %v3608
        %vm3610 = vweird.f32 %v3516
        %vm3611 = vweird.f32 %v3604
        %vm3612 = vmor %vm3610, %vm3611
        %v3613 = vsel %vm3612, %v3604, %v3609
        %v3614 = vrsqrt.pop %v3517
        %v3615 = vmul.f32 %v3614, %v3517
        %v3616 = vmul.f32 %v3615, %v3614
        %v3617 = vmul.f32 0.5, %v3616
        %v3618 = vsub.f32 1.5, %v3617
        %v3619 = vmul.f32 %v3614, %v3618
        %vm3620 = vweird.f32 %v3517
        %vm3621 = vweird.f32 %v3614
        %vm3622 = vmor %vm3620, %vm3621
        %v3623 = vsel %vm3622, %v3614, %v3619
        %v3624 = vrsqrt.pop %v3518
        %v3625 = vmul.f32 %v3624, %v3518
        %v3626 = vmul.f32 %v3625, %v3624
        %v3627 = vmul.f32 0.5, %v3626
        %v3628 = vsub.f32 1.5, %v3627
        %v3629 = vmul.f32 %v3624, %v3628
        %vm3630 = vweird.f32 %v3518
        %vm3631 = vweird.f32 %v3624
        %vm3632 = vmor %vm3630, %vm3631
        %v3633 = vsel %vm3632, %v3624, %v3629
        %v3634 = vrsqrt.pop %v3519
        %v3635 = vmul.f32 %v3634, %v3519
        %v3636 = vmul.f32 %v3635, %v3634
        %v3637 = vmul.f32 0.5, %v3636
        %v3638 = vsub.f32 1.5, %v3637
        %v3639 = vmul.f32 %v3634, %v3638
        %vm3640 = vweird.f32 %v3519
        %vm3641 = vweird.f32 %v3634
        %vm3642 = vmor %vm3640, %vm3641
        %v3643 = vsel %vm3642, %v3634, %v3639
        %v3644 = vrsqrt.pop %v3520
        %v3645 = vmul.f32 %v3644, %v3520
        %v3646 = vmul.f32 %v3645, %v3644
        %v3647 = vmul.f32 0.5, %v3646
        %v3648 = vsub.f32 1.5, %v3647
        %v3649 = vmul.f32 %v3644, %v3648
        %vm3650 = vweird.f32 %v3520
        %vm3651 = vweird.f32 %v3644
        %vm3652 = vmor %vm3650, %vm3651
        %v3653 = vsel %vm3652, %v3644, %v3649
        %v3654 = vrsqrt.pop %v3521
        %v3655 = vmul.f32 %v3654, %v3521
        %v3656 = vmul.f32 %v3655, %v3654
        %v3657 = vmul.f32 0.5, %v3656
        %v3658 = vsub.f32 1.5, %v3657
        %v3659 = vmul.f32 %v3654, %v3658
        %vm3660 = vweird.f32 %v3521
        %vm3661 = vweird.f32 %v3654
        %vm3662 = vmor %vm3660, %vm3661
        %v3663 = vsel %vm3662, %v3654, %v3659
        %v3664 = vrsqrt.pop %v3522
        %v3665 = vmul.f32 %v3664, %v3522
        %v3666 = vmul.f32 %v3665, %v3664
        %v3667 = vmul.f32 0.5, %v3666
        %v3668 = vsub.f32 1.5, %v3667
        %v3669 = vmul.f32 %v3664, %v3668
        %vm3670 = vweird.f32 %v3522
        %vm3671 = vweird.f32 %v3664
        %vm3672 = vmor %vm3670, %vm3671
        %v3673 = vsel %vm3672, %v3664, %v3669
        %v3674 = vrsqrt.pop %v3523
        %v3675 = vmul.f32 %v3674, %v3523
        %v3676 = vmul.f32 %v3675, %v3674
        %v3677 = vmul.f32 0.5, %v3676
        %v3678 = vsub.f32 1.5, %v3677
        %v3679 = vmul.f32 %v3674, %v3678
        %vm3680 = vweird.f32 %v3523
        %vm3681 = vweird.f32 %v3674
        %vm3682 = vmor %vm3680, %vm3681
        %v3683 = vsel %vm3682, %v3674, %v3679
        %v3684 = vmul.f32 %v3316, %v3533
        %v3685 = vmul.f32 %v3317, %v3533
        %v3686 = vmul.f32 %v3318, %v3533
        %v3687 = vmul.f32 %v3319, %v3543
        %v3688 = vmul.f32 %v3320, %v3543
        %v3689 = vmul.f32 %v3321, %v3543
        %v3690 = vmul.f32 %v3322, %v3553
        %v3691 = vmul.f32 %v3323, %v3553
        %v3692 = vmul.f32 %v3324, %v3553
        %v3693 = vmul.f32 %v3325, %v3563
        %v3694 = vmul.f32 %v3326, %v3563
        %v3695 = vmul.f32 %v3327, %v3563
        %v3696 = vmul.f32 %v3328, %v3573
        %v3697 = vmul.f32 %v3329, %v3573
        %v3698 = vmul.f32 %v3330, %v3573
        %v3699 = vmul.f32 %v3331, %v3583
        %v3700 = vmul.f32 %v3332, %v3583
        %v3701 = vmul.f32 %v3333, %v3583
        %v3702 = vmul.f32 %v3334, %v3593
        %v3703 = vmul.f32 %v3335, %v3593
        %v3704 = vmul.f32 %v3336, %v3593
        %v3705 = vmul.f32 %v3337, %v3603
        %v3706 = vmul.f32 %v3338, %v3603
        %v3707 = vmul.f32 %v3339, %v3603
        %v3708 = vmul.f32 %v3340, %v3613
        %v3709 = vmul.f32 %v3341, %v3613
        %v3710 = vmul.f32 %v3342, %v3613
        %v3711 = vmul.f32 %v3343, %v3623
        %v3712 = vmul.f32 %v3344, %v3623
        %v3713 = vmul.f32 %v3345, %v3623
        %v3714 = vmul.f32 %v3346, %v3633
        %v3715 = vmul.f32 %v3347, %v3633
        %v3716 = vmul.f32 %v3348, %v3633
        %v3717 = vmul.f32 %v3349, %v3643
        %v3718 = vmul.f32 %v3350, %v3643
        %v3719 = vmul.f32 %v3351, %v3643
        %v3720 = vmul.f32 %v3352, %v3653
        %v3721 = vmul.f32 %v3353, %v3653
        %v3722 = vmul.f32 %v3354, %v3653
        %v3723 = vmul.f32 %v3355, %v3663
        %v3724 = vmul.f32 %v3356, %v3663
        %v3725 = vmul.f32 %v3357, %v3663
        %v3726 = vmul.f32 %v3358, %v3673
        %v3727 = vmul.f32 %v3359, %v3673
        %v3728 = vmul.f32 %v3360, %v3673
        %v3729 = vmul.f32 %v3361, %v3683
        %v3730 = vmul.f32 %v3362, %v3683
        %v3731 = vmul.f32 %v3363, %v3683
        %v3733 = vperm.slane %v3209, 0
        %v3734 = vperm.slane %v3209, 1
        %v3735 = vperm.slane %v3209, 2
        %v3739 = vmul.f32 %v3684, %v3733
        %v3740 = vmul.f32 %v3685, %v3734
        %v3741 = vmul.f32 %v3686, %v3735
        %v3742 = vmul.f32 %v3687, %v3733
        %v3743 = vmul.f32 %v3688, %v3734
        %v3744 = vmul.f32 %v3689, %v3735
        %v3745 = vmul.f32 %v3690, %v3733
        %v3746 = vmul.f32 %v3691, %v3734
        %v3747 = vmul.f32 %v3692, %v3735
        %v3748 = vmul.f32 %v3693, %v3733
        %v3749 = vmul.f32 %v3694, %v3734
        %v3750 = vmul.f32 %v3695, %v3735
        %v3751 = vmul.f32 %v3696, %v3733
        %v3752 = vmul.f32 %v3697, %v3734
        %v3753 = vmul.f32 %v3698, %v3735
        %v3754 = vmul.f32 %v3699, %v3733
        %v3755 = vmul.f32 %v3700, %v3734
        %v3756 = vmul.f32 %v3701, %v3735
        %v3757 = vmul.f32 %v3702, %v3733
        %v3758 = vmul.f32 %v3703, %v3734
        %v3759 = vmul.f32 %v3704, %v3735
        %v3760 = vmul.f32 %v3705, %v3733
        %v3761 = vmul.f32 %v3706, %v3734
        %v3762 = vmul.f32 %v3707, %v3735
        %v3763 = vmul.f32 %v3708, %v3733
        %v3764 = vmul.f32 %v3709, %v3734
        %v3765 = vmul.f32 %v3710, %v3735
        %v3766 = vmul.f32 %v3711, %v3733
        %v3767 = vmul.f32 %v3712, %v3734
        %v3768 = vmul.f32 %v3713, %v3735
        %v3769 = vmul.f32 %v3714, %v3733
        %v3770 = vmul.f32 %v3715, %v3734
        %v3771 = vmul.f32 %v3716, %v3735
        %v3772 = vmul.f32 %v3717, %v3733
        %v3773 = vmul.f32 %v3718, %v3734
        %v3774 = vmul.f32 %v3719, %v3735
        %v3775 = vmul.f32 %v3720, %v3733
        %v3776 = vmul.f32 %v3721, %v3734
        %v3777 = vmul.f32 %v3722, %v3735
        %v3778 = vmul.f32 %v3723, %v3733
        %v3779 = vmul.f32 %v3724, %v3734
        %v3780 = vmul.f32 %v3725, %v3735
        %v3781 = vmul.f32 %v3726, %v3733
        %v3782 = vmul.f32 %v3727, %v3734
        %v3783 = vmul.f32 %v3728, %v3735
        %v3784 = vmul.f32 %v3729, %v3733
        %v3785 = vmul.f32 %v3730, %v3734
        %v3786 = vmul.f32 %v3731, %v3735
        %v3788 = vperm.slane %v3211, 0
        %v3789 = vperm.slane %v3211, 1
        %v3790 = vperm.slane %v3211, 2
        %v3794 = vadd.f32 %v3739, %v3788
        %v3795 = vadd.f32 %v3740, %v3789
        %v3796 = vadd.f32 %v3741, %v3790
        %v3797 = vadd.f32 %v3742, %v3788
        %v3798 = vadd.f32 %v3743, %v3789
        %v3799 = vadd.f32 %v3744, %v3790
        %v3800 = vadd.f32 %v3745, %v3788
        %v3801 = vadd.f32 %v3746, %v3789
        %v3802 = vadd.f32 %v3747, %v3790
        %v3803 = vadd.f32 %v3748, %v3788
        %v3804 = vadd.f32 %v3749, %v3789
        %v3805 = vadd.f32 %v3750, %v3790
        %v3806 = vadd.f32 %v3751, %v3788
        %v3807 = vadd.f32 %v3752, %v3789
        %v3808 = vadd.f32 %v3753, %v3790
        %v3809 = vadd.f32 %v3754, %v3788
        %v3810 = vadd.f32 %v3755, %v3789
        %v3811 = vadd.f32 %v3756, %v3790
        %v3812 = vadd.f32 %v3757, %v3788
        %v3813 = vadd.f32 %v3758, %v3789
        %v3814 = vadd.f32 %v3759, %v3790
        %v3815 = vadd.f32 %v3760, %v3788
        %v3816 = vadd.f32 %v3761, %v3789
        %v3817 = vadd.f32 %v3762, %v3790
        %v3818 = vadd.f32 %v3763, %v3788
        %v3819 = vadd.f32 %v3764, %v3789
        %v3820 = vadd.f32 %v3765, %v3790
        %v3821 = vadd.f32 %v3766, %v3788
        %v3822 = vadd.f32 %v3767, %v3789
        %v3823 = vadd.f32 %v3768, %v3790
        %v3824 = vadd.f32 %v3769, %v3788
        %v3825 = vadd.f32 %v3770, %v3789
        %v3826 = vadd.f32 %v3771, %v3790
        %v3827 = vadd.f32 %v3772, %v3788
        %v3828 = vadd.f32 %v3773, %v3789
        %v3829 = vadd.f32 %v3774, %v3790
        %v3830 = vadd.f32 %v3775, %v3788
        %v3831 = vadd.f32 %v3776, %v3789
        %v3832 = vadd.f32 %v3777, %v3790
        %v3833 = vadd.f32 %v3778, %v3788
        %v3834 = vadd.f32 %v3779, %v3789
        %v3835 = vadd.f32 %v3780, %v3790
        %v3836 = vadd.f32 %v3781, %v3788
        %v3837 = vadd.f32 %v3782, %v3789
        %v3838 = vadd.f32 %v3783, %v3790
        %v3839 = vadd.f32 %v3784, %v3788
        %v3840 = vadd.f32 %v3785, %v3789
        %v3841 = vadd.f32 %v3786, %v3790
        %v3842 = vmax.f32 %v3794, 0.0
        %v3843 = vmax.f32 %v3795, 0.0
        %v3844 = vmax.f32 %v3796, 0.0
        %v3845 = vmax.f32 %v3797, 0.0
        %v3846 = vmax.f32 %v3798, 0.0
        %v3847 = vmax.f32 %v3799, 0.0
        %v3848 = vmax.f32 %v3800, 0.0
        %v3849 = vmax.f32 %v3801, 0.0
        %v3850 = vmax.f32 %v3802, 0.0
        %v3851 = vmax.f32 %v3803, 0.0
        %v3852 = vmax.f32 %v3804, 0.0
        %v3853 = vmax.f32 %v3805, 0.0
        %v3854 = vmax.f32 %v3806, 0.0
        %v3855 = vmax.f32 %v3807, 0.0
        %v3856 = vmax.f32 %v3808, 0.0
        %v3857 = vmax.f32 %v3809, 0.0
        %v3858 = vmax.f32 %v3810, 0.0
        %v3859 = vmax.f32 %v3811, 0.0
        %v3860 = vmax.f32 %v3812, 0.0
        %v3861 = vmax.f32 %v3813, 0.0
        %v3862 = vmax.f32 %v3814, 0.0
        %v3863 = vmax.f32 %v3815, 0.0
        %v3864 = vmax.f32 %v3816, 0.0
        %v3865 = vmax.f32 %v3817, 0.0
        %v3866 = vmax.f32 %v3818, 0.0
        %v3867 = vmax.f32 %v3819, 0.0
        %v3868 = vmax.f32 %v3820, 0.0
        %v3869 = vmax.f32 %v3821, 0.0
        %v3870 = vmax.f32 %v3822, 0.0
        %v3871 = vmax.f32 %v3823, 0.0
        %v3872 = vmax.f32 %v3824, 0.0
        %v3873 = vmax.f32 %v3825, 0.0
        %v3874 = vmax.f32 %v3826, 0.0
        %v3875 = vmax.f32 %v3827, 0.0
        %v3876 = vmax.f32 %v3828, 0.0
        %v3877 = vmax.f32 %v3829, 0.0
        %v3878 = vmax.f32 %v3830, 0.0
        %v3879 = vmax.f32 %v3831, 0.0
        %v3880 = vmax.f32 %v3832, 0.0
        %v3881 = vmax.f32 %v3833, 0.0
        %v3882 = vmax.f32 %v3834, 0.0
        %v3883 = vmax.f32 %v3835, 0.0
        %v3884 = vmax.f32 %v3836, 0.0
        %v3885 = vmax.f32 %v3837, 0.0
        %v3886 = vmax.f32 %v3838, 0.0
        %v3887 = vmax.f32 %v3839, 0.0
        %v3888 = vmax.f32 %v3840, 0.0
        %v3889 = vmax.f32 %v3841, 0.0
        %s3890 = scalar_lea.vmem %s5, 3
        %v3891 = vld [vmem:[%s3890] ss:$8 sm:$0x7]
        %v3892 = vld [vmem:[%s5 + $0x4] ss:$0 sm:$0xff]
        %v3894 = vperm.slane %v3891, 0
        %v3895 = vperm.slane %v3891, 1
        %v3896 = vperm.slane %v3891, 2
        %v3900 = vmul.f32 %v3842, %v3894
        %v3901 = vmul.f32 %v3843, %v3895
        %v3902 = vmul.f32 %v3844, %v3896
        %v3903 = vmul.f32 %v3845, %v3894
        %v3904 = vmul.f32 %v3846, %v3895
        %v3905 = vmul.f32 %v3847, %v3896
        %v3906 = vmul.f32 %v3848, %v3894
        %v3907 = vmul.f32 %v3849, %v3895
        %v3908 = vmul.f32 %v3850, %v3896
        %v3909 = vmul.f32 %v3851, %v3894
        %v3910 = vmul.f32 %v3852, %v3895
        %v3911 = vmul.f32 %v3853, %v3896
        %v3912 = vmul.f32 %v3854, %v3894
        %v3913 = vmul.f32 %v3855, %v3895
        %v3914 = vmul.f32 %v3856, %v3896
        %v3915 = vmul.f32 %v3857, %v3894
        %v3916 = vmul.f32 %v3858, %v3895
        %v3917 = vmul.f32 %v3859, %v3896
        %v3918 = vmul.f32 %v3860, %v3894
        %v3919 = vmul.f32 %v3861, %v3895
        %v3920 = vmul.f32 %v3862, %v3896
        %v3921 = vmul.f32 %v3863, %v3894
        %v3922 = vmul.f32 %v3864, %v3895
        %v3923 = vmul.f32 %v3865, %v3896
        %v3924 = vmul.f32 %v3866, %v3894
        %v3925 = vmul.f32 %v3867, %v3895
        %v3926 = vmul.f32 %v3868, %v3896
        %v3927 = vmul.f32 %v3869, %v3894
        %v3928 = vmul.f32 %v3870, %v3895
        %v3929 = vmul.f32 %v3871, %v3896
        %v3930 = vmul.f32 %v3872, %v3894
        %v3931 = vmul.f32 %v3873, %v3895
        %v3932 = vmul.f32 %v3874, %v3896
        %v3933 = vmul.f32 %v3875, %v3894
        %v3934 = vmul.f32 %v3876, %v3895
        %v3935 = vmul.f32 %v3877, %v3896
        %v3936 = vmul.f32 %v3878, %v3894
        %v3937 = vmul.f32 %v3879, %v3895
        %v3938 = vmul.f32 %v3880, %v3896
        %v3939 = vmul.f32 %v3881, %v3894
        %v3940 = vmul.f32 %v3882, %v3895
        %v3941 = vmul.f32 %v3883, %v3896
        %v3942 = vmul.f32 %v3884, %v3894
        %v3943 = vmul.f32 %v3885, %v3895
        %v3944 = vmul.f32 %v3886, %v3896
        %v3945 = vmul.f32 %v3887, %v3894
        %v3946 = vmul.f32 %v3888, %v3895
        %v3947 = vmul.f32 %v3889, %v3896
        %v3948 = vadd.f32 %v3900, %v3901
        %v3949 = vsel %vm3213, %v3902, 0.0
        %v3950 = vadd.f32 %v3948, %v3949
        %3951 = vadd.xlane.f32.xlu0 %v3950
        %v3952 = vpop.xlane.xlu0 %3951
        %v3953 = vadd.f32 %v3903, %v3904
        %v3954 = vsel %vm3213, %v3905, 0.0
        %v3955 = vadd.f32 %v3953, %v3954
        %3956 = vadd.xlane.f32.xlu0 %v3955
        %v3957 = vpop.xlane.xlu0 %3956
        %v3958 = vadd.f32 %v3906, %v3907
        %v3959 = vsel %vm3213, %v3908, 0.0
        %v3960 = vadd.f32 %v3958, %v3959
        %3961 = vadd.xlane.f32.xlu0 %v3960
        %v3962 = vpop.xlane.xlu0 %3961
        %v3963 = vadd.f32 %v3909, %v3910
        %v3964 = vsel %vm3213, %v3911, 0.0
        %v3965 = vadd.f32 %v3963, %v3964
        %3966 = vadd.xlane.f32.xlu0 %v3965
        %v3967 = vpop.xlane.xlu0 %3966
        %v3968 = vadd.f32 %v3912, %v3913
        %v3969 = vsel %vm3213, %v3914, 0.0
        %v3970 = vadd.f32 %v3968, %v3969
        %3971 = vadd.xlane.f32.xlu0 %v3970
        %v3972 = vpop.xlane.xlu0 %3971
        %v3973 = vadd.f32 %v3915, %v3916
        %v3974 = vsel %vm3213, %v3917, 0.0
        %v3975 = vadd.f32 %v3973, %v3974
        %3976 = vadd.xlane.f32.xlu0 %v3975
        %v3977 = vpop.xlane.xlu0 %3976
        %v3978 = vadd.f32 %v3918, %v3919
        %v3979 = vsel %vm3213, %v3920, 0.0
        %v3980 = vadd.f32 %v3978, %v3979
        %3981 = vadd.xlane.f32.xlu0 %v3980
        %v3982 = vpop.xlane.xlu0 %3981
        %v3983 = vadd.f32 %v3921, %v3922
        %v3984 = vsel %vm3213, %v3923, 0.0
        %v3985 = vadd.f32 %v3983, %v3984
        %3986 = vadd.xlane.f32.xlu0 %v3985
        %v3987 = vpop.xlane.xlu0 %3986
        %v3988 = vadd.f32 %v3924, %v3925
        %v3989 = vsel %vm3213, %v3926, 0.0
        %v3990 = vadd.f32 %v3988, %v3989
        %3991 = vadd.xlane.f32.xlu0 %v3990
        %v3992 = vpop.xlane.xlu0 %3991
        %v3993 = vadd.f32 %v3927, %v3928
        %v3994 = vsel %vm3213, %v3929, 0.0
        %v3995 = vadd.f32 %v3993, %v3994
        %3996 = vadd.xlane.f32.xlu0 %v3995
        %v3997 = vpop.xlane.xlu0 %3996
        %v3998 = vadd.f32 %v3930, %v3931
        %v3999 = vsel %vm3213, %v3932, 0.0
        %v4000 = vadd.f32 %v3998, %v3999
        %4001 = vadd.xlane.f32.xlu0 %v4000
        %v4002 = vpop.xlane.xlu0 %4001
        %v4003 = vadd.f32 %v3933, %v3934
        %v4004 = vsel %vm3213, %v3935, 0.0
        %v4005 = vadd.f32 %v4003, %v4004
        %4006 = vadd.xlane.f32.xlu0 %v4005
        %v4007 = vpop.xlane.xlu0 %4006
        %v4008 = vadd.f32 %v3936, %v3937
        %v4009 = vsel %vm3213, %v3938, 0.0
        %v4010 = vadd.f32 %v4008, %v4009
        %4011 = vadd.xlane.f32.xlu0 %v4010
        %v4012 = vpop.xlane.xlu0 %4011
        %v4013 = vadd.f32 %v3939, %v3940
        %v4014 = vsel %vm3213, %v3941, 0.0
        %v4015 = vadd.f32 %v4013, %v4014
        %4016 = vadd.xlane.f32.xlu0 %v4015
        %v4017 = vpop.xlane.xlu0 %4016
        %v4018 = vadd.f32 %v3942, %v3943
        %v4019 = vsel %vm3213, %v3944, 0.0
        %v4020 = vadd.f32 %v4018, %v4019
        %4021 = vadd.xlane.f32.xlu0 %v4020
        %v4022 = vpop.xlane.xlu0 %4021
        %v4023 = vadd.f32 %v3945, %v3946
        %v4024 = vsel %vm3213, %v3947, 0.0
        %v4025 = vadd.f32 %v4023, %v4024
        %4026 = vadd.xlane.f32.xlu0 %v4025
        %v4027 = vpop.xlane.xlu0 %4026
        %v4028 = vadd.f32 %v3952, %v3892
        %v4029 = vadd.f32 %v3957, %v3892
        %v4030 = vadd.f32 %v3962, %v3892
        %v4031 = vadd.f32 %v3967, %v3892
        %v4032 = vadd.f32 %v3972, %v3892
        %v4033 = vadd.f32 %v3977, %v3892
        %v4034 = vadd.f32 %v3982, %v3892
        %v4035 = vadd.f32 %v3987, %v3892
        %v4036 = vadd.f32 %v3992, %v3892
        %v4037 = vadd.f32 %v3997, %v3892
        %v4038 = vadd.f32 %v4002, %v3892
        %v4039 = vadd.f32 %v4007, %v3892
        %v4040 = vadd.f32 %v4012, %v3892
        %v4041 = vadd.f32 %v4017, %v3892
        %v4042 = vadd.f32 %v4022, %v3892
        %v4043 = vadd.f32 %v4027, %v3892
        %4045 = vset.pattern.permute.xlu0 0
        %4046 = vperm.xlu0 %4045, %v4028
        %v4047 = vpop.permute.xlu0 %4046
        %4050 = vset.pattern.permute.xlu0 0
        %4051 = vperm.xlu0 %4050, %v4029
        %v4052 = vpop.permute.xlu0 %4051
        %4055 = vset.pattern.permute.xlu0 0
        %4056 = vperm.xlu0 %4055, %v4030
        %v4057 = vpop.permute.xlu0 %4056
        %4060 = vset.pattern.permute.xlu0 0
        %4061 = vperm.xlu0 %4060, %v4031
        %v4062 = vpop.permute.xlu0 %4061
        %4065 = vset.pattern.permute.xlu0 0
        %4066 = vperm.xlu0 %4065, %v4032
        %v4067 = vpop.permute.xlu0 %4066
        %4070 = vset.pattern.permute.xlu0 0
        %4071 = vperm.xlu0 %4070, %v4033
        %v4072 = vpop.permute.xlu0 %4071
        %4075 = vset.pattern.permute.xlu0 0
        %4076 = vperm.xlu0 %4075, %v4034
        %v4077 = vpop.permute.xlu0 %4076
        %4080 = vset.pattern.permute.xlu0 0
        %4081 = vperm.xlu0 %4080, %v4035
        %v4082 = vpop.permute.xlu0 %4081
        %4085 = vset.pattern.permute.xlu0 0
        %4086 = vperm.xlu0 %4085, %v4036
        %v4087 = vpop.permute.xlu0 %4086
        %4090 = vset.pattern.permute.xlu0 0
        %4091 = vperm.xlu0 %4090, %v4037
        %v4092 = vpop.permute.xlu0 %4091
        %4095 = vset.pattern.permute.xlu0 0
        %4096 = vperm.xlu0 %4095, %v4038
        %v4097 = vpop.permute.xlu0 %4096
        %4100 = vset.pattern.permute.xlu0 0
        %4101 = vperm.xlu0 %4100, %v4039
        %v4102 = vpop.permute.xlu0 %4101
        %4105 = vset.pattern.permute.xlu0 0
        %4106 = vperm.xlu0 %4105, %v4040
        %v4107 = vpop.permute.xlu0 %4106
        %4110 = vset.pattern.permute.xlu0 0
        %4111 = vperm.xlu0 %4110, %v4041
        %v4112 = vpop.permute.xlu0 %4111
        %4115 = vset.pattern.permute.xlu0 0
        %4116 = vperm.xlu0 %4115, %v4042
        %v4117 = vpop.permute.xlu0 %4116
        %4120 = vset.pattern.permute.xlu0 0
        %4121 = vperm.xlu0 %4120, %v4043
        %v4122 = vpop.permute.xlu0 %4121
        %vm4124 = vcmask 64512
        %4125 = vst.msk [vmem:[%s270] sm:$0xff] %vm4124, %v4047
        %4126 = vst.msk [vmem:[%s270 + $0x8] sm:$0xff] %vm4124, %v4052
        %4127 = vst.msk [vmem:[%s270 + $0x10] sm:$0xff] %vm4124, %v4057
        %4128 = vst.msk [vmem:[%s270 + $0x18] sm:$0xff] %vm4124, %v4062
        %4129 = vst.msk [vmem:[%s270 + $0x20] sm:$0xff] %vm4124, %v4067
        %4130 = vst.msk [vmem:[%s270 + $0x28] sm:$0xff] %vm4124, %v4072
        %4131 = vst.msk [vmem:[%s270 + $0x30] sm:$0xff] %vm4124, %v4077
        %4132 = vst.msk [vmem:[%s270 + $0x38] sm:$0xff] %vm4124, %v4082
        %4133 = vst.msk [vmem:[%s270 + $0x40] sm:$0xff] %vm4124, %v4087
        %4134 = vst.msk [vmem:[%s270 + $0x48] sm:$0xff] %vm4124, %v4092
        %4135 = vst.msk [vmem:[%s270 + $0x50] sm:$0xff] %vm4124, %v4097
        %4136 = vst.msk [vmem:[%s270 + $0x58] sm:$0xff] %vm4124, %v4102
        %4137 = vst.msk [vmem:[%s270 + $0x60] sm:$0xff] %vm4124, %v4107
        %4138 = vst.msk [vmem:[%s270 + $0x68] sm:$0xff] %vm4124, %v4112
        %4139 = vst.msk [vmem:[%s270 + $0x70] sm:$0xff] %vm4124, %v4117
        %4140 = vst.msk [vmem:[%s270 + $0x78] sm:$0xff] %vm4124, %v4122
        %s4141 = smul.u32 16, %s18
        %p4142 = scmp.lt.s32.totalorder %s4141, 31
        %s4143 = scalar_select %p4142, %s4141, 31
        %s4144 = smul.addr %s4143, 8
        %s4145 = scalar_lea.vmem %s6, %s4144
        // Predicated region
        $region49: #{tpu_custom_call.1} parent=43 // pred_check
          %p4146 = pneg %p167
        $region50: #{tpu_custom_call.1} parent=43 // pred_check_branch
          %4148 = sbr.rel (%p4146) target = $region52
        $region51: #{tpu_custom_call.1} parent=43 // pred_region
          %s4149 = smul.u32 16, %s18
        $region52: #{tpu_custom_call.1} parent=43 // pred_fallthru
          _
      $region44: #{tpu_custom_call.1} parent=5 // pred_fallthru
        _
      %p4150 = scmp.le.s32.totalorder 2, %s13
      // Predicated region
      $region53: #{tpu_custom_call.1} parent=5 // pred_check
        %p4151 = pneg %p4150
      $region54: #{tpu_custom_call.1} parent=5 // pred_check_branch
        %4153 = sbr.rel (%p4151) target = $region56
      $region55: #{tpu_custom_call.1} parent=5 // pred_region
        %s4154 = ssub.s32 %s13, 2
        // Predicated region
        $region57: #{tpu_custom_call.1} parent=55 // pred_check
          %p4155 = pneg %p173
        $region58: #{tpu_custom_call.1} parent=55 // pred_check_branch
          %4157 = sbr.rel (%p4155) target = $region60
        $region59: #{tpu_custom_call.1} parent=55 // pred_region
          %s4158 = smul.u32 16, %s19
          %p4159 = scmp.lt.s32.totalorder %s4158, 31
          %s4160 = scalar_select %p4159, %s4158, 31
          %s4161 = smul.addr %s4160, 8
          %s4162 = scalar_lea.vmem %s6, %s4161
        $region60: #{tpu_custom_call.1} parent=55 // pred_fallthru
          _
      $region56: #{tpu_custom_call.1} parent=5 // pred_fallthru
        _
    $region6: #{tpu_custom_call.1} parent=1 // loop_footer
      %s17 = sadd.s32 1, %s13
    $region7: #{tpu_custom_call.1} parent=1 // loop_footer_branch
      %12 = sbr.rel target = $region3
    $region8: #{tpu_custom_call.1} parent=1 // loop_exit
      _
    %4163 = vsyncpa [#allocation3], 1
    %s4164 = scalar_lea.sflag [#allocation3], 1
    %4165 = vsyncpa %s4164, 1

</llo_original>
